<compile_context>
chip_gen: v6e
topology: v6e:2x2x1
jax: 0.10.0
libtpu: 0.0.40
codegen_flags: <defaults>
</compile_context>

<pallas_src>
import jax
import jax.numpy as jnp
from jax.experimental import pallas as pl
from jax.experimental.pallas import tpu as pltpu


def _round_up(n, m):
    return (n + m - 1) // m * m


def tem_kernel(x_ref, mp_ref, mn_ref, w1_ref, b1_ref, w2_ref, b2_ref,
               w3_ref, b3_ref, o_ref):
    # x_ref : (TILE, Cp)  bf16  channels-last activations (a whole # of clips)
    # mp/mn : (TILE, 1)   f32   1.0 where h[t-1] / h[t+1] exist, 0.0 at clip
    #                           boundaries (encodes conv zero padding and kills
    #                           the roll wrap-around at tile edges)
    # w1    : (3, Cp, Hp) bf16  conv1 taps ; b1 : (1, Hp)  f32
    # w2    : (3, Hp, Hp) bf16  conv2 taps ; b2 : (1, Hp)  f32
    # w3    : (Hp, 128)   bf16  conv3(k=1) ; b3 : (1, 128) f32
    # o_ref : (TILE, 128) f32   lane-dense output (real channels are [:, :3])
    tile = x_ref.shape[0]
    mp = mp_ref[...]
    mn = mn_ref[...]

    def shifted(h32):
        # prev[r] = h[r-1], next[r] = h[r+1] via sublane rolls on the XLU;
        # clip-boundary rows zeroed by the masks.  Values round-trip
        # f32 -> bf16 exactly (already bf16-representable), so shifts are exact.
        prev = (pltpu.roll(h32, shift=1, axis=0) * mp).astype(jnp.bfloat16)
        nxt = (pltpu.roll(h32, shift=tile - 1, axis=0) * mn).astype(jnp.bfloat16)
        return prev, nxt

    def conv3tap(hc, hp, hn, w_ref, b_ref):
        # PyTorch Conv1d (cross-correlation), k=3, pad=1:
        #   y[t] = w[0]·h[t-1] + w[1]·h[t] + w[2]·h[t+1] + b
        return (jnp.dot(hp, w_ref[0], preferred_element_type=jnp.float32)
                + jnp.dot(hc, w_ref[1], preferred_element_type=jnp.float32)
                + jnp.dot(hn, w_ref[2], preferred_element_type=jnp.float32)
                + b_ref[...])

    x_bf = x_ref[...]                                       # (TILE, Cp) bf16
    xp, xn = shifted(x_bf.astype(jnp.float32))
    h1 = jnp.maximum(conv3tap(x_bf, xp, xn, w1_ref, b1_ref), 0.0)      # f32
    h1p, h1n = shifted(h1)
    h2 = jnp.maximum(conv3tap(h1.astype(jnp.bfloat16), h1p, h1n,
                              w2_ref, b2_ref), 0.0)                    # f32
    # conv3: kernel_size=1 -> plain matmul (output lanes padded 3 -> 128).
    y3 = (jnp.dot(h2.astype(jnp.bfloat16), w3_ref[...],
                  preferred_element_type=jnp.float32) + b3_ref[...])
    # (could store bf16 if downstream tolerates it; kept f32 for exactness)
    o_ref[...] = jax.nn.sigmoid(0.01 * y3)


def _vmem_limit_bytes():
    # Raise the scoped-VMEM limit above the 16-32 MiB defaults while leaving
    # headroom below physical capacity (64 MiB on v7x, 128 MiB on v5e/v6e).
    try:
        cap = pltpu.get_tpu_info().vmem_capacity_bytes
        return min(int(cap * 3 // 4), 96 * 1024 * 1024)
    except Exception:
        return None  # fall back to the compiler default


def tem_forward(x_nct, params, *, target_tile_rows=512):
    """x_nct: (B, feat_dim, T) float32 (PyTorch NCT layout). Returns (B, 3, T)."""
    B, C, T = x_nct.shape
    H = params["w1"].shape[2]
    OUT = 3
    LANE = 128

    Cp = _round_up(C, LANE)
    Hp = _round_up(H, LANE)
    Op = LANE                      # pad output channels 3 -> 128 (lane-dense)

    # Rows = (clip, time).  Clip length padded to a multiple of 16 so bf16 rows
    # pack cleanly into sublanes; each tile holds a whole number of clips so
    # the temporal shifts never cross a tile boundary.
    Tp = _round_up(T, 16)
    clips_per_tile = max(1, min(B, max(1, target_tile_rows // Tp)))
    Bp = _round_up(B, clips_per_tile)
    num_tiles = Bp // clips_per_tile
    TILE = clips_per_tile * Tp
    Rp = num_tiles * TILE

    # activations: (B, C, T) -> (B, T, C) -> zero-pad -> (Rp, Cp) bf16
    x = jnp.transpose(x_nct, (0, 2, 1))
    x = jnp.pad(x, ((0, Bp - B), (0, Tp - T), (0, Cp - C)))
    x = x.reshape(Rp, Cp).astype(jnp.bfloat16)

    # per-tile clip-boundary masks (identical for every tile)
    t_in_clip = jnp.arange(TILE) % Tp
    mask_prev = (t_in_clip != 0).astype(jnp.float32)[:, None]      # no h[t-1] at t==0
    mask_next = (t_in_clip != T - 1).astype(jnp.float32)[:, None]  # no h[t+1] at t==T-1

    # zero-padded / bf16 weights (padded lanes stay exactly zero end-to-end)
    w1 = jnp.zeros((3, Cp, Hp), jnp.float32).at[:, :C, :H].set(params["w1"]).astype(jnp.bfloat16)
    b1 = jnp.zeros((1, Hp), jnp.float32).at[:, :H].set(params["b1"])
    w2 = jnp.zeros((3, Hp, Hp), jnp.float32).at[:, :H, :H].set(params["w2"]).astype(jnp.bfloat16)
    b2 = jnp.zeros((1, Hp), jnp.float32).at[:, :H].set(params["b2"])
    w3 = jnp.zeros((Hp, Op), jnp.float32).at[:H, :OUT].set(params["w3"]).astype(jnp.bfloat16)
    b3 = jnp.zeros((1, Op), jnp.float32).at[:, :OUT].set(params["b3"])

    flops = 2 * Rp * (3 * Cp * Hp + 3 * Hp * Hp + Hp * Op)
    bytes_accessed = (x.size * 2 + (mask_prev.size + mask_next.size) * 4
                      + (w1.size + w2.size + w3.size) * 2
                      + (b1.size + b2.size + b3.size) * 4 + Rp * Op * 4)
    cost = pl.CostEstimate(flops=flops, transcendentals=Rp * Op,
                           bytes_accessed=bytes_accessed)

    def build(single_buffer_consts):
        def const_spec(shape):
            # Constant index_map -> fetched once; single-buffering halves the
            # weights' VMEM footprint (matters most on v7x's 64 MiB VMEM).
            idx = lambda i: (0,) * len(shape)
            if single_buffer_consts:
                return pl.BlockSpec(shape, idx, pipeline_mode=pl.Buffered(1))
            return pl.BlockSpec(shape, idx)

        return pl.pallas_call(
            tem_kernel,
            out_shape=jax.ShapeDtypeStruct((Rp, Op), jnp.float32),
            grid=(num_tiles,),
            in_specs=[
                pl.BlockSpec((TILE, Cp), lambda i: (i, 0)),   # x (row-tiled)
                const_spec((TILE, 1)),                        # mask_prev
                const_spec((TILE, 1)),                        # mask_next
                const_spec((3, Cp, Hp)),                      # w1
                const_spec((1, Hp)),                          # b1
                const_spec((3, Hp, Hp)),                      # w2
                const_spec((1, Hp)),                          # b2
                const_spec((Hp, Op)),                         # w3
                const_spec((1, Op)),                          # b3
            ],
            out_specs=pl.BlockSpec((TILE, Op), lambda i: (i, 0)),
            compiler_params=pltpu.CompilerParams(
                dimension_semantics=("parallel",),            # tiles independent
                vmem_limit_bytes=_vmem_limit_bytes()),
            cost_estimate=cost,
        )

    args = (x, mask_prev, mask_next, w1, b1, w2, b2, w3, b3)
    try:
        out = build(True)(*args)
    except Exception:
        # pl.Buffered(1) is a VMEM-only optimization; fall back to default
        # double-buffering if this Pallas build rejects buffer_count=1.
        out = build(False)(*args)

    # drop padded rows / clips, keep the 3 real output channels -> (B, 3, T)
    out = out.reshape(Bp, Tp, Op)[:B, :T, :OUT]
    return jnp.transpose(out, (0, 2, 1))


def init_params(key, feat_dim, hidden):
    # Synthetic weights (the module's xavier init only touches Conv2d, so the
    # Conv1d layers keep default init anyway; values here are just test data).
    k1, k2, k3, k4, k5, k6 = jax.random.split(key, 6)
    s = 0.1
    return {
        "w1": s * jax.random.normal(k1, (3, feat_dim, hidden), jnp.float32),
        "b1": s * jax.random.normal(k2, (1, hidden), jnp.float32),
        "w2": s * jax.random.normal(k3, (3, hidden, hidden), jnp.float32),
        "b2": s * jax.random.normal(k4, (1, hidden), jnp.float32),
        "w3": s * jax.random.normal(k5, (hidden, 3), jnp.float32),
        "b3": s * jax.random.normal(k6, (1, 3), jnp.float32),
    }


def tem_reference(x_nct, params):
    """Pure-JAX f32 reference of the same forward pass (correctness check)."""
    x = jnp.transpose(x_nct, (0, 2, 1))  # (B, T, C)

    def conv3tap(h, w, b):
        zero = jnp.zeros_like(h[:, :1, :])
        h_prev = jnp.concatenate([zero, h[:, :-1, :]], axis=1)
        h_next = jnp.concatenate([h[:, 1:, :], zero], axis=1)
        return (jnp.einsum("btc,ch->bth", h_prev, w[0])
                + jnp.einsum("btc,ch->bth", h, w[1])
                + jnp.einsum("btc,ch->bth", h_next, w[2]) + b)

    h1 = jnp.maximum(conv3tap(x, params["w1"], params["b1"]), 0.0)
    h2 = jnp.maximum(conv3tap(h1, params["w2"], params["b2"]), 0.0)
    y3 = jnp.einsum("bth,ho->bto", h2, params["w3"]) + params["b3"]
    return jnp.transpose(jax.nn.sigmoid(0.01 * y3), (0, 2, 1))


if __name__ == "__main__":
    # Small config consistent with the module:
    # tem_feat_dim=16, temporal_scale=32, tem_hidden_dim=32, batch 4.
    B, FEAT, T, HIDDEN = 4, 16, 32, 32

    key = jax.random.PRNGKey(0)
    kx, kp = jax.random.split(key)
    x = jax.random.normal(kx, (B, FEAT, T), jnp.float32)  # PyTorch NCT layout
    params = init_params(kp, FEAT, HIDDEN)

    ref = jax.block_until_ready(tem_reference(x, params))

    # Multi-tile path: 2 clips (64 rows) per tile -> 2 pipelined grid steps,
    # exercising the roll + clip-boundary-mask path across tiles.
    out_tiled = jax.block_until_ready(
        tem_forward(x, params, target_tile_rows=64))
    assert out_tiled.shape == (B, 3, T), out_tiled.shape
    err = float(jnp.max(jnp.abs(out_tiled - ref)))
    assert jnp.allclose(out_tiled, ref, atol=2e-3, rtol=2e-3), (
        "tiled mismatch vs reference, max abs err = %g" % err)

    # Default tiling (whole batch fits one tile at this size; same kernel).
    out_full = jax.block_until_ready(tem_forward(x, params))
    err = float(jnp.max(jnp.abs(out_full - ref)))
    assert jnp.allclose(out_full, ref, atol=2e-3, rtol=2e-3), (
        "single-tile mismatch vs reference, max abs err = %g" % err)

    print("KERNEL_OK")
</pallas_src>

<mosaic_0001>
module attributes {stable_mosaic.version = 11 : i64} {
  func.func @tem_kernel(%arg0: i32, %arg1: memref<64x128xbf16, #tpu.memory_space<vmem>>, %arg2: memref<64x1xf32, #tpu.memory_space<vmem>>, %arg3: memref<64x1xf32, #tpu.memory_space<vmem>>, %arg4: memref<3x128x128xbf16, #tpu.memory_space<vmem>>, %arg5: memref<1x128xf32, #tpu.memory_space<vmem>>, %arg6: memref<3x128x128xbf16, #tpu.memory_space<vmem>>, %arg7: memref<1x128xf32, #tpu.memory_space<vmem>>, %arg8: memref<128x128xbf16, #tpu.memory_space<vmem>>, %arg9: memref<1x128xf32, #tpu.memory_space<vmem>>, %arg10: memref<64x128xf32, #tpu.memory_space<vmem>>) attributes {dimension_semantics = [#tpu.dimension_semantics<parallel>], iteration_bounds = array<i64: 2>, scalar_prefetch = 0 : i64, scratch_operands = 0 : i64, tpu.core_type = #tpu.core_type<tc>, window_params = [{transform_indices = @transform_0, window_bounds = array<i64: 64, 128>}, {pipeline_mode = #tpu.pipeline_mode<synchronous>, transform_indices = @transform_1, window_bounds = array<i64: 64, 1>}, {pipeline_mode = #tpu.pipeline_mode<synchronous>, transform_indices = @transform_2, window_bounds = array<i64: 64, 1>}, {pipeline_mode = #tpu.pipeline_mode<synchronous>, transform_indices = @transform_3, window_bounds = array<i64: 3, 128, 128>}, {pipeline_mode = #tpu.pipeline_mode<synchronous>, transform_indices = @transform_4, window_bounds = array<i64: 1, 128>}, {pipeline_mode = #tpu.pipeline_mode<synchronous>, transform_indices = @transform_5, window_bounds = array<i64: 3, 128, 128>}, {pipeline_mode = #tpu.pipeline_mode<synchronous>, transform_indices = @transform_6, window_bounds = array<i64: 1, 128>}, {pipeline_mode = #tpu.pipeline_mode<synchronous>, transform_indices = @transform_7, window_bounds = array<i64: 128, 128>}, {pipeline_mode = #tpu.pipeline_mode<synchronous>, transform_indices = @transform_8, window_bounds = array<i64: 1, 128>}, {transform_indices = @transform_9, window_bounds = array<i64: 64, 128>}]} {
    %c0 = arith.constant 0 : index
    %c0_0 = arith.constant 0 : index
    %0 = vector.load %arg2[%c0, %c0_0] : memref<64x1xf32, #tpu.memory_space<vmem>>, vector<64x1xf32>
    %c0_1 = arith.constant 0 : index
    %c0_2 = arith.constant 0 : index
    %1 = vector.load %arg3[%c0_1, %c0_2] : memref<64x1xf32, #tpu.memory_space<vmem>>, vector<64x1xf32>
    %c0_3 = arith.constant 0 : index
    %c0_4 = arith.constant 0 : index
    %2 = vector.load %arg1[%c0_3, %c0_4] : memref<64x128xbf16, #tpu.memory_space<vmem>>, vector<64x128xbf16>
    %3 = arith.extf %2 : vector<64x128xbf16> to vector<64x128xf32>
    %c1_i32 = arith.constant 1 : i32
    %4 = tpu.dynamic_rotate %3 by %c1_i32 dim 0 : vector<64x128xf32>, i32 -> vector<64x128xf32>
    %5 = vector.broadcast %0 : vector<64x1xf32> to vector<64x128xf32>
    %6 = arith.mulf %4, %5 : vector<64x128xf32>
    %7 = arith.truncf %6 : vector<64x128xf32> to vector<64x128xbf16>
    %c63_i32 = arith.constant 63 : i32
    %8 = tpu.dynamic_rotate %3 by %c63_i32 dim 0 : vector<64x128xf32>, i32 -> vector<64x128xf32>
    %9 = vector.broadcast %1 : vector<64x1xf32> to vector<64x128xf32>
    %10 = arith.mulf %8, %9 : vector<64x128xf32>
    %11 = arith.truncf %10 : vector<64x128xf32> to vector<64x128xbf16>
    %c0_5 = arith.constant 0 : index
    %c0_6 = arith.constant 0 : index
    %c0_7 = arith.constant 0 : index
    %12 = vector.load %arg4[%c0_5, %c0_6, %c0_7] : memref<3x128x128xbf16, #tpu.memory_space<vmem>>, vector<1x128x128xbf16>
    %13 = vector.shape_cast %12 : vector<1x128x128xbf16> to vector<128x128xbf16>
    %cst = arith.constant dense<0.000000e+00> : vector<64x128xf32>
    %14 = tpu.matmul %7, %13, %cst {dimension_numbers = #tpu.dot_dimension_numbers<[1], [0], [0], [1], [0, 0, 1, 1], [], []>} : vector<64x128xbf16>, vector<128x128xbf16>, vector<64x128xf32> -> vector<64x128xf32>
    %c1 = arith.constant 1 : index
    %c0_8 = arith.constant 0 : index
    %c0_9 = arith.constant 0 : index
    %15 = vector.load %arg4[%c1, %c0_8, %c0_9] : memref<3x128x128xbf16, #tpu.memory_space<vmem>>, vector<1x128x128xbf16>
    %16 = vector.shape_cast %15 : vector<1x128x128xbf16> to vector<128x128xbf16>
    %cst_10 = arith.constant dense<0.000000e+00> : vector<64x128xf32>
    %17 = tpu.matmul %2, %16, %cst_10 {dimension_numbers = #tpu.dot_dimension_numbers<[1], [0], [0], [1], [0, 0, 1, 1], [], []>} : vector<64x128xbf16>, vector<128x128xbf16>, vector<64x128xf32> -> vector<64x128xf32>
    %18 = arith.addf %14, %17 : vector<64x128xf32>
    %c2 = arith.constant 2 : index
    %c0_11 = arith.constant 0 : index
    %c0_12 = arith.constant 0 : index
    %19 = vector.load %arg4[%c2, %c0_11, %c0_12] : memref<3x128x128xbf16, #tpu.memory_space<vmem>>, vector<1x128x128xbf16>
    %20 = vector.shape_cast %19 : vector<1x128x128xbf16> to vector<128x128xbf16>
    %cst_13 = arith.constant dense<0.000000e+00> : vector<64x128xf32>
    %21 = tpu.matmul %11, %20, %cst_13 {dimension_numbers = #tpu.dot_dimension_numbers<[1], [0], [0], [1], [0, 0, 1, 1], [], []>} : vector<64x128xbf16>, vector<128x128xbf16>, vector<64x128xf32> -> vector<64x128xf32>
    %22 = arith.addf %18, %21 : vector<64x128xf32>
    %c0_14 = arith.constant 0 : index
    %c0_15 = arith.constant 0 : index
    %23 = vector.load %arg5[%c0_14, %c0_15] : memref<1x128xf32, #tpu.memory_space<vmem>>, vector<1x128xf32>
    %24 = vector.broadcast %23 : vector<1x128xf32> to vector<64x128xf32>
    %25 = arith.addf %22, %24 : vector<64x128xf32>
    %cst_16 = arith.constant 0.000000e+00 : f32
    %26 = vector.broadcast %cst_16 : f32 to vector<64x128xf32>
    %27 = arith.maximumf %25, %26 : vector<64x128xf32>
    %c1_i32_17 = arith.constant 1 : i32
    %28 = tpu.dynamic_rotate %27 by %c1_i32_17 dim 0 : vector<64x128xf32>, i32 -> vector<64x128xf32>
    %29 = vector.broadcast %0 : vector<64x1xf32> to vector<64x128xf32>
    %30 = arith.mulf %28, %29 : vector<64x128xf32>
    %31 = arith.truncf %30 : vector<64x128xf32> to vector<64x128xbf16>
    %c63_i32_18 = arith.constant 63 : i32
    %32 = tpu.dynamic_rotate %27 by %c63_i32_18 dim 0 : vector<64x128xf32>, i32 -> vector<64x128xf32>
    %33 = vector.broadcast %1 : vector<64x1xf32> to vector<64x128xf32>
    %34 = arith.mulf %32, %33 : vector<64x128xf32>
    %35 = arith.truncf %34 : vector<64x128xf32> to vector<64x128xbf16>
    %36 = arith.truncf %27 : vector<64x128xf32> to vector<64x128xbf16>
    %c0_19 = arith.constant 0 : index
    %c0_20 = arith.constant 0 : index
    %c0_21 = arith.constant 0 : index
    %37 = vector.load %arg6[%c0_19, %c0_20, %c0_21] : memref<3x128x128xbf16, #tpu.memory_space<vmem>>, vector<1x128x128xbf16>
    %38 = vector.shape_cast %37 : vector<1x128x128xbf16> to vector<128x128xbf16>
    %cst_22 = arith.constant dense<0.000000e+00> : vector<64x128xf32>
    %39 = tpu.matmul %31, %38, %cst_22 {dimension_numbers = #tpu.dot_dimension_numbers<[1], [0], [0], [1], [0, 0, 1, 1], [], []>} : vector<64x128xbf16>, vector<128x128xbf16>, vector<64x128xf32> -> vector<64x128xf32>
    %c1_23 = arith.constant 1 : index
    %c0_24 = arith.constant 0 : index
    %c0_25 = arith.constant 0 : index
    %40 = vector.load %arg6[%c1_23, %c0_24, %c0_25] : memref<3x128x128xbf16, #tpu.memory_space<vmem>>, vector<1x128x128xbf16>
    %41 = vector.shape_cast %40 : vector<1x128x128xbf16> to vector<128x128xbf16>
    %cst_26 = arith.constant dense<0.000000e+00> : vector<64x128xf32>
    %42 = tpu.matmul %36, %41, %cst_26 {dimension_numbers = #tpu.dot_dimension_numbers<[1], [0], [0], [1], [0, 0, 1, 1], [], []>} : vector<64x128xbf16>, vector<128x128xbf16>, vector<64x128xf32> -> vector<64x128xf32>
    %43 = arith.addf %39, %42 : vector<64x128xf32>
    %c2_27 = arith.constant 2 : index
    %c0_28 = arith.constant 0 : index
    %c0_29 = arith.constant 0 : index
    %44 = vector.load %arg6[%c2_27, %c0_28, %c0_29] : memref<3x128x128xbf16, #tpu.memory_space<vmem>>, vector<1x128x128xbf16>
    %45 = vector.shape_cast %44 : vector<1x128x128xbf16> to vector<128x128xbf16>
    %cst_30 = arith.constant dense<0.000000e+00> : vector<64x128xf32>
    %46 = tpu.matmul %35, %45, %cst_30 {dimension_numbers = #tpu.dot_dimension_numbers<[1], [0], [0], [1], [0, 0, 1, 1], [], []>} : vector<64x128xbf16>, vector<128x128xbf16>, vector<64x128xf32> -> vector<64x128xf32>
    %47 = arith.addf %43, %46 : vector<64x128xf32>
    %c0_31 = arith.constant 0 : index
    %c0_32 = arith.constant 0 : index
    %48 = vector.load %arg7[%c0_31, %c0_32] : memref<1x128xf32, #tpu.memory_space<vmem>>, vector<1x128xf32>
    %49 = vector.broadcast %48 : vector<1x128xf32> to vector<64x128xf32>
    %50 = arith.addf %47, %49 : vector<64x128xf32>
    %cst_33 = arith.constant 0.000000e+00 : f32
    %51 = vector.broadcast %cst_33 : f32 to vector<64x128xf32>
    %52 = arith.maximumf %50, %51 : vector<64x128xf32>
    %53 = arith.truncf %52 : vector<64x128xf32> to vector<64x128xbf16>
    %c0_34 = arith.constant 0 : index
    %c0_35 = arith.constant 0 : index
    %54 = vector.load %arg8[%c0_34, %c0_35] : memref<128x128xbf16, #tpu.memory_space<vmem>>, vector<128x128xbf16>
    %cst_36 = arith.constant dense<0.000000e+00> : vector<64x128xf32>
    %55 = tpu.matmul %53, %54, %cst_36 {dimension_numbers = #tpu.dot_dimension_numbers<[1], [0], [0], [1], [0, 0, 1, 1], [], []>} : vector<64x128xbf16>, vector<128x128xbf16>, vector<64x128xf32> -> vector<64x128xf32>
    %c0_37 = arith.constant 0 : index
    %c0_38 = arith.constant 0 : index
    %56 = vector.load %arg9[%c0_37, %c0_38] : memref<1x128xf32, #tpu.memory_space<vmem>>, vector<1x128xf32>
    %57 = vector.broadcast %56 : vector<1x128xf32> to vector<64x128xf32>
    %58 = arith.addf %55, %57 : vector<64x128xf32>
    %cst_39 = arith.constant 0.00999999977 : f32
    %59 = vector.broadcast %cst_39 : f32 to vector<64x128xf32>
    %60 = arith.mulf %59, %58 : vector<64x128xf32>
    %61 = arith.negf %60 : vector<64x128xf32>
    %62 = math.exp %61 : vector<64x128xf32>
    %cst_40 = arith.constant 1.000000e+00 : f32
    %63 = vector.broadcast %cst_40 : f32 to vector<64x128xf32>
    %64 = arith.addf %63, %62 : vector<64x128xf32>
    %65 = arith.divf %63, %64 : vector<64x128xf32>
    %c0_41 = arith.constant 0 : index
    %c0_42 = arith.constant 0 : index
    %66 = vector.load %arg10[%c0_41, %c0_42] : memref<64x128xf32, #tpu.memory_space<vmem>>, vector<64x128xf32>
    tpu.vector_store %arg10[%c0_41, %c0_42], %65 {strides = array<i32>} : memref<64x128xf32, #tpu.memory_space<vmem>>, vector<64x128xf32>,
    return
  }
  func.func @transform_0(%arg0: i32) -> (i32, i32) {
    %c0_i32 = arith.constant 0 : i32
    %c0_i32_0 = arith.constant 0 : i32
    return %arg0, %c0_i32 : i32, i32
  }
  func.func @transform_1(%arg0: i32) -> (i32, i32) {
    %c0_i32 = arith.constant 0 : i32
    %c0_i32_0 = arith.constant 0 : i32
    %c0_i32_1 = arith.constant 0 : i32
    return %c0_i32, %c0_i32_0 : i32, i32
  }
  func.func @transform_2(%arg0: i32) -> (i32, i32) {
    %c0_i32 = arith.constant 0 : i32
    %c0_i32_0 = arith.constant 0 : i32
    %c0_i32_1 = arith.constant 0 : i32
    return %c0_i32, %c0_i32_0 : i32, i32
  }
  func.func @transform_3(%arg0: i32) -> (i32, i32, i32) {
    %c0_i32 = arith.constant 0 : i32
    %c0_i32_0 = arith.constant 0 : i32
    %c0_i32_1 = arith.constant 0 : i32
    %c0_i32_2 = arith.constant 0 : i32
    return %c0_i32, %c0_i32_0, %c0_i32_1 : i32, i32, i32
  }
  func.func @transform_4(%arg0: i32) -> (i32, i32) {
    %c0_i32 = arith.constant 0 : i32
    %c0_i32_0 = arith.constant 0 : i32
    %c0_i32_1 = arith.constant 0 : i32
    return %c0_i32, %c0_i32_0 : i32, i32
  }
  func.func @transform_5(%arg0: i32) -> (i32, i32, i32) {
    %c0_i32 = arith.constant 0 : i32
    %c0_i32_0 = arith.constant 0 : i32
    %c0_i32_1 = arith.constant 0 : i32
    %c0_i32_2 = arith.constant 0 : i32
    return %c0_i32, %c0_i32_0, %c0_i32_1 : i32, i32, i32
  }
  func.func @transform_6(%arg0: i32) -> (i32, i32) {
    %c0_i32 = arith.constant 0 : i32
    %c0_i32_0 = arith.constant 0 : i32
    %c0_i32_1 = arith.constant 0 : i32
    return %c0_i32, %c0_i32_0 : i32, i32
  }
  func.func @transform_7(%arg0: i32) -> (i32, i32) {
    %c0_i32 = arith.constant 0 : i32
    %c0_i32_0 = arith.constant 0 : i32
    %c0_i32_1 = arith.constant 0 : i32
    return %c0_i32, %c0_i32_0 : i32, i32
  }
  func.func @transform_8(%arg0: i32) -> (i32, i32) {
    %c0_i32 = arith.constant 0 : i32
    %c0_i32_0 = arith.constant 0 : i32
    %c0_i32_1 = arith.constant 0 : i32
    return %c0_i32, %c0_i32_0 : i32, i32
  }
  func.func @transform_9(%arg0: i32) -> (i32, i32) {
    %c0_i32 = arith.constant 0 : i32
    %c0_i32_0 = arith.constant 0 : i32
    return %arg0, %c0_i32 : i32, i32
  }
}

module attributes {stable_mosaic.version = 11 : i64} {
  func.func @tem_kernel(%arg0: i32, %arg1: memref<64x128xbf16, #tpu.memory_space<vmem>>, %arg2: memref<64x1xf32, #tpu.memory_space<vmem>>, %arg3: memref<64x1xf32, #tpu.memory_space<vmem>>, %arg4: memref<3x128x128xbf16, #tpu.memory_space<vmem>>, %arg5: memref<1x128xf32, #tpu.memory_space<vmem>>, %arg6: memref<3x128x128xbf16, #tpu.memory_space<vmem>>, %arg7: memref<1x128xf32, #tpu.memory_space<vmem>>, %arg8: memref<128x128xbf16, #tpu.memory_space<vmem>>, %arg9: memref<1x128xf32, #tpu.memory_space<vmem>>, %arg10: memref<64x128xf32, #tpu.memory_space<vmem>>) attributes {dimension_semantics = [#tpu.dimension_semantics<parallel>], iteration_bounds = array<i64: 2>, scalar_prefetch = 0 : i64, scratch_operands = 0 : i64, tpu.core_type = #tpu.core_type<tc>, window_params = [{transform_indices = @transform_0, window_bounds = array<i64: 64, 128>}, {pipeline_mode = #tpu.pipeline_mode<synchronous>, transform_indices = @transform_1, window_bounds = array<i64: 64, 1>}, {pipeline_mode = #tpu.pipeline_mode<synchronous>, transform_indices = @transform_2, window_bounds = array<i64: 64, 1>}, {pipeline_mode = #tpu.pipeline_mode<synchronous>, transform_indices = @transform_3, window_bounds = array<i64: 3, 128, 128>}, {pipeline_mode = #tpu.pipeline_mode<synchronous>, transform_indices = @transform_4, window_bounds = array<i64: 1, 128>}, {pipeline_mode = #tpu.pipeline_mode<synchronous>, transform_indices = @transform_5, window_bounds = array<i64: 3, 128, 128>}, {pipeline_mode = #tpu.pipeline_mode<synchronous>, transform_indices = @transform_6, window_bounds = array<i64: 1, 128>}, {pipeline_mode = #tpu.pipeline_mode<synchronous>, transform_indices = @transform_7, window_bounds = array<i64: 128, 128>}, {pipeline_mode = #tpu.pipeline_mode<synchronous>, transform_indices = @transform_8, window_bounds = array<i64: 1, 128>}, {transform_indices = @transform_9, window_bounds = array<i64: 64, 128>}]} {
    %c0 = arith.constant 0 : index
    %c0_0 = arith.constant 0 : index
    %0 = vector.load %arg2[%c0, %c0_0] : memref<64x1xf32, #tpu.memory_space<vmem>>, vector<64x1xf32>
    %c0_1 = arith.constant 0 : index
    %c0_2 = arith.constant 0 : index
    %1 = vector.load %arg3[%c0_1, %c0_2] : memref<64x1xf32, #tpu.memory_space<vmem>>, vector<64x1xf32>
    %c0_3 = arith.constant 0 : index
    %c0_4 = arith.constant 0 : index
    %2 = vector.load %arg1[%c0_3, %c0_4] : memref<64x128xbf16, #tpu.memory_space<vmem>>, vector<64x128xbf16>
    %3 = arith.extf %2 : vector<64x128xbf16> to vector<64x128xf32>
    %c1_i32 = arith.constant 1 : i32
    %4 = tpu.dynamic_rotate %3 by %c1_i32 dim 0 : vector<64x128xf32>, i32 -> vector<64x128xf32>
    %5 = vector.broadcast %0 : vector<64x1xf32> to vector<64x128xf32>
    %6 = arith.mulf %4, %5 : vector<64x128xf32>
    %7 = arith.truncf %6 : vector<64x128xf32> to vector<64x128xbf16>
    %c63_i32 = arith.constant 63 : i32
    %8 = tpu.dynamic_rotate %3 by %c63_i32 dim 0 : vector<64x128xf32>, i32 -> vector<64x128xf32>
    %9 = vector.broadcast %1 : vector<64x1xf32> to vector<64x128xf32>
    %10 = arith.mulf %8, %9 : vector<64x128xf32>
    %11 = arith.truncf %10 : vector<64x128xf32> to vector<64x128xbf16>
    %c0_5 = arith.constant 0 : index
    %c0_6 = arith.constant 0 : index
    %c0_7 = arith.constant 0 : index
    %12 = vector.load %arg4[%c0_5, %c0_6, %c0_7] : memref<3x128x128xbf16, #tpu.memory_space<vmem>>, vector<1x128x128xbf16>
    %13 = vector.shape_cast %12 : vector<1x128x128xbf16> to vector<128x128xbf16>
    %cst = arith.constant dense<0.000000e+00> : vector<64x128xf32>
    %14 = tpu.matmul %7, %13, %cst {dimension_numbers = #tpu.dot_dimension_numbers<[1], [0], [0], [1], [0, 0, 1, 1], [], []>} : vector<64x128xbf16>, vector<128x128xbf16>, vector<64x128xf32> -> vector<64x128xf32>
    %c1 = arith.constant 1 : index
    %c0_8 = arith.constant 0 : index
    %c0_9 = arith.constant 0 : index
    %15 = vector.load %arg4[%c1, %c0_8, %c0_9] : memref<3x128x128xbf16, #tpu.memory_space<vmem>>, vector<1x128x128xbf16>
    %16 = vector.shape_cast %15 : vector<1x128x128xbf16> to vector<128x128xbf16>
    %cst_10 = arith.constant dense<0.000000e+00> : vector<64x128xf32>
    %17 = tpu.matmul %2, %16, %cst_10 {dimension_numbers = #tpu.dot_dimension_numbers<[1], [0], [0], [1], [0, 0, 1, 1], [], []>} : vector<64x128xbf16>, vector<128x128xbf16>, vector<64x128xf32> -> vector<64x128xf32>
    %18 = arith.addf %14, %17 : vector<64x128xf32>
    %c2 = arith.constant 2 : index
    %c0_11 = arith.constant 0 : index
    %c0_12 = arith.constant 0 : index
    %19 = vector.load %arg4[%c2, %c0_11, %c0_12] : memref<3x128x128xbf16, #tpu.memory_space<vmem>>, vector<1x128x128xbf16>
    %20 = vector.shape_cast %19 : vector<1x128x128xbf16> to vector<128x128xbf16>
    %cst_13 = arith.constant dense<0.000000e+00> : vector<64x128xf32>
    %21 = tpu.matmul %11, %20, %cst_13 {dimension_numbers = #tpu.dot_dimension_numbers<[1], [0], [0], [1], [0, 0, 1, 1], [], []>} : vector<64x128xbf16>, vector<128x128xbf16>, vector<64x128xf32> -> vector<64x128xf32>
    %22 = arith.addf %18, %21 : vector<64x128xf32>
    %c0_14 = arith.constant 0 : index
    %c0_15 = arith.constant 0 : index
    %23 = vector.load %arg5[%c0_14, %c0_15] : memref<1x128xf32, #tpu.memory_space<vmem>>, vector<1x128xf32>
    %24 = vector.broadcast %23 : vector<1x128xf32> to vector<64x128xf32>
    %25 = arith.addf %22, %24 : vector<64x128xf32>
    %cst_16 = arith.constant 0.000000e+00 : f32
    %26 = vector.broadcast %cst_16 : f32 to vector<64x128xf32>
    %27 = arith.maximumf %25, %26 : vector<64x128xf32>
    %c1_i32_17 = arith.constant 1 : i32
    %28 = tpu.dynamic_rotate %27 by %c1_i32_17 dim 0 : vector<64x128xf32>, i32 -> vector<64x128xf32>
    %29 = vector.broadcast %0 : vector<64x1xf32> to vector<64x128xf32>
    %30 = arith.mulf %28, %29 : vector<64x128xf32>
    %31 = arith.truncf %30 : vector<64x128xf32> to vector<64x128xbf16>
    %c63_i32_18 = arith.constant 63 : i32
    %32 = tpu.dynamic_rotate %27 by %c63_i32_18 dim 0 : vector<64x128xf32>, i32 -> vector<64x128xf32>
    %33 = vector.broadcast %1 : vector<64x1xf32> to vector<64x128xf32>
    %34 = arith.mulf %32, %33 : vector<64x128xf32>
    %35 = arith.truncf %34 : vector<64x128xf32> to vector<64x128xbf16>
    %36 = arith.truncf %27 : vector<64x128xf32> to vector<64x128xbf16>
    %c0_19 = arith.constant 0 : index
    %c0_20 = arith.constant 0 : index
    %c0_21 = arith.constant 0 : index
    %37 = vector.load %arg6[%c0_19, %c0_20, %c0_21] : memref<3x128x128xbf16, #tpu.memory_space<vmem>>, vector<1x128x128xbf16>
    %38 = vector.shape_cast %37 : vector<1x128x128xbf16> to vector<128x128xbf16>
    %cst_22 = arith.constant dense<0.000000e+00> : vector<64x128xf32>
    %39 = tpu.matmul %31, %38, %cst_22 {dimension_numbers = #tpu.dot_dimension_numbers<[1], [0], [0], [1], [0, 0, 1, 1], [], []>} : vector<64x128xbf16>, vector<128x128xbf16>, vector<64x128xf32> -> vector<64x128xf32>
    %c1_23 = arith.constant 1 : index
    %c0_24 = arith.constant 0 : index
    %c0_25 = arith.constant 0 : index
    %40 = vector.load %arg6[%c1_23, %c0_24, %c0_25] : memref<3x128x128xbf16, #tpu.memory_space<vmem>>, vector<1x128x128xbf16>
    %41 = vector.shape_cast %40 : vector<1x128x128xbf16> to vector<128x128xbf16>
    %cst_26 = arith.constant dense<0.000000e+00> : vector<64x128xf32>
    %42 = tpu.matmul %36, %41, %cst_26 {dimension_numbers = #tpu.dot_dimension_numbers<[1], [0], [0], [1], [0, 0, 1, 1], [], []>} : vector<64x128xbf16>, vector<128x128xbf16>, vector<64x128xf32> -> vector<64x128xf32>
    %43 = arith.addf %39, %42 : vector<64x128xf32>
    %c2_27 = arith.constant 2 : index
    %c0_28 = arith.constant 0 : index
    %c0_29 = arith.constant 0 : index
    %44 = vector.load %arg6[%c2_27, %c0_28, %c0_29] : memref<3x128x128xbf16, #tpu.memory_space<vmem>>, vector<1x128x128xbf16>
    %45 = vector.shape_cast %44 : vector<1x128x128xbf16> to vector<128x128xbf16>
    %cst_30 = arith.constant dense<0.000000e+00> : vector<64x128xf32>
    %46 = tpu.matmul %35, %45, %cst_30 {dimension_numbers = #tpu.dot_dimension_numbers<[1], [0], [0], [1], [0, 0, 1, 1], [], []>} : vector<64x128xbf16>, vector<128x128xbf16>, vector<64x128xf32> -> vector<64x128xf32>
    %47 = arith.addf %43, %46 : vector<64x128xf32>
    %c0_31 = arith.constant 0 : index
    %c0_32 = arith.constant 0 : index
    %48 = vector.load %arg7[%c0_31, %c0_32] : memref<1x128xf32, #tpu.memory_space<vmem>>, vector<1x128xf32>
    %49 = vector.broadcast %48 : vector<1x128xf32> to vector<64x128xf32>
    %50 = arith.addf %47, %49 : vector<64x128xf32>
    %cst_33 = arith.constant 0.000000e+00 : f32
    %51 = vector.broadcast %cst_33 : f32 to vector<64x128xf32>
    %52 = arith.maximumf %50, %51 : vector<64x128xf32>
    %53 = arith.truncf %52 : vector<64x128xf32> to vector<64x128xbf16>
    %c0_34 = arith.constant 0 : index
    %c0_35 = arith.constant 0 : index
    %54 = vector.load %arg8[%c0_34, %c0_35] : memref<128x128xbf16, #tpu.memory_space<vmem>>, vector<128x128xbf16>
    %cst_36 = arith.constant dense<0.000000e+00> : vector<64x128xf32>
    %55 = tpu.matmul %53, %54, %cst_36 {dimension_numbers = #tpu.dot_dimension_numbers<[1], [0], [0], [1], [0, 0, 1, 1], [], []>} : vector<64x128xbf16>, vector<128x128xbf16>, vector<64x128xf32> -> vector<64x128xf32>
    %c0_37 = arith.constant 0 : index
    %c0_38 = arith.constant 0 : index
    %56 = vector.load %arg9[%c0_37, %c0_38] : memref<1x128xf32, #tpu.memory_space<vmem>>, vector<1x128xf32>
    %57 = vector.broadcast %56 : vector<1x128xf32> to vector<64x128xf32>
    %58 = arith.addf %55, %57 : vector<64x128xf32>
    %cst_39 = arith.constant 0.00999999977 : f32
    %59 = vector.broadcast %cst_39 : f32 to vector<64x128xf32>
    %60 = arith.mulf %59, %58 : vector<64x128xf32>
    %61 = arith.negf %60 : vector<64x128xf32>
    %62 = math.exp %61 : vector<64x128xf32>
    %cst_40 = arith.constant 1.000000e+00 : f32
    %63 = vector.broadcast %cst_40 : f32 to vector<64x128xf32>
    %64 = arith.addf %63, %62 : vector<64x128xf32>
    %65 = arith.divf %63, %64 : vector<64x128xf32>
    %c0_41 = arith.constant 0 : index
    %c0_42 = arith.constant 0 : index
    %66 = vector.load %arg10[%c0_41, %c0_42] : memref<64x128xf32, #tpu.memory_space<vmem>>, vector<64x128xf32>
    tpu.vector_store %arg10[%c0_41, %c0_42], %65 {strides = array<i32>} : memref<64x128xf32, #tpu.memory_space<vmem>>, vector<64x128xf32>,
    return
  }
  func.func @transform_0(%arg0: i32) -> (i32, i32) {
    %c0_i32 = arith.constant 0 : i32
    %c0_i32_0 = arith.constant 0 : i32
    return %arg0, %c0_i32 : i32, i32
  }
  func.func @transform_1(%arg0: i32) -> (i32, i32) {
    %c0_i32 = arith.constant 0 : i32
    %c0_i32_0 = arith.constant 0 : i32
    %c0_i32_1 = arith.constant 0 : i32
    return %c0_i32, %c0_i32_0 : i32, i32
  }
  func.func @transform_2(%arg0: i32) -> (i32, i32) {
    %c0_i32 = arith.constant 0 : i32
    %c0_i32_0 = arith.constant 0 : i32
    %c0_i32_1 = arith.constant 0 : i32
    return %c0_i32, %c0_i32_0 : i32, i32
  }
  func.func @transform_3(%arg0: i32) -> (i32, i32, i32) {
    %c0_i32 = arith.constant 0 : i32
    %c0_i32_0 = arith.constant 0 : i32
    %c0_i32_1 = arith.constant 0 : i32
    %c0_i32_2 = arith.constant 0 : i32
    return %c0_i32, %c0_i32_0, %c0_i32_1 : i32, i32, i32
  }
  func.func @transform_4(%arg0: i32) -> (i32, i32) {
    %c0_i32 = arith.constant 0 : i32
    %c0_i32_0 = arith.constant 0 : i32
    %c0_i32_1 = arith.constant 0 : i32
    return %c0_i32, %c0_i32_0 : i32, i32
  }
  func.func @transform_5(%arg0: i32) -> (i32, i32, i32) {
    %c0_i32 = arith.constant 0 : i32
    %c0_i32_0 = arith.constant 0 : i32
    %c0_i32_1 = arith.constant 0 : i32
    %c0_i32_2 = arith.constant 0 : i32
    return %c0_i32, %c0_i32_0, %c0_i32_1 : i32, i32, i32
  }
  func.func @transform_6(%arg0: i32) -> (i32, i32) {
    %c0_i32 = arith.constant 0 : i32
    %c0_i32_0 = arith.constant 0 : i32
    %c0_i32_1 = arith.constant 0 : i32
    return %c0_i32, %c0_i32_0 : i32, i32
  }
  func.func @transform_7(%arg0: i32) -> (i32, i32) {
    %c0_i32 = arith.constant 0 : i32
    %c0_i32_0 = arith.constant 0 : i32
    %c0_i32_1 = arith.constant 0 : i32
    return %c0_i32, %c0_i32_0 : i32, i32
  }
  func.func @transform_8(%arg0: i32) -> (i32, i32) {
    %c0_i32 = arith.constant 0 : i32
    %c0_i32_0 = arith.constant 0 : i32
    %c0_i32_1 = arith.constant 0 : i32
    return %c0_i32, %c0_i32_0 : i32, i32
  }
  func.func @transform_9(%arg0: i32) -> (i32, i32) {
    %c0_i32 = arith.constant 0 : i32
    %c0_i32_0 = arith.constant 0 : i32
    return %arg0, %c0_i32 : i32, i32
  }
}

</mosaic_0001>

<llo_original>
// kernel: tpu_custom_call.1
$region0: #{tpu_custom_call.1}
  #allocation0 [shape = 'u32[]', space=smem, size = 0x4, offset = 0x4, fixed_abs, tag = 'smem constant byte address 0x4 - core index']
  #allocation1 [shape = 'u32[144,128]{1,0:T(1,128)}', space=vmem, size = 0x12000, scoped, tag = 'internal scratch']
  %s0 = inlined_call_operand.vmem [shape: bf16[128,128], index: 0, kind: input, shape index: {}]
  %s1 = inlined_call_operand.vmem [shape: f32[64,1], index: 1, kind: input, shape index: {}]
  %s2 = inlined_call_operand.vmem [shape: f32[64,1], index: 2, kind: input, shape index: {}]
  %s3 = inlined_call_operand.hbm [shape: bf16[3,128,128], index: 3, kind: input, shape index: {}]
  %s4 = inlined_call_operand.vmem [shape: f32[1,128], index: 4, kind: input, shape index: {}]
  %s5 = inlined_call_operand.hbm [shape: bf16[3,128,128], index: 5, kind: input, shape index: {}]
  %s6 = inlined_call_operand.vmem [shape: f32[1,128], index: 6, kind: input, shape index: {}]
  %s7 = inlined_call_operand.vmem [shape: bf16[128,128], index: 7, kind: input, shape index: {}]
  %s8 = inlined_call_operand.vmem [shape: f32[1,128], index: 8, kind: input, shape index: {}]
  %s9 = inlined_call_operand.hbm [shape: f32[128,128], index: 9, kind: output, shape index: {}]
  %s10 = sld [smem:[#allocation0]]
  $region77: #{tpu_custom_call.1} parent=0
    _
  %s12 = ssub.s32 1, %s10
  %s13 = scalar_select 0, %s12, %s10
  $region1: #{tpu_custom_call.1} parent=0
    #allocation2 [shape = 'u8[98304]{0}', space=vmem, size = 0x18000, scoped, tag = 'input window, operand 3, single buffered']
    #allocation3 [shape = 's32[2]{0}', space=sflag, size = 0x8, scoped, tag = 'scoped memory for tpu_custom_call.1']
    #allocation4 [shape = 's32[2]{0}', space=sflag, size = 0x8, scoped, tag = 'scoped memory for tpu_custom_call.1']
    #allocation5 [shape = 'u8[98304]{0}', space=vmem, size = 0x18000, scoped, tag = 'input window, operand 5, single buffered']
    #allocation6 [shape = 's32[1]{0}', space=sflag, size = 0x4, scoped, tag = 'scoped memory for tpu_custom_call.1']
    #allocation7 [shape = 'u8[65536]{0}', space=vmem, size = 0x10000, scoped, tag = 'output window, operand 0']
    %14 = vsyncpa [#allocation3], 0
    %15 = vsyncpa [#allocation6], 0
    %16 = vsyncpa [#allocation4], 0
    %s17 = scalar_lea.sflag [#allocation4], 1
    %18 = vsyncpa %s17, 0
    loop: start=0, step=1, limit=4
    $region2: #{tpu_custom_call.1} parent=1 // loop_pre_header
      _
    $region3: #{tpu_custom_call.1} parent=1 // loop_header
      %s20 = sphi 0, %s24
      %p21 = scmp.ge.s32.totalorder %s20, 4
      %s30 = sphi 0, %s32
      %s33 = sphi 0, %s30
      %s34 = sphi 0, %s33
      %s50 = sphi 0, %s34
      %s54 = sphi 0, %s54
      %s56 = sphi 0, %s54
      %s57 = sphi 0, %s56
      %s71 = sphi 0, %s57
      %s75 = sphi 0, %s75
      %s77 = sphi 0, %s75
      %s78 = sphi 0, %s77
      %s92 = sphi 0, %s78
      %s96 = sphi 0, %s96
      %s98 = sphi 0, %s96
      %s99 = sphi 0, %s98
      %s113 = sphi 0, %s99
      %s117 = sphi 0, %s117
      %s119 = sphi 0, %s117
      %s120 = sphi 0, %s119
      %s134 = sphi 0, %s120
      %s138 = sphi 0, %s138
      %s140 = sphi 0, %s138
      %s141 = sphi 0, %s140
      %s155 = sphi 0, %s141
      %s159 = sphi 0, %s159
      %s161 = sphi 0, %s159
      %s162 = sphi 0, %s161
      %s176 = sphi 0, %s162
      %s180 = sphi 0, %s180
      %s182 = sphi 0, %s180
      %s183 = sphi 0, %s182
      %s197 = sphi 0, %s183
      %s201 = sphi 0, %s201
      %s203 = sphi 0, %s201
      %s204 = sphi 0, %s203
      %s218 = sphi 0, %s204
      %s224 = sphi 0, %s226
      %s227 = sphi 0, %s224
      %s228 = sphi 0, %s227
      %s244 = sphi 0, %s228
    $region4: #{tpu_custom_call.1} parent=1 // loop_header_branch
      %23 = sbr.rel (%p21) target = $region8
    $region5: #{tpu_custom_call.1} parent=1 // loop_body
      %s25 = ssub.s32 %s20, 1
      %s26 = ssub.s32 %s20, 2
      %s27 = sadd.s32 %s20, 1
      %s28 = ssub.s32 %s20, %s27
      %p29 = scmp.eq.s32.totalorder %s28, 0
      %s31 = sadd.s32 %s30, 1
      %s32 = scalar_select %p29, %s30, %s31
      %p35 = pneg %p29
      %p36 = scmp.eq.s32.totalorder %s20, 1
      %p37 = por %p35, %p36
      %p38 = scmp.ne.s32.totalorder %s30, %s33
      %p39 = scmp.eq.s32.totalorder %s20, 0
      %p40 = por %p38, %p39
      %p41 = scmp.ne.s32.totalorder %s30, %s33
      %p42 = scmp.eq.s32.totalorder %s25, 1
      %p43 = por %p41, %p42
      %p44 = scmp.ne.s32.totalorder %s33, %s34
      %p45 = scmp.eq.s32.totalorder %s25, 0
      %p46 = por %p44, %p45
      %p47 = scmp.ne.s32.totalorder %s33, %s34
      %p48 = scmp.eq.s32.totalorder %s26, 1
      %p49 = por %p47, %p48
      %p51 = scmp.ne.s32.totalorder %s34, %s50
      %p52 = scmp.eq.s32.totalorder %s26, 0
      %p53 = por %p51, %p52
      %s55 = sadd.s32 %s54, 1
      %p58 = scmp.eq.s32.totalorder %s20, 1
      %p59 = scmp.ne.s32.totalorder %s54, %s56
      %p60 = scmp.eq.s32.totalorder %s20, 0
      %p61 = por %p59, %p60
      %p62 = scmp.ne.s32.totalorder %s54, %s56
      %p63 = scmp.eq.s32.totalorder %s25, 1
      %p64 = por %p62, %p63
      %p65 = scmp.ne.s32.totalorder %s56, %s57
      %p66 = scmp.eq.s32.totalorder %s25, 0
      %p67 = por %p65, %p66
      %p68 = scmp.ne.s32.totalorder %s56, %s57
      %p69 = scmp.eq.s32.totalorder %s26, 1
      %p70 = por %p68, %p69
      %p72 = scmp.ne.s32.totalorder %s57, %s71
      %p73 = scmp.eq.s32.totalorder %s26, 0
      %p74 = por %p72, %p73
      %s76 = sadd.s32 %s75, 1
      %p79 = scmp.eq.s32.totalorder %s20, 1
      %p80 = scmp.ne.s32.totalorder %s75, %s77
      %p81 = scmp.eq.s32.totalorder %s20, 0
      %p82 = por %p80, %p81
      %p83 = scmp.ne.s32.totalorder %s75, %s77
      %p84 = scmp.eq.s32.totalorder %s25, 1
      %p85 = por %p83, %p84
      %p86 = scmp.ne.s32.totalorder %s77, %s78
      %p87 = scmp.eq.s32.totalorder %s25, 0
      %p88 = por %p86, %p87
      %p89 = scmp.ne.s32.totalorder %s77, %s78
      %p90 = scmp.eq.s32.totalorder %s26, 1
      %p91 = por %p89, %p90
      %p93 = scmp.ne.s32.totalorder %s78, %s92
      %p94 = scmp.eq.s32.totalorder %s26, 0
      %p95 = por %p93, %p94
      %s97 = sadd.s32 %s96, 1
      %p100 = scmp.eq.s32.totalorder %s20, 1
      %p101 = scmp.ne.s32.totalorder %s96, %s98
      %p102 = scmp.eq.s32.totalorder %s20, 0
      %p103 = por %p101, %p102
      %p104 = scmp.ne.s32.totalorder %s96, %s98
      %p105 = scmp.eq.s32.totalorder %s25, 1
      %p106 = por %p104, %p105
      %p107 = scmp.ne.s32.totalorder %s98, %s99
      %p108 = scmp.eq.s32.totalorder %s25, 0
      %p109 = por %p107, %p108
      %p110 = scmp.ne.s32.totalorder %s98, %s99
      %p111 = scmp.eq.s32.totalorder %s26, 1
      %p112 = por %p110, %p111
      %p114 = scmp.ne.s32.totalorder %s99, %s113
      %p115 = scmp.eq.s32.totalorder %s26, 0
      %p116 = por %p114, %p115
      %s118 = sadd.s32 %s117, 1
      %p121 = scmp.eq.s32.totalorder %s20, 1
      %p122 = scmp.ne.s32.totalorder %s117, %s119
      %p123 = scmp.eq.s32.totalorder %s20, 0
      %p124 = por %p122, %p123
      %p125 = scmp.ne.s32.totalorder %s117, %s119
      %p126 = scmp.eq.s32.totalorder %s25, 1
      %p127 = por %p125, %p126
      %p128 = scmp.ne.s32.totalorder %s119, %s120
      %p129 = scmp.eq.s32.totalorder %s25, 0
      %p130 = por %p128, %p129
      %p131 = scmp.ne.s32.totalorder %s119, %s120
      %p132 = scmp.eq.s32.totalorder %s26, 1
      %p133 = por %p131, %p132
      %p135 = scmp.ne.s32.totalorder %s120, %s134
      %p136 = scmp.eq.s32.totalorder %s26, 0
      %p137 = por %p135, %p136
      %s139 = sadd.s32 %s138, 1
      %p142 = scmp.eq.s32.totalorder %s20, 1
      %p143 = scmp.ne.s32.totalorder %s138, %s140
      %p144 = scmp.eq.s32.totalorder %s20, 0
      %p145 = por %p143, %p144
      %p146 = scmp.ne.s32.totalorder %s138, %s140
      %p147 = scmp.eq.s32.totalorder %s25, 1
      %p148 = por %p146, %p147
      %p149 = scmp.ne.s32.totalorder %s140, %s141
      %p150 = scmp.eq.s32.totalorder %s25, 0
      %p151 = por %p149, %p150
      %p152 = scmp.ne.s32.totalorder %s140, %s141
      %p153 = scmp.eq.s32.totalorder %s26, 1
      %p154 = por %p152, %p153
      %p156 = scmp.ne.s32.totalorder %s141, %s155
      %p157 = scmp.eq.s32.totalorder %s26, 0
      %p158 = por %p156, %p157
      %s160 = sadd.s32 %s159, 1
      %p163 = scmp.eq.s32.totalorder %s20, 1
      %p164 = scmp.ne.s32.totalorder %s159, %s161
      %p165 = scmp.eq.s32.totalorder %s20, 0
      %p166 = por %p164, %p165
      %p167 = scmp.ne.s32.totalorder %s159, %s161
      %p168 = scmp.eq.s32.totalorder %s25, 1
      %p169 = por %p167, %p168
      %p170 = scmp.ne.s32.totalorder %s161, %s162
      %p171 = scmp.eq.s32.totalorder %s25, 0
      %p172 = por %p170, %p171
      %p173 = scmp.ne.s32.totalorder %s161, %s162
      %p174 = scmp.eq.s32.totalorder %s26, 1
      %p175 = por %p173, %p174
      %p177 = scmp.ne.s32.totalorder %s162, %s176
      %p178 = scmp.eq.s32.totalorder %s26, 0
      %p179 = por %p177, %p178
      %s181 = sadd.s32 %s180, 1
      %p184 = scmp.eq.s32.totalorder %s20, 1
      %p185 = scmp.ne.s32.totalorder %s180, %s182
      %p186 = scmp.eq.s32.totalorder %s20, 0
      %p187 = por %p185, %p186
      %p188 = scmp.ne.s32.totalorder %s180, %s182
      %p189 = scmp.eq.s32.totalorder %s25, 1
      %p190 = por %p188, %p189
      %p191 = scmp.ne.s32.totalorder %s182, %s183
      %p192 = scmp.eq.s32.totalorder %s25, 0
      %p193 = por %p191, %p192
      %p194 = scmp.ne.s32.totalorder %s182, %s183
      %p195 = scmp.eq.s32.totalorder %s26, 1
      %p196 = por %p194, %p195
      %p198 = scmp.ne.s32.totalorder %s183, %s197
      %p199 = scmp.eq.s32.totalorder %s26, 0
      %p200 = por %p198, %p199
      %s202 = sadd.s32 %s201, 1
      %p205 = scmp.eq.s32.totalorder %s20, 1
      %p206 = scmp.ne.s32.totalorder %s201, %s203
      %p207 = scmp.eq.s32.totalorder %s20, 0
      %p208 = por %p206, %p207
      %p209 = scmp.ne.s32.totalorder %s201, %s203
      %p210 = scmp.eq.s32.totalorder %s25, 1
      %p211 = por %p209, %p210
      %p212 = scmp.ne.s32.totalorder %s203, %s204
      %p213 = scmp.eq.s32.totalorder %s25, 0
      %p214 = por %p212, %p213
      %p215 = scmp.ne.s32.totalorder %s203, %s204
      %p216 = scmp.eq.s32.totalorder %s26, 1
      %p217 = por %p215, %p216
      %p219 = scmp.ne.s32.totalorder %s204, %s218
      %p220 = scmp.eq.s32.totalorder %s26, 0
      %p221 = por %p219, %p220
      %s222 = ssub.s32 %s20, %s27
      %p223 = scmp.eq.s32.totalorder %s222, 0
      %s225 = sadd.s32 %s224, 1
      %s226 = scalar_select %p223, %s224, %s225
      %p229 = pneg %p223
      %p230 = scmp.eq.s32.totalorder %s20, 1
      %p231 = por %p229, %p230
      %p232 = scmp.ne.s32.totalorder %s224, %s227
      %p233 = scmp.eq.s32.totalorder %s20, 0
      %p234 = por %p232, %p233
      %p235 = scmp.ne.s32.totalorder %s224, %s227
      %p236 = scmp.eq.s32.totalorder %s25, 1
      %p237 = por %p235, %p236
      %p238 = scmp.ne.s32.totalorder %s227, %s228
      %p239 = scmp.eq.s32.totalorder %s25, 0
      %p240 = por %p238, %p239
      %p241 = scmp.ne.s32.totalorder %s227, %s228
      %p242 = scmp.eq.s32.totalorder %s26, 1
      %p243 = por %p241, %p242
      %p245 = scmp.ne.s32.totalorder %s228, %s244
      %p246 = scmp.eq.s32.totalorder %s26, 0
      %p247 = por %p245, %p246
      %p248 = scmp.le.s32.totalorder 1, %s20
      %p249 = scmp.lt.s32.totalorder %s20, 3
      %p250 = pnand %p248, %p249
      %p251 = pneg %p250
      // Predicated region
      $region9: #{tpu_custom_call.1} parent=5 // pred_check
        _
      $region10: #{tpu_custom_call.1} parent=5 // pred_check_branch
        %253 = sbr.rel (%p250) target = $region12
      $region11: #{tpu_custom_call.1} parent=5 // pred_region
        %s254 = ssub.s32 %s20, 1
        // Predicated region
        $region13: #{tpu_custom_call.1} parent=11 // pred_check
          %p255 = pneg %p67
        $region14: #{tpu_custom_call.1} parent=11 // pred_check_branch
          %257 = sbr.rel (%p255) target = $region16
        $region15: #{tpu_custom_call.1} parent=11 // pred_region
          _
        $region16: #{tpu_custom_call.1} parent=11 // pred_fallthru
          _
        // Predicated region
        $region17: #{tpu_custom_call.1} parent=11 // pred_check
          %p258 = pneg %p88
        $region18: #{tpu_custom_call.1} parent=11 // pred_check_branch
          %260 = sbr.rel (%p258) target = $region20
        $region19: #{tpu_custom_call.1} parent=11 // pred_region
          _
        $region20: #{tpu_custom_call.1} parent=11 // pred_fallthru
          _
        // Predicated region
        $region21: #{tpu_custom_call.1} parent=11 // pred_check
          %p261 = pneg %p109
        $region22: #{tpu_custom_call.1} parent=11 // pred_check_branch
          %263 = sbr.rel (%p261) target = $region24
        $region23: #{tpu_custom_call.1} parent=11 // pred_region
          %s265 = ssub.s32 3072, 3072
          %266 = vsyncadd [#allocation3], %s265
          %s267 = sshll.u32 [#allocation2], 4
          %s268 = int_to_ptr.vmem [resolvable:$true] %s267
          %273 = dma.hbm_to_vmem [thread:$0]  %s3, 3072, %s268, [#allocation3], 64, 64, 4
        $region24: #{tpu_custom_call.1} parent=11 // pred_fallthru
          _
        // Predicated region
        $region25: #{tpu_custom_call.1} parent=11 // pred_check
          %p274 = pneg %p130
        $region26: #{tpu_custom_call.1} parent=11 // pred_check_branch
          %276 = sbr.rel (%p274) target = $region28
        $region27: #{tpu_custom_call.1} parent=11 // pred_region
          _
        $region28: #{tpu_custom_call.1} parent=11 // pred_fallthru
          _
        // Predicated region
        $region29: #{tpu_custom_call.1} parent=11 // pred_check
          %p277 = pneg %p151
        $region30: #{tpu_custom_call.1} parent=11 // pred_check_branch
          %279 = sbr.rel (%p277) target = $region32
        $region31: #{tpu_custom_call.1} parent=11 // pred_region
          %s281 = ssub.s32 3072, 3072
          %282 = vsyncadd [#allocation6], %s281
          %s283 = sshll.u32 [#allocation5], 4
          %s284 = int_to_ptr.vmem [resolvable:$true] %s283
          %289 = dma.hbm_to_vmem [thread:$0]  %s5, 3072, %s284, [#allocation6], 64, 64, 4
        $region32: #{tpu_custom_call.1} parent=11 // pred_fallthru
          _
        // Predicated region
        $region33: #{tpu_custom_call.1} parent=11 // pred_check
          %p290 = pneg %p172
        $region34: #{tpu_custom_call.1} parent=11 // pred_check_branch
          %292 = sbr.rel (%p290) target = $region36
        $region35: #{tpu_custom_call.1} parent=11 // pred_region
          _
        $region36: #{tpu_custom_call.1} parent=11 // pred_fallthru
          _
        // Predicated region
        $region37: #{tpu_custom_call.1} parent=11 // pred_check
          %p293 = pneg %p193
        $region38: #{tpu_custom_call.1} parent=11 // pred_check_branch
          %295 = sbr.rel (%p293) target = $region40
        $region39: #{tpu_custom_call.1} parent=11 // pred_region
          _
        $region40: #{tpu_custom_call.1} parent=11 // pred_fallthru
          _
        // Predicated region
        $region41: #{tpu_custom_call.1} parent=11 // pred_check
          %p296 = pneg %p214
        $region42: #{tpu_custom_call.1} parent=11 // pred_check_branch
          %298 = sbr.rel (%p296) target = $region44
        $region43: #{tpu_custom_call.1} parent=11 // pred_region
          _
        $region44: #{tpu_custom_call.1} parent=11 // pred_fallthru
          _
      $region12: #{tpu_custom_call.1} parent=5 // pred_fallthru
        _
      %p299 = scmp.lt.s32.totalorder %s20, 2
      // Predicated region
      $region45: #{tpu_custom_call.1} parent=5 // pred_check
        %p300 = pneg %p299
      $region46: #{tpu_custom_call.1} parent=5 // pred_check_branch
        %302 = sbr.rel (%p300) target = $region48
      $region47: #{tpu_custom_call.1} parent=5 // pred_region
        // Predicated region
        $region49: #{tpu_custom_call.1} parent=47 // pred_check
          %p303 = pneg %p40
        $region50: #{tpu_custom_call.1} parent=47 // pred_check_branch
          %305 = sbr.rel (%p303) target = $region52
        $region51: #{tpu_custom_call.1} parent=47 // pred_region
          %s306 = smul.u32 8, %s20
          %p307 = scmp.lt.s32.totalorder %s306, 15
          %s308 = scalar_select %p307, %s306, 15
          %s309 = smul.addr %s308, 4
          %s310 = scalar_lea.vmem %s0, %s309
          %s311 = smul.u32 8, %s20
        $region52: #{tpu_custom_call.1} parent=47 // pred_fallthru
          _
      $region48: #{tpu_custom_call.1} parent=5 // pred_fallthru
        _
      %p312 = scmp.le.s32.totalorder 1, %s20
      %p313 = scmp.lt.s32.totalorder %s20, 3
      %p314 = pnand %p312, %p313
      %p315 = pneg %p314
      // Predicated region
      $region53: #{tpu_custom_call.1} parent=5 // pred_check
        _
      $region54: #{tpu_custom_call.1} parent=5 // pred_check_branch
        %317 = sbr.rel (%p314) target = $region56
      $region55: #{tpu_custom_call.1} parent=5 // pred_region
        %s318 = ssub.s32 %s20, 1
        // Predicated region
        $region57: #{tpu_custom_call.1} parent=55 // pred_check
          %p319 = pneg %p109
        $region58: #{tpu_custom_call.1} parent=55 // pred_check_branch
          %321 = sbr.rel (%p319) target = $region60
        $region59: #{tpu_custom_call.1} parent=55 // pred_region
          %322 = dma.done [#allocation3], 3072
        $region60: #{tpu_custom_call.1} parent=55 // pred_fallthru
          _
        // Predicated region
        $region61: #{tpu_custom_call.1} parent=55 // pred_check
          %p323 = pneg %p151
        $region62: #{tpu_custom_call.1} parent=55 // pred_check_branch
          %325 = sbr.rel (%p323) target = $region64
        $region63: #{tpu_custom_call.1} parent=55 // pred_region
          %326 = dma.done [#allocation6], 3072
        $region64: #{tpu_custom_call.1} parent=55 // pred_fallthru
          _
        %s327 = smul.u32 8, %s25
        %p328 = scmp.lt.s32.totalorder %s327, 15
        %s329 = scalar_select %p328, %s327, 15
        %s330 = smul.addr %s329, 4
        %s331 = scalar_lea.vmem %s0, %s330
        %p332 = pneg %p46
        %p333 = pneg %p43
        %p334 = pneg %p67
        %p335 = pneg %p64
        %p336 = pneg %p88
        %p337 = pneg %p85
        %p338 = pneg %p109
        %p339 = pneg %p106
        %p340 = pneg %p130
        %p341 = pneg %p127
        %p342 = pneg %p151
        %p343 = pneg %p148
        %p344 = pneg %p172
        %p345 = pneg %p169
        %p346 = pneg %p193
        %p347 = pneg %p190
        %p348 = pneg %p214
        %p349 = pneg %p211
        %p350 = pneg %p240
        %p351 = pneg %p237
        %s352 = sand.u32 %s227, 1
        %s353 = scalar_lea.sflag [#allocation4], %s352
        %s354 = sand.u32 %s227, 1
        %s355 = smul.addr %s354, 64
        %s356 = scalar_lea.vmem [#allocation7], %s355
        %s357 = smul.u32 8, %s25
        %p358 = scmp.lt.s32.totalorder %s357, 15
        %s359 = scalar_select %p358, %s357, 15
        %s360 = smul.addr %s359, 4
        %s361 = scalar_lea.vmem %s0, %s360
        %s362 = smul.u32 8, %s25
        %s363 = smul.u32 8, %s25
        %v365 = vld [vmem:[%s1] sm:$0xff]
        %v366 = vld [vmem:[%s1 + $0x8] sm:$0xff]
        %v367 = vld [vmem:[%s1 + $0x10] sm:$0xff]
        %v368 = vld [vmem:[%s1 + $0x18] sm:$0xff]
        %v369 = vld [vmem:[%s1 + $0x20] sm:$0xff]
        %v370 = vld [vmem:[%s1 + $0x28] sm:$0xff]
        %v371 = vld [vmem:[%s1 + $0x30] sm:$0xff]
        %v372 = vld [vmem:[%s1 + $0x38] sm:$0xff]
        %v373 = vld [vmem:[%s2] sm:$0xff]
        %v374 = vld [vmem:[%s2 + $0x8] sm:$0xff]
        %v375 = vld [vmem:[%s2 + $0x10] sm:$0xff]
        %v376 = vld [vmem:[%s2 + $0x18] sm:$0xff]
        %v377 = vld [vmem:[%s2 + $0x20] sm:$0xff]
        %v378 = vld [vmem:[%s2 + $0x28] sm:$0xff]
        %v379 = vld [vmem:[%s2 + $0x30] sm:$0xff]
        %v380 = vld [vmem:[%s2 + $0x38] sm:$0xff]
        %v381 = vld [vmem:[%s361] sm:$0xf]
        %v382 = vld [vmem:[%s361 + $0x4] sm:$0xf]
        %v383 = vld [vmem:[%s361 + $0x8] sm:$0xf]
        %v384 = vld [vmem:[%s361 + $0xc] sm:$0xf]
        %v385 = vld [vmem:[%s361 + $0x10] sm:$0xf]
        %v386 = vld [vmem:[%s361 + $0x14] sm:$0xf]
        %v387 = vld [vmem:[%s361 + $0x18] sm:$0xf]
        %v388 = vld [vmem:[%s361 + $0x1c] sm:$0xf]
        %v389 = vunpack.c.l.bf16 %v381
        %v390 = vunpack.c.l.bf16 %v382
        %v391 = vunpack.c.l.bf16 %v383
        %v392 = vunpack.c.l.bf16 %v384
        %v393 = vunpack.c.l.bf16 %v385
        %v394 = vunpack.c.l.bf16 %v386
        %v395 = vunpack.c.l.bf16 %v387
        %v396 = vunpack.c.l.bf16 %v388
        %v397 = vrot.slane %v389, 7
        %v398 = vrot.slane %v390, 7
        %v399 = vrot.slane %v391, 7
        %v400 = vrot.slane %v392, 7
        %v401 = vrot.slane %v393, 7
        %v402 = vrot.slane %v394, 7
        %v403 = vrot.slane %v395, 7
        %v404 = vrot.slane %v396, 7
        %v405 = vlaneseq
        %v406 = vshrl.u32 %v405, 7
        %vm407 = vcmp.lt.s32.totalorder %v406, 1
        %v408 = vsel %vm407, %v403, %v404
        %v409 = vsel %vm407, %v402, %v403
        %v410 = vsel %vm407, %v401, %v402
        %v411 = vsel %vm407, %v400, %v401
        %v412 = vsel %vm407, %v399, %v400
        %v413 = vsel %vm407, %v398, %v399
        %v414 = vsel %vm407, %v397, %v398
        %v415 = vsel %vm407, %v404, %v397
        %417 = vset.pattern.permute.xlu0 0
        %418 = vperm.xlu0 %417, %v365
        %v419 = vpop.permute.xlu0 %418
        %422 = vset.pattern.permute.xlu0 0
        %423 = vperm.xlu0 %422, %v366
        %v424 = vpop.permute.xlu0 %423
        %427 = vset.pattern.permute.xlu0 0
        %428 = vperm.xlu0 %427, %v367
        %v429 = vpop.permute.xlu0 %428
        %432 = vset.pattern.permute.xlu0 0
        %433 = vperm.xlu0 %432, %v368
        %v434 = vpop.permute.xlu0 %433
        %437 = vset.pattern.permute.xlu0 0
        %438 = vperm.xlu0 %437, %v369
        %v439 = vpop.permute.xlu0 %438
        %442 = vset.pattern.permute.xlu0 0
        %443 = vperm.xlu0 %442, %v370
        %v444 = vpop.permute.xlu0 %443
        %447 = vset.pattern.permute.xlu0 0
        %448 = vperm.xlu0 %447, %v371
        %v449 = vpop.permute.xlu0 %448
        %452 = vset.pattern.permute.xlu0 0
        %453 = vperm.xlu0 %452, %v372
        %v454 = vpop.permute.xlu0 %453
        %v456 = vmul.f32 %v415, %v419
        %v457 = vmul.f32 %v414, %v424
        %v458 = vmul.f32 %v413, %v429
        %v459 = vmul.f32 %v412, %v434
        %v460 = vmul.f32 %v411, %v439
        %v461 = vmul.f32 %v410, %v444
        %v462 = vmul.f32 %v409, %v449
        %v463 = vmul.f32 %v408, %v454
        %v464 = vpack.c.bf16 %v457, %v456
        %v465 = vpack.c.bf16 %v459, %v458
        %v466 = vpack.c.bf16 %v461, %v460
        %v467 = vpack.c.bf16 %v463, %v462
        %v468 = vrot.slane %v389, 1
        %v469 = vrot.slane %v390, 1
        %v470 = vrot.slane %v391, 1
        %v471 = vrot.slane %v392, 1
        %v472 = vrot.slane %v393, 1
        %v473 = vrot.slane %v394, 1
        %v474 = vrot.slane %v395, 1
        %v475 = vrot.slane %v396, 1
        %vm476 = vcmp.lt.s32.totalorder %v406, 7
        %v477 = vsel %vm476, %v474, %v475
        %v478 = vsel %vm476, %v473, %v474
        %v479 = vsel %vm476, %v472, %v473
        %v480 = vsel %vm476, %v471, %v472
        %v481 = vsel %vm476, %v470, %v471
        %v482 = vsel %vm476, %v469, %v470
        %v483 = vsel %vm476, %v468, %v469
        %v484 = vsel %vm476, %v475, %v468
        %486 = vset.pattern.permute.xlu0 0
        %487 = vperm.xlu0 %486, %v373
        %v488 = vpop.permute.xlu0 %487
        %491 = vset.pattern.permute.xlu0 0
        %492 = vperm.xlu0 %491, %v374
        %v493 = vpop.permute.xlu0 %492
        %496 = vset.pattern.permute.xlu0 0
        %497 = vperm.xlu0 %496, %v375
        %v498 = vpop.permute.xlu0 %497
        %501 = vset.pattern.permute.xlu0 0
        %502 = vperm.xlu0 %501, %v376
        %v503 = vpop.permute.xlu0 %502
        %506 = vset.pattern.permute.xlu0 0
        %507 = vperm.xlu0 %506, %v377
        %v508 = vpop.permute.xlu0 %507
        %511 = vset.pattern.permute.xlu0 0
        %512 = vperm.xlu0 %511, %v378
        %v513 = vpop.permute.xlu0 %512
        %516 = vset.pattern.permute.xlu0 0
        %517 = vperm.xlu0 %516, %v379
        %v518 = vpop.permute.xlu0 %517
        %521 = vset.pattern.permute.xlu0 0
        %522 = vperm.xlu0 %521, %v380
        %v523 = vpop.permute.xlu0 %522
        %v525 = vmul.f32 %v483, %v488
        %v526 = vmul.f32 %v482, %v493
        %v527 = vmul.f32 %v481, %v498
        %v528 = vmul.f32 %v480, %v503
        %v529 = vmul.f32 %v479, %v508
        %v530 = vmul.f32 %v478, %v513
        %v531 = vmul.f32 %v477, %v518
        %v532 = vmul.f32 %v484, %v523
        %v533 = vpack.c.bf16 %v526, %v525
        %v534 = vpack.c.bf16 %v528, %v527
        %v535 = vpack.c.bf16 %v530, %v529
        %v536 = vpack.c.bf16 %v532, %v531
        %v537 = vld [vmem:[#allocation2] sm:$0xf]
        %v538 = vld [vmem:[#allocation2 + $0x4] sm:$0xf]
        %v539 = vld [vmem:[#allocation2 + $0x8] sm:$0xf]
        %v540 = vld [vmem:[#allocation2 + $0xc] sm:$0xf]
        %v541 = vld [vmem:[#allocation2 + $0x10] sm:$0xf]
        %v542 = vld [vmem:[#allocation2 + $0x14] sm:$0xf]
        %v543 = vld [vmem:[#allocation2 + $0x18] sm:$0xf]
        %v544 = vld [vmem:[#allocation2 + $0x1c] sm:$0xf]
        %v545 = vld [vmem:[#allocation2 + $0x20] sm:$0xf]
        %v546 = vld [vmem:[#allocation2 + $0x24] sm:$0xf]
        %v547 = vld [vmem:[#allocation2 + $0x28] sm:$0xf]
        %v548 = vld [vmem:[#allocation2 + $0x2c] sm:$0xf]
        %v549 = vld [vmem:[#allocation2 + $0x30] sm:$0xf]
        %v550 = vld [vmem:[#allocation2 + $0x34] sm:$0xf]
        %v551 = vld [vmem:[#allocation2 + $0x38] sm:$0xf]
        %v552 = vld [vmem:[#allocation2 + $0x3c] sm:$0xf]
        %s553 = scalar_lea.vmem [#allocation2], 64
        %v554 = vld [vmem:[%s553] sm:$0xf]
        %v555 = vld [vmem:[%s553 + $0x4] sm:$0xf]
        %v556 = vld [vmem:[%s553 + $0x8] sm:$0xf]
        %v557 = vld [vmem:[%s553 + $0xc] sm:$0xf]
        %v558 = vld [vmem:[%s553 + $0x10] sm:$0xf]
        %v559 = vld [vmem:[%s553 + $0x14] sm:$0xf]
        %v560 = vld [vmem:[%s553 + $0x18] sm:$0xf]
        %v561 = vld [vmem:[%s553 + $0x1c] sm:$0xf]
        %v562 = vld [vmem:[%s553 + $0x20] sm:$0xf]
        %v563 = vld [vmem:[%s553 + $0x24] sm:$0xf]
        %v564 = vld [vmem:[%s553 + $0x28] sm:$0xf]
        %v565 = vld [vmem:[%s553 + $0x2c] sm:$0xf]
        %v566 = vld [vmem:[%s553 + $0x30] sm:$0xf]
        %v567 = vld [vmem:[%s553 + $0x34] sm:$0xf]
        %v568 = vld [vmem:[%s553 + $0x38] sm:$0xf]
        %v569 = vld [vmem:[%s553 + $0x3c] sm:$0xf]
        %v578 = vunpack.c.l.b16 %v381
        %v579 = vunpack.c.l.b16 %v382
        %v580 = vunpack.c.l.b16 %v383
        %v581 = vunpack.c.l.b16 %v384
        %v582 = vunpack.c.l.b16 %v385
        %v583 = vunpack.c.l.b16 %v386
        %v584 = vunpack.c.l.b16 %v387
        %v585 = vunpack.c.l.b16 %v388
        %v586 = vpack.c.b16 %v579, %v578
        %v587 = vpack.c.b16 %v581, %v580
        %v588 = vpack.c.b16 %v583, %v582
        %v589 = vpack.c.b16 %v585, %v584
        %v610 = vunpack.c.l.b16 %v554
        %v611 = vunpack.c.l.b16 %v555
        %v612 = vunpack.c.l.b16 %v556
        %v613 = vunpack.c.l.b16 %v557
        %v614 = vunpack.c.l.b16 %v558
        %v615 = vunpack.c.l.b16 %v559
        %v616 = vunpack.c.l.b16 %v560
        %v617 = vunpack.c.l.b16 %v561
        %v618 = vunpack.c.l.b16 %v562
        %v619 = vunpack.c.l.b16 %v563
        %v620 = vunpack.c.l.b16 %v564
        %v621 = vunpack.c.l.b16 %v565
        %v622 = vunpack.c.l.b16 %v566
        %v623 = vunpack.c.l.b16 %v567
        %v624 = vunpack.c.l.b16 %v568
        %v625 = vunpack.c.l.b16 %v569
        %v626 = vpack.c.b16 %v611, %v610
        %v627 = vpack.c.b16 %v613, %v612
        %v628 = vpack.c.b16 %v615, %v614
        %v629 = vpack.c.b16 %v617, %v616
        %v630 = vpack.c.b16 %v619, %v618
        %v631 = vpack.c.b16 %v621, %v620
        %v632 = vpack.c.b16 %v623, %v622
        %v633 = vpack.c.b16 %v625, %v624
        %642 = vmatprep.subr.bf16.mxu0 0
        %643 = vmatpush1.bf16.msra.mxu0 %v633
        %644 = vmatprep.subr.bf16.mxu0 0
        %645 = vmatpush1.bf16.msra.mxu0 %v632
        %646 = vmatprep.subr.bf16.mxu0 0
        %647 = vmatpush1.bf16.msra.mxu0 %v631
        %648 = vmatprep.subr.bf16.mxu0 0
        %649 = vmatpush1.bf16.msra.mxu0 %v630
        %650 = vmatprep.subr.bf16.mxu0 0
        %651 = vmatpush1.bf16.msra.mxu0 %v629
        %652 = vmatprep.subr.bf16.mxu0 0
        %653 = vmatpush1.bf16.msra.mxu0 %v628
        %654 = vmatprep.subr.bf16.mxu0 0
        %655 = vmatpush1.bf16.msra.mxu0 %v627
        %656 = vmatprep.subr.bf16.mxu0 0
        %657 = vmatpush1.bf16.msra.mxu0 %v626
        %658 = vmatprep.subr.bf16.mxu0 0
        %659 = vmatpush2.bf16.msra.mxu0 0
        %660 = vmatprep.subr.bf16.mxu0 0
        %661 = vmatpush2.bf16.msra.mxu0 0
        %662 = vmatprep.subr.bf16.mxu0 0
        %663 = vmatpush2.bf16.msra.mxu0 0
        %664 = vmatprep.subr.bf16.mxu0 0
        %665 = vmatpush2.bf16.msra.mxu0 0
        %666 = vmatprep.subr.bf16.mxu0 0
        %667 = vmatpush2.bf16.msra.mxu0 0
        %668 = vmatprep.subr.bf16.mxu0 0
        %669 = vmatpush2.bf16.msra.mxu0 0
        %670 = vmatprep.subr.bf16.mxu0 0
        %671 = vmatpush2.bf16.msra.mxu0 0
        %672 = vmatprep.subr.bf16.mxu0 0
        %673 = vmatpush2.bf16.msra.mxu0 0
        %674 = vmatprep.mubr.bf16.mxu0 0
        %675 = vmatmul.mubr.bf16.gmra.mxu0 %v586
        %v676 = vpop.f32.mrf.mxu0
        %v677 = vadd.f32 0.0, %v676
        %v678 = vpop.f32.mrf.mxu0
        %v679 = vpop.f32.mrf.mxu0
        %v680 = vadd.f32 0.0, %v679
        %v681 = vpop.f32.mrf.mxu0
        %682 = vmatprep.mubr.bf16.mxu0 0
        %683 = vmatmul.mubr.bf16.gmra.mxu0 %v587
        %v684 = vpop.f32.mrf.mxu0
        %v685 = vadd.f32 0.0, %v684
        %v686 = vpop.f32.mrf.mxu0
        %v687 = vpop.f32.mrf.mxu0
        %v688 = vadd.f32 0.0, %v687
        %v689 = vpop.f32.mrf.mxu0
        %690 = vmatprep.mubr.bf16.mxu0 0
        %691 = vmatmul.mubr.bf16.gmra.mxu0 %v588
        %v692 = vpop.f32.mrf.mxu0
        %v693 = vadd.f32 0.0, %v692
        %v694 = vpop.f32.mrf.mxu0
        %v695 = vpop.f32.mrf.mxu0
        %v696 = vadd.f32 0.0, %v695
        %v697 = vpop.f32.mrf.mxu0
        %698 = vmatprep.mubr.bf16.mxu0 0
        %699 = vmatmul.mubr.bf16.gmra.mxu0 %v589
        %v700 = vpop.f32.mrf.mxu0
        %v701 = vadd.f32 0.0, %v700
        %v702 = vpop.f32.mrf.mxu0
        %v703 = vpop.f32.mrf.mxu0
        %v704 = vadd.f32 0.0, %v703
        %v705 = vpop.f32.mrf.mxu0
        %706 = vdwg.mxu0
        %v723 = vunpack.c.l.b16 %v537
        %v724 = vunpack.c.l.b16 %v538
        %v725 = vunpack.c.l.b16 %v539
        %v726 = vunpack.c.l.b16 %v540
        %v727 = vunpack.c.l.b16 %v541
        %v728 = vunpack.c.l.b16 %v542
        %v729 = vunpack.c.l.b16 %v543
        %v730 = vunpack.c.l.b16 %v544
        %v731 = vunpack.c.l.b16 %v545
        %v732 = vunpack.c.l.b16 %v546
        %v733 = vunpack.c.l.b16 %v547
        %v734 = vunpack.c.l.b16 %v548
        %v735 = vunpack.c.l.b16 %v549
        %v736 = vunpack.c.l.b16 %v550
        %v737 = vunpack.c.l.b16 %v551
        %v738 = vunpack.c.l.b16 %v552
        %v739 = vpack.c.b16 %v724, %v723
        %v740 = vpack.c.b16 %v726, %v725
        %v741 = vpack.c.b16 %v728, %v727
        %v742 = vpack.c.b16 %v730, %v729
        %v743 = vpack.c.b16 %v732, %v731
        %v744 = vpack.c.b16 %v734, %v733
        %v745 = vpack.c.b16 %v736, %v735
        %v746 = vpack.c.b16 %v738, %v737
        %755 = vmatprep.subr.bf16.mxu0 0
        %756 = vmatpush1.bf16.msra.mxu0 %v746
        %757 = vmatprep.subr.bf16.mxu0 0
        %758 = vmatpush1.bf16.msra.mxu0 %v745
        %759 = vmatprep.subr.bf16.mxu0 0
        %760 = vmatpush1.bf16.msra.mxu0 %v744
        %761 = vmatprep.subr.bf16.mxu0 0
        %762 = vmatpush1.bf16.msra.mxu0 %v743
        %763 = vmatprep.subr.bf16.mxu0 0
        %764 = vmatpush1.bf16.msra.mxu0 %v742
        %765 = vmatprep.subr.bf16.mxu0 0
        %766 = vmatpush1.bf16.msra.mxu0 %v741
        %767 = vmatprep.subr.bf16.mxu0 0
        %768 = vmatpush1.bf16.msra.mxu0 %v740
        %769 = vmatprep.subr.bf16.mxu0 0
        %770 = vmatpush1.bf16.msra.mxu0 %v739
        %771 = vmatprep.subr.bf16.mxu0 0
        %772 = vmatpush2.bf16.msra.mxu0 0
        %773 = vmatprep.subr.bf16.mxu0 0
        %774 = vmatpush2.bf16.msra.mxu0 0
        %775 = vmatprep.subr.bf16.mxu0 0
        %776 = vmatpush2.bf16.msra.mxu0 0
        %777 = vmatprep.subr.bf16.mxu0 0
        %778 = vmatpush2.bf16.msra.mxu0 0
        %779 = vmatprep.subr.bf16.mxu0 0
        %780 = vmatpush2.bf16.msra.mxu0 0
        %781 = vmatprep.subr.bf16.mxu0 0
        %782 = vmatpush2.bf16.msra.mxu0 0
        %783 = vmatprep.subr.bf16.mxu0 0
        %784 = vmatpush2.bf16.msra.mxu0 0
        %785 = vmatprep.subr.bf16.mxu0 0
        %786 = vmatpush2.bf16.msra.mxu0 0
        %787 = vmatprep.mubr.bf16.mxu0 0
        %788 = vmatmul.mubr.bf16.gmra.mxu0 %v464
        %v789 = vpop.f32.mrf.mxu0
        %v790 = vadd.f32 %v677, %v789
        %v791 = vpop.f32.mrf.mxu0
        %v792 = vpop.f32.mrf.mxu0
        %v793 = vadd.f32 %v680, %v792
        %v794 = vpop.f32.mrf.mxu0
        %795 = vmatprep.mubr.bf16.mxu0 0
        %796 = vmatmul.mubr.bf16.gmra.mxu0 %v465
        %v797 = vpop.f32.mrf.mxu0
        %v798 = vadd.f32 %v685, %v797
        %v799 = vpop.f32.mrf.mxu0
        %v800 = vpop.f32.mrf.mxu0
        %v801 = vadd.f32 %v688, %v800
        %v802 = vpop.f32.mrf.mxu0
        %803 = vmatprep.mubr.bf16.mxu0 0
        %804 = vmatmul.mubr.bf16.gmra.mxu0 %v466
        %v805 = vpop.f32.mrf.mxu0
        %v806 = vadd.f32 %v693, %v805
        %v807 = vpop.f32.mrf.mxu0
        %v808 = vpop.f32.mrf.mxu0
        %v809 = vadd.f32 %v696, %v808
        %v810 = vpop.f32.mrf.mxu0
        %811 = vmatprep.mubr.bf16.mxu0 0
        %812 = vmatmul.mubr.bf16.gmra.mxu0 %v467
        %v813 = vpop.f32.mrf.mxu0
        %v814 = vadd.f32 %v701, %v813
        %v815 = vpop.f32.mrf.mxu0
        %v816 = vpop.f32.mrf.mxu0
        %v817 = vadd.f32 %v704, %v816
        %v818 = vpop.f32.mrf.mxu0
        %819 = vdwg.mxu0
        %s820 = scalar_lea.vmem [#allocation2], 128
        %v821 = vld [vmem:[%s820] sm:$0xf]
        %v822 = vld [vmem:[%s820 + $0x4] sm:$0xf]
        %v823 = vld [vmem:[%s820 + $0x8] sm:$0xf]
        %v824 = vld [vmem:[%s820 + $0xc] sm:$0xf]
        %v825 = vld [vmem:[%s820 + $0x10] sm:$0xf]
        %v826 = vld [vmem:[%s820 + $0x14] sm:$0xf]
        %v827 = vld [vmem:[%s820 + $0x18] sm:$0xf]
        %v828 = vld [vmem:[%s820 + $0x1c] sm:$0xf]
        %v829 = vld [vmem:[%s820 + $0x20] sm:$0xf]
        %v830 = vld [vmem:[%s820 + $0x24] sm:$0xf]
        %v831 = vld [vmem:[%s820 + $0x28] sm:$0xf]
        %v832 = vld [vmem:[%s820 + $0x2c] sm:$0xf]
        %v833 = vld [vmem:[%s820 + $0x30] sm:$0xf]
        %v834 = vld [vmem:[%s820 + $0x34] sm:$0xf]
        %v835 = vld [vmem:[%s820 + $0x38] sm:$0xf]
        %v836 = vld [vmem:[%s820 + $0x3c] sm:$0xf]
        %v853 = vunpack.c.l.b16 %v821
        %v854 = vunpack.c.l.b16 %v822
        %v855 = vunpack.c.l.b16 %v823
        %v856 = vunpack.c.l.b16 %v824
        %v857 = vunpack.c.l.b16 %v825
        %v858 = vunpack.c.l.b16 %v826
        %v859 = vunpack.c.l.b16 %v827
        %v860 = vunpack.c.l.b16 %v828
        %v861 = vunpack.c.l.b16 %v829
        %v862 = vunpack.c.l.b16 %v830
        %v863 = vunpack.c.l.b16 %v831
        %v864 = vunpack.c.l.b16 %v832
        %v865 = vunpack.c.l.b16 %v833
        %v866 = vunpack.c.l.b16 %v834
        %v867 = vunpack.c.l.b16 %v835
        %v868 = vunpack.c.l.b16 %v836
        %v869 = vpack.c.b16 %v854, %v853
        %v870 = vpack.c.b16 %v856, %v855
        %v871 = vpack.c.b16 %v858, %v857
        %v872 = vpack.c.b16 %v860, %v859
        %v873 = vpack.c.b16 %v862, %v861
        %v874 = vpack.c.b16 %v864, %v863
        %v875 = vpack.c.b16 %v866, %v865
        %v876 = vpack.c.b16 %v868, %v867
        %885 = vmatprep.subr.bf16.mxu0 0
        %886 = vmatpush1.bf16.msra.mxu0 %v876
        %887 = vmatprep.subr.bf16.mxu0 0
        %888 = vmatpush1.bf16.msra.mxu0 %v875
        %889 = vmatprep.subr.bf16.mxu0 0
        %890 = vmatpush1.bf16.msra.mxu0 %v874
        %891 = vmatprep.subr.bf16.mxu0 0
        %892 = vmatpush1.bf16.msra.mxu0 %v873
        %893 = vmatprep.subr.bf16.mxu0 0
        %894 = vmatpush1.bf16.msra.mxu0 %v872
        %895 = vmatprep.subr.bf16.mxu0 0
        %896 = vmatpush1.bf16.msra.mxu0 %v871
        %897 = vmatprep.subr.bf16.mxu0 0
        %898 = vmatpush1.bf16.msra.mxu0 %v870
        %899 = vmatprep.subr.bf16.mxu0 0
        %900 = vmatpush1.bf16.msra.mxu0 %v869
        %901 = vmatprep.subr.bf16.mxu0 0
        %902 = vmatpush2.bf16.msra.mxu0 0
        %903 = vmatprep.subr.bf16.mxu0 0
        %904 = vmatpush2.bf16.msra.mxu0 0
        %905 = vmatprep.subr.bf16.mxu0 0
        %906 = vmatpush2.bf16.msra.mxu0 0
        %907 = vmatprep.subr.bf16.mxu0 0
        %908 = vmatpush2.bf16.msra.mxu0 0
        %909 = vmatprep.subr.bf16.mxu0 0
        %910 = vmatpush2.bf16.msra.mxu0 0
        %911 = vmatprep.subr.bf16.mxu0 0
        %912 = vmatpush2.bf16.msra.mxu0 0
        %913 = vmatprep.subr.bf16.mxu0 0
        %914 = vmatpush2.bf16.msra.mxu0 0
        %915 = vmatprep.subr.bf16.mxu0 0
        %916 = vmatpush2.bf16.msra.mxu0 0
        %917 = vmatprep.mubr.bf16.mxu0 0
        %918 = vmatmul.mubr.bf16.gmra.mxu0 %v533
        %v919 = vpop.f32.mrf.mxu0
        %v920 = vadd.f32 0.0, %v919
        %v921 = vpop.f32.mrf.mxu0
        %v922 = vpop.f32.mrf.mxu0
        %v923 = vadd.f32 0.0, %v922
        %v924 = vpop.f32.mrf.mxu0
        %925 = vmatprep.mubr.bf16.mxu0 0
        %926 = vmatmul.mubr.bf16.gmra.mxu0 %v534
        %v927 = vpop.f32.mrf.mxu0
        %v928 = vadd.f32 0.0, %v927
        %v929 = vpop.f32.mrf.mxu0
        %v930 = vpop.f32.mrf.mxu0
        %v931 = vadd.f32 0.0, %v930
        %v932 = vpop.f32.mrf.mxu0
        %933 = vmatprep.mubr.bf16.mxu0 0
        %934 = vmatmul.mubr.bf16.gmra.mxu0 %v535
        %v935 = vpop.f32.mrf.mxu0
        %v936 = vadd.f32 0.0, %v935
        %v937 = vpop.f32.mrf.mxu0
        %v938 = vpop.f32.mrf.mxu0
        %v939 = vadd.f32 0.0, %v938
        %v940 = vpop.f32.mrf.mxu0
        %941 = vmatprep.mubr.bf16.mxu0 0
        %942 = vmatmul.mubr.bf16.gmra.mxu0 %v536
        %v943 = vpop.f32.mrf.mxu0
        %v944 = vadd.f32 0.0, %v943
        %v945 = vpop.f32.mrf.mxu0
        %v946 = vpop.f32.mrf.mxu0
        %v947 = vadd.f32 0.0, %v946
        %v948 = vpop.f32.mrf.mxu0
        %949 = vdwg.mxu0
        %v950 = vadd.f32 %v790, %v920
        %v951 = vadd.f32 %v793, %v923
        %v952 = vadd.f32 %v798, %v928
        %v953 = vadd.f32 %v801, %v931
        %v954 = vadd.f32 %v806, %v936
        %v955 = vadd.f32 %v809, %v939
        %v956 = vadd.f32 %v814, %v944
        %v957 = vadd.f32 %v817, %v947
        %v958 = vld [vmem:[%s4] sm:$0x1]
        %v960 = vlaneseq
        %v961 = vshrl.u32 %v960, 7
        %v962 = vsub.s32 0, %v961
        %v963 = vrot.slane %v958, %v962
        %v965 = vadd.f32 %v950, %v963
        %v966 = vadd.f32 %v951, %v963
        %v967 = vadd.f32 %v952, %v963
        %v968 = vadd.f32 %v953, %v963
        %v969 = vadd.f32 %v954, %v963
        %v970 = vadd.f32 %v955, %v963
        %v971 = vadd.f32 %v956, %v963
        %v972 = vadd.f32 %v957, %v963
        %v973 = vmax.f32 %v965, 0.0
        %v974 = vmax.f32 %v966, 0.0
        %v975 = vmax.f32 %v967, 0.0
        %v976 = vmax.f32 %v968, 0.0
        %v977 = vmax.f32 %v969, 0.0
        %v978 = vmax.f32 %v970, 0.0
        %v979 = vmax.f32 %v971, 0.0
        %v980 = vmax.f32 %v972, 0.0
        %v981 = vrot.slane %v973, 7
        %v982 = vrot.slane %v974, 7
        %v983 = vrot.slane %v975, 7
        %v984 = vrot.slane %v976, 7
        %v985 = vrot.slane %v977, 7
        %v986 = vrot.slane %v978, 7
        %v987 = vrot.slane %v979, 7
        %v988 = vrot.slane %v980, 7
        %v989 = vsel %vm407, %v987, %v988
        %v990 = vsel %vm407, %v986, %v987
        %v991 = vsel %vm407, %v985, %v986
        %v992 = vsel %vm407, %v984, %v985
        %v993 = vsel %vm407, %v983, %v984
        %v994 = vsel %vm407, %v982, %v983
        %v995 = vsel %vm407, %v981, %v982
        %v996 = vsel %vm407, %v988, %v981
        %v997 = vmul.f32 %v996, %v419
        %v998 = vmul.f32 %v995, %v424
        %v999 = vmul.f32 %v994, %v429
        %v1000 = vmul.f32 %v993, %v434
        %v1001 = vmul.f32 %v992, %v439
        %v1002 = vmul.f32 %v991, %v444
        %v1003 = vmul.f32 %v990, %v449
        %v1004 = vmul.f32 %v989, %v454
        %v1005 = vpack.c.bf16 %v998, %v997
        %v1006 = vpack.c.bf16 %v1000, %v999
        %v1007 = vpack.c.bf16 %v1002, %v1001
        %v1008 = vpack.c.bf16 %v1004, %v1003
        %v1009 = vrot.slane %v973, 1
        %v1010 = vrot.slane %v974, 1
        %v1011 = vrot.slane %v975, 1
        %v1012 = vrot.slane %v976, 1
        %v1013 = vrot.slane %v977, 1
        %v1014 = vrot.slane %v978, 1
        %v1015 = vrot.slane %v979, 1
        %v1016 = vrot.slane %v980, 1
        %v1017 = vsel %vm476, %v1015, %v1016
        %v1018 = vsel %vm476, %v1014, %v1015
        %v1019 = vsel %vm476, %v1013, %v1014
        %v1020 = vsel %vm476, %v1012, %v1013
        %v1021 = vsel %vm476, %v1011, %v1012
        %v1022 = vsel %vm476, %v1010, %v1011
        %v1023 = vsel %vm476, %v1009, %v1010
        %v1024 = vsel %vm476, %v1016, %v1009
        %v1025 = vmul.f32 %v1023, %v488
        %v1026 = vmul.f32 %v1022, %v493
        %v1027 = vmul.f32 %v1021, %v498
        %v1028 = vmul.f32 %v1020, %v503
        %v1029 = vmul.f32 %v1019, %v508
        %v1030 = vmul.f32 %v1018, %v513
        %v1031 = vmul.f32 %v1017, %v518
        %v1032 = vmul.f32 %v1024, %v523
        %v1033 = vpack.c.bf16 %v1026, %v1025
        %v1034 = vpack.c.bf16 %v1028, %v1027
        %v1035 = vpack.c.bf16 %v1030, %v1029
        %v1036 = vpack.c.bf16 %v1032, %v1031
        %v1037 = vpack.c.bf16 %v974, %v973
        %v1038 = vpack.c.bf16 %v976, %v975
        %v1039 = vpack.c.bf16 %v978, %v977
        %v1040 = vpack.c.bf16 %v980, %v979
        %v1041 = vld [vmem:[#allocation5] sm:$0xf]
        %v1042 = vld [vmem:[#allocation5 + $0x4] sm:$0xf]
        %v1043 = vld [vmem:[#allocation5 + $0x8] sm:$0xf]
        %v1044 = vld [vmem:[#allocation5 + $0xc] sm:$0xf]
        %v1045 = vld [vmem:[#allocation5 + $0x10] sm:$0xf]
        %v1046 = vld [vmem:[#allocation5 + $0x14] sm:$0xf]
        %v1047 = vld [vmem:[#allocation5 + $0x18] sm:$0xf]
        %v1048 = vld [vmem:[#allocation5 + $0x1c] sm:$0xf]
        %v1049 = vld [vmem:[#allocation5 + $0x20] sm:$0xf]
        %v1050 = vld [vmem:[#allocation5 + $0x24] sm:$0xf]
        %v1051 = vld [vmem:[#allocation5 + $0x28] sm:$0xf]
        %v1052 = vld [vmem:[#allocation5 + $0x2c] sm:$0xf]
        %v1053 = vld [vmem:[#allocation5 + $0x30] sm:$0xf]
        %v1054 = vld [vmem:[#allocation5 + $0x34] sm:$0xf]
        %v1055 = vld [vmem:[#allocation5 + $0x38] sm:$0xf]
        %v1056 = vld [vmem:[#allocation5 + $0x3c] sm:$0xf]
        %s1057 = scalar_lea.vmem [#allocation5], 64
        %v1058 = vld [vmem:[%s1057] sm:$0xf]
        %v1059 = vld [vmem:[%s1057 + $0x4] sm:$0xf]
        %v1060 = vld [vmem:[%s1057 + $0x8] sm:$0xf]
        %v1061 = vld [vmem:[%s1057 + $0xc] sm:$0xf]
        %v1062 = vld [vmem:[%s1057 + $0x10] sm:$0xf]
        %v1063 = vld [vmem:[%s1057 + $0x14] sm:$0xf]
        %v1064 = vld [vmem:[%s1057 + $0x18] sm:$0xf]
        %v1065 = vld [vmem:[%s1057 + $0x1c] sm:$0xf]
        %v1066 = vld [vmem:[%s1057 + $0x20] sm:$0xf]
        %v1067 = vld [vmem:[%s1057 + $0x24] sm:$0xf]
        %v1068 = vld [vmem:[%s1057 + $0x28] sm:$0xf]
        %v1069 = vld [vmem:[%s1057 + $0x2c] sm:$0xf]
        %v1070 = vld [vmem:[%s1057 + $0x30] sm:$0xf]
        %v1071 = vld [vmem:[%s1057 + $0x34] sm:$0xf]
        %v1072 = vld [vmem:[%s1057 + $0x38] sm:$0xf]
        %v1073 = vld [vmem:[%s1057 + $0x3c] sm:$0xf]
        %v1090 = vunpack.c.l.b16 %v1058
        %v1091 = vunpack.c.l.b16 %v1059
        %v1092 = vunpack.c.l.b16 %v1060
        %v1093 = vunpack.c.l.b16 %v1061
        %v1094 = vunpack.c.l.b16 %v1062
        %v1095 = vunpack.c.l.b16 %v1063
        %v1096 = vunpack.c.l.b16 %v1064
        %v1097 = vunpack.c.l.b16 %v1065
        %v1098 = vunpack.c.l.b16 %v1066
        %v1099 = vunpack.c.l.b16 %v1067
        %v1100 = vunpack.c.l.b16 %v1068
        %v1101 = vunpack.c.l.b16 %v1069
        %v1102 = vunpack.c.l.b16 %v1070
        %v1103 = vunpack.c.l.b16 %v1071
        %v1104 = vunpack.c.l.b16 %v1072
        %v1105 = vunpack.c.l.b16 %v1073
        %v1106 = vpack.c.b16 %v1091, %v1090
        %v1107 = vpack.c.b16 %v1093, %v1092
        %v1108 = vpack.c.b16 %v1095, %v1094
        %v1109 = vpack.c.b16 %v1097, %v1096
        %v1110 = vpack.c.b16 %v1099, %v1098
        %v1111 = vpack.c.b16 %v1101, %v1100
        %v1112 = vpack.c.b16 %v1103, %v1102
        %v1113 = vpack.c.b16 %v1105, %v1104
        %1122 = vmatprep.subr.bf16.mxu0 0
        %1123 = vmatpush1.bf16.msra.mxu0 %v1113
        %1124 = vmatprep.subr.bf16.mxu0 0
        %1125 = vmatpush1.bf16.msra.mxu0 %v1112
        %1126 = vmatprep.subr.bf16.mxu0 0
        %1127 = vmatpush1.bf16.msra.mxu0 %v1111
        %1128 = vmatprep.subr.bf16.mxu0 0
        %1129 = vmatpush1.bf16.msra.mxu0 %v1110
        %1130 = vmatprep.subr.bf16.mxu0 0
        %1131 = vmatpush1.bf16.msra.mxu0 %v1109
        %1132 = vmatprep.subr.bf16.mxu0 0
        %1133 = vmatpush1.bf16.msra.mxu0 %v1108
        %1134 = vmatprep.subr.bf16.mxu0 0
        %1135 = vmatpush1.bf16.msra.mxu0 %v1107
        %1136 = vmatprep.subr.bf16.mxu0 0
        %1137 = vmatpush1.bf16.msra.mxu0 %v1106
        %1138 = vmatprep.subr.bf16.mxu0 0
        %1139 = vmatpush2.bf16.msra.mxu0 0
        %1140 = vmatprep.subr.bf16.mxu0 0
        %1141 = vmatpush2.bf16.msra.mxu0 0
        %1142 = vmatprep.subr.bf16.mxu0 0
        %1143 = vmatpush2.bf16.msra.mxu0 0
        %1144 = vmatprep.subr.bf16.mxu0 0
        %1145 = vmatpush2.bf16.msra.mxu0 0
        %1146 = vmatprep.subr.bf16.mxu0 0
        %1147 = vmatpush2.bf16.msra.mxu0 0
        %1148 = vmatprep.subr.bf16.mxu0 0
        %1149 = vmatpush2.bf16.msra.mxu0 0
        %1150 = vmatprep.subr.bf16.mxu0 0
        %1151 = vmatpush2.bf16.msra.mxu0 0
        %1152 = vmatprep.subr.bf16.mxu0 0
        %1153 = vmatpush2.bf16.msra.mxu0 0
        %1154 = vmatprep.mubr.bf16.mxu0 0
        %1155 = vmatmul.mubr.bf16.gmra.mxu0 %v1037
        %v1156 = vpop.f32.mrf.mxu0
        %v1157 = vadd.f32 0.0, %v1156
        %v1158 = vpop.f32.mrf.mxu0
        %v1159 = vpop.f32.mrf.mxu0
        %v1160 = vadd.f32 0.0, %v1159
        %v1161 = vpop.f32.mrf.mxu0
        %1162 = vmatprep.mubr.bf16.mxu0 0
        %1163 = vmatmul.mubr.bf16.gmra.mxu0 %v1038
        %v1164 = vpop.f32.mrf.mxu0
        %v1165 = vadd.f32 0.0, %v1164
        %v1166 = vpop.f32.mrf.mxu0
        %v1167 = vpop.f32.mrf.mxu0
        %v1168 = vadd.f32 0.0, %v1167
        %v1169 = vpop.f32.mrf.mxu0
        %1170 = vmatprep.mubr.bf16.mxu0 0
        %1171 = vmatmul.mubr.bf16.gmra.mxu0 %v1039
        %v1172 = vpop.f32.mrf.mxu0
        %v1173 = vadd.f32 0.0, %v1172
        %v1174 = vpop.f32.mrf.mxu0
        %v1175 = vpop.f32.mrf.mxu0
        %v1176 = vadd.f32 0.0, %v1175
        %v1177 = vpop.f32.mrf.mxu0
        %1178 = vmatprep.mubr.bf16.mxu0 0
        %1179 = vmatmul.mubr.bf16.gmra.mxu0 %v1040
        %v1180 = vpop.f32.mrf.mxu0
        %v1181 = vadd.f32 0.0, %v1180
        %v1182 = vpop.f32.mrf.mxu0
        %v1183 = vpop.f32.mrf.mxu0
        %v1184 = vadd.f32 0.0, %v1183
        %v1185 = vpop.f32.mrf.mxu0
        %1186 = vdwg.mxu0
        %v1203 = vunpack.c.l.b16 %v1041
        %v1204 = vunpack.c.l.b16 %v1042
        %v1205 = vunpack.c.l.b16 %v1043
        %v1206 = vunpack.c.l.b16 %v1044
        %v1207 = vunpack.c.l.b16 %v1045
        %v1208 = vunpack.c.l.b16 %v1046
        %v1209 = vunpack.c.l.b16 %v1047
        %v1210 = vunpack.c.l.b16 %v1048
        %v1211 = vunpack.c.l.b16 %v1049
        %v1212 = vunpack.c.l.b16 %v1050
        %v1213 = vunpack.c.l.b16 %v1051
        %v1214 = vunpack.c.l.b16 %v1052
        %v1215 = vunpack.c.l.b16 %v1053
        %v1216 = vunpack.c.l.b16 %v1054
        %v1217 = vunpack.c.l.b16 %v1055
        %v1218 = vunpack.c.l.b16 %v1056
        %v1219 = vpack.c.b16 %v1204, %v1203
        %v1220 = vpack.c.b16 %v1206, %v1205
        %v1221 = vpack.c.b16 %v1208, %v1207
        %v1222 = vpack.c.b16 %v1210, %v1209
        %v1223 = vpack.c.b16 %v1212, %v1211
        %v1224 = vpack.c.b16 %v1214, %v1213
        %v1225 = vpack.c.b16 %v1216, %v1215
        %v1226 = vpack.c.b16 %v1218, %v1217
        %1235 = vmatprep.subr.bf16.mxu0 0
        %1236 = vmatpush1.bf16.msra.mxu0 %v1226
        %1237 = vmatprep.subr.bf16.mxu0 0
        %1238 = vmatpush1.bf16.msra.mxu0 %v1225
        %1239 = vmatprep.subr.bf16.mxu0 0
        %1240 = vmatpush1.bf16.msra.mxu0 %v1224
        %1241 = vmatprep.subr.bf16.mxu0 0
        %1242 = vmatpush1.bf16.msra.mxu0 %v1223
        %1243 = vmatprep.subr.bf16.mxu0 0
        %1244 = vmatpush1.bf16.msra.mxu0 %v1222
        %1245 = vmatprep.subr.bf16.mxu0 0
        %1246 = vmatpush1.bf16.msra.mxu0 %v1221
        %1247 = vmatprep.subr.bf16.mxu0 0
        %1248 = vmatpush1.bf16.msra.mxu0 %v1220
        %1249 = vmatprep.subr.bf16.mxu0 0
        %1250 = vmatpush1.bf16.msra.mxu0 %v1219
        %1251 = vmatprep.subr.bf16.mxu0 0
        %1252 = vmatpush2.bf16.msra.mxu0 0
        %1253 = vmatprep.subr.bf16.mxu0 0
        %1254 = vmatpush2.bf16.msra.mxu0 0
        %1255 = vmatprep.subr.bf16.mxu0 0
        %1256 = vmatpush2.bf16.msra.mxu0 0
        %1257 = vmatprep.subr.bf16.mxu0 0
        %1258 = vmatpush2.bf16.msra.mxu0 0
        %1259 = vmatprep.subr.bf16.mxu0 0
        %1260 = vmatpush2.bf16.msra.mxu0 0
        %1261 = vmatprep.subr.bf16.mxu0 0
        %1262 = vmatpush2.bf16.msra.mxu0 0
        %1263 = vmatprep.subr.bf16.mxu0 0
        %1264 = vmatpush2.bf16.msra.mxu0 0
        %1265 = vmatprep.subr.bf16.mxu0 0
        %1266 = vmatpush2.bf16.msra.mxu0 0
        %1267 = vmatprep.mubr.bf16.mxu0 0
        %1268 = vmatmul.mubr.bf16.gmra.mxu0 %v1005
        %v1269 = vpop.f32.mrf.mxu0
        %v1270 = vadd.f32 %v1157, %v1269
        %v1271 = vpop.f32.mrf.mxu0
        %v1272 = vpop.f32.mrf.mxu0
        %v1273 = vadd.f32 %v1160, %v1272
        %v1274 = vpop.f32.mrf.mxu0
        %1275 = vmatprep.mubr.bf16.mxu0 0
        %1276 = vmatmul.mubr.bf16.gmra.mxu0 %v1006
        %v1277 = vpop.f32.mrf.mxu0
        %v1278 = vadd.f32 %v1165, %v1277
        %v1279 = vpop.f32.mrf.mxu0
        %v1280 = vpop.f32.mrf.mxu0
        %v1281 = vadd.f32 %v1168, %v1280
        %v1282 = vpop.f32.mrf.mxu0
        %1283 = vmatprep.mubr.bf16.mxu0 0
        %1284 = vmatmul.mubr.bf16.gmra.mxu0 %v1007
        %v1285 = vpop.f32.mrf.mxu0
        %v1286 = vadd.f32 %v1173, %v1285
        %v1287 = vpop.f32.mrf.mxu0
        %v1288 = vpop.f32.mrf.mxu0
        %v1289 = vadd.f32 %v1176, %v1288
        %v1290 = vpop.f32.mrf.mxu0
        %1291 = vmatprep.mubr.bf16.mxu0 0
        %1292 = vmatmul.mubr.bf16.gmra.mxu0 %v1008
        %v1293 = vpop.f32.mrf.mxu0
        %v1294 = vadd.f32 %v1181, %v1293
        %v1295 = vpop.f32.mrf.mxu0
        %v1296 = vpop.f32.mrf.mxu0
        %v1297 = vadd.f32 %v1184, %v1296
        %v1298 = vpop.f32.mrf.mxu0
        %1299 = vdwg.mxu0
        %s1300 = scalar_lea.vmem [#allocation5], 128
        %v1301 = vld [vmem:[%s1300] sm:$0xf]
        %v1302 = vld [vmem:[%s1300 + $0x4] sm:$0xf]
        %v1303 = vld [vmem:[%s1300 + $0x8] sm:$0xf]
        %v1304 = vld [vmem:[%s1300 + $0xc] sm:$0xf]
        %v1305 = vld [vmem:[%s1300 + $0x10] sm:$0xf]
        %v1306 = vld [vmem:[%s1300 + $0x14] sm:$0xf]
        %v1307 = vld [vmem:[%s1300 + $0x18] sm:$0xf]
        %v1308 = vld [vmem:[%s1300 + $0x1c] sm:$0xf]
        %v1309 = vld [vmem:[%s1300 + $0x20] sm:$0xf]
        %v1310 = vld [vmem:[%s1300 + $0x24] sm:$0xf]
        %v1311 = vld [vmem:[%s1300 + $0x28] sm:$0xf]
        %v1312 = vld [vmem:[%s1300 + $0x2c] sm:$0xf]
        %v1313 = vld [vmem:[%s1300 + $0x30] sm:$0xf]
        %v1314 = vld [vmem:[%s1300 + $0x34] sm:$0xf]
        %v1315 = vld [vmem:[%s1300 + $0x38] sm:$0xf]
        %v1316 = vld [vmem:[%s1300 + $0x3c] sm:$0xf]
        %v1333 = vunpack.c.l.b16 %v1301
        %v1334 = vunpack.c.l.b16 %v1302
        %v1335 = vunpack.c.l.b16 %v1303
        %v1336 = vunpack.c.l.b16 %v1304
        %v1337 = vunpack.c.l.b16 %v1305
        %v1338 = vunpack.c.l.b16 %v1306
        %v1339 = vunpack.c.l.b16 %v1307
        %v1340 = vunpack.c.l.b16 %v1308
        %v1341 = vunpack.c.l.b16 %v1309
        %v1342 = vunpack.c.l.b16 %v1310
        %v1343 = vunpack.c.l.b16 %v1311
        %v1344 = vunpack.c.l.b16 %v1312
        %v1345 = vunpack.c.l.b16 %v1313
        %v1346 = vunpack.c.l.b16 %v1314
        %v1347 = vunpack.c.l.b16 %v1315
        %v1348 = vunpack.c.l.b16 %v1316
        %v1349 = vpack.c.b16 %v1334, %v1333
        %v1350 = vpack.c.b16 %v1336, %v1335
        %v1351 = vpack.c.b16 %v1338, %v1337
        %v1352 = vpack.c.b16 %v1340, %v1339
        %v1353 = vpack.c.b16 %v1342, %v1341
        %v1354 = vpack.c.b16 %v1344, %v1343
        %v1355 = vpack.c.b16 %v1346, %v1345
        %v1356 = vpack.c.b16 %v1348, %v1347
        %1365 = vmatprep.subr.bf16.mxu0 0
        %1366 = vmatpush1.bf16.msra.mxu0 %v1356
        %1367 = vmatprep.subr.bf16.mxu0 0
        %1368 = vmatpush1.bf16.msra.mxu0 %v1355
        %1369 = vmatprep.subr.bf16.mxu0 0
        %1370 = vmatpush1.bf16.msra.mxu0 %v1354
        %1371 = vmatprep.subr.bf16.mxu0 0
        %1372 = vmatpush1.bf16.msra.mxu0 %v1353
        %1373 = vmatprep.subr.bf16.mxu0 0
        %1374 = vmatpush1.bf16.msra.mxu0 %v1352
        %1375 = vmatprep.subr.bf16.mxu0 0
        %1376 = vmatpush1.bf16.msra.mxu0 %v1351
        %1377 = vmatprep.subr.bf16.mxu0 0
        %1378 = vmatpush1.bf16.msra.mxu0 %v1350
        %1379 = vmatprep.subr.bf16.mxu0 0
        %1380 = vmatpush1.bf16.msra.mxu0 %v1349
        %1381 = vmatprep.subr.bf16.mxu0 0
        %1382 = vmatpush2.bf16.msra.mxu0 0
        %1383 = vmatprep.subr.bf16.mxu0 0
        %1384 = vmatpush2.bf16.msra.mxu0 0
        %1385 = vmatprep.subr.bf16.mxu0 0
        %1386 = vmatpush2.bf16.msra.mxu0 0
        %1387 = vmatprep.subr.bf16.mxu0 0
        %1388 = vmatpush2.bf16.msra.mxu0 0
        %1389 = vmatprep.subr.bf16.mxu0 0
        %1390 = vmatpush2.bf16.msra.mxu0 0
        %1391 = vmatprep.subr.bf16.mxu0 0
        %1392 = vmatpush2.bf16.msra.mxu0 0
        %1393 = vmatprep.subr.bf16.mxu0 0
        %1394 = vmatpush2.bf16.msra.mxu0 0
        %1395 = vmatprep.subr.bf16.mxu0 0
        %1396 = vmatpush2.bf16.msra.mxu0 0
        %1397 = vmatprep.mubr.bf16.mxu0 0
        %1398 = vmatmul.mubr.bf16.gmra.mxu0 %v1033
        %v1399 = vpop.f32.mrf.mxu0
        %v1400 = vadd.f32 0.0, %v1399
        %v1401 = vpop.f32.mrf.mxu0
        %v1402 = vpop.f32.mrf.mxu0
        %v1403 = vadd.f32 0.0, %v1402
        %v1404 = vpop.f32.mrf.mxu0
        %1405 = vmatprep.mubr.bf16.mxu0 0
        %1406 = vmatmul.mubr.bf16.gmra.mxu0 %v1034
        %v1407 = vpop.f32.mrf.mxu0
        %v1408 = vadd.f32 0.0, %v1407
        %v1409 = vpop.f32.mrf.mxu0
        %v1410 = vpop.f32.mrf.mxu0
        %v1411 = vadd.f32 0.0, %v1410
        %v1412 = vpop.f32.mrf.mxu0
        %1413 = vmatprep.mubr.bf16.mxu0 0
        %1414 = vmatmul.mubr.bf16.gmra.mxu0 %v1035
        %v1415 = vpop.f32.mrf.mxu0
        %v1416 = vadd.f32 0.0, %v1415
        %v1417 = vpop.f32.mrf.mxu0
        %v1418 = vpop.f32.mrf.mxu0
        %v1419 = vadd.f32 0.0, %v1418
        %v1420 = vpop.f32.mrf.mxu0
        %1421 = vmatprep.mubr.bf16.mxu0 0
        %1422 = vmatmul.mubr.bf16.gmra.mxu0 %v1036
        %v1423 = vpop.f32.mrf.mxu0
        %v1424 = vadd.f32 0.0, %v1423
        %v1425 = vpop.f32.mrf.mxu0
        %v1426 = vpop.f32.mrf.mxu0
        %v1427 = vadd.f32 0.0, %v1426
        %v1428 = vpop.f32.mrf.mxu0
        %1429 = vdwg.mxu0
        %v1430 = vadd.f32 %v1270, %v1400
        %v1431 = vadd.f32 %v1273, %v1403
        %v1432 = vadd.f32 %v1278, %v1408
        %v1433 = vadd.f32 %v1281, %v1411
        %v1434 = vadd.f32 %v1286, %v1416
        %v1435 = vadd.f32 %v1289, %v1419
        %v1436 = vadd.f32 %v1294, %v1424
        %v1437 = vadd.f32 %v1297, %v1427
        %v1438 = vld [vmem:[%s6] sm:$0x1]
        %v1440 = vlaneseq
        %v1441 = vshrl.u32 %v1440, 7
        %v1442 = vsub.s32 0, %v1441
        %v1443 = vrot.slane %v1438, %v1442
        %v1445 = vadd.f32 %v1430, %v1443
        %v1446 = vadd.f32 %v1431, %v1443
        %v1447 = vadd.f32 %v1432, %v1443
        %v1448 = vadd.f32 %v1433, %v1443
        %v1449 = vadd.f32 %v1434, %v1443
        %v1450 = vadd.f32 %v1435, %v1443
        %v1451 = vadd.f32 %v1436, %v1443
        %v1452 = vadd.f32 %v1437, %v1443
        %v1453 = vmax.f32 %v1445, 0.0
        %v1454 = vmax.f32 %v1446, 0.0
        %v1455 = vmax.f32 %v1447, 0.0
        %v1456 = vmax.f32 %v1448, 0.0
        %v1457 = vmax.f32 %v1449, 0.0
        %v1458 = vmax.f32 %v1450, 0.0
        %v1459 = vmax.f32 %v1451, 0.0
        %v1460 = vmax.f32 %v1452, 0.0
        %v1461 = vpack.c.bf16 %v1454, %v1453
        %v1462 = vpack.c.bf16 %v1456, %v1455
        %v1463 = vpack.c.bf16 %v1458, %v1457
        %v1464 = vpack.c.bf16 %v1460, %v1459
        %v1465 = vld [vmem:[%s7] sm:$0xf]
        %v1466 = vld [vmem:[%s7 + $0x4] sm:$0xf]
        %v1467 = vld [vmem:[%s7 + $0x8] sm:$0xf]
        %v1468 = vld [vmem:[%s7 + $0xc] sm:$0xf]
        %v1469 = vld [vmem:[%s7 + $0x10] sm:$0xf]
        %v1470 = vld [vmem:[%s7 + $0x14] sm:$0xf]
        %v1471 = vld [vmem:[%s7 + $0x18] sm:$0xf]
        %v1472 = vld [vmem:[%s7 + $0x1c] sm:$0xf]
        %v1473 = vld [vmem:[%s7 + $0x20] sm:$0xf]
        %v1474 = vld [vmem:[%s7 + $0x24] sm:$0xf]
        %v1475 = vld [vmem:[%s7 + $0x28] sm:$0xf]
        %v1476 = vld [vmem:[%s7 + $0x2c] sm:$0xf]
        %v1477 = vld [vmem:[%s7 + $0x30] sm:$0xf]
        %v1478 = vld [vmem:[%s7 + $0x34] sm:$0xf]
        %v1479 = vld [vmem:[%s7 + $0x38] sm:$0xf]
        %v1480 = vld [vmem:[%s7 + $0x3c] sm:$0xf]
        %v1481 = vld [vmem:[%s8] sm:$0x1]
        %v1483 = vlaneseq
        %v1484 = vshrl.u32 %v1483, 7
        %v1485 = vsub.s32 0, %v1484
        %v1486 = vrot.slane %v1481, %v1485
        %v1504 = vunpack.c.l.b16 %v1465
        %v1505 = vunpack.c.l.b16 %v1466
        %v1506 = vunpack.c.l.b16 %v1467
        %v1507 = vunpack.c.l.b16 %v1468
        %v1508 = vunpack.c.l.b16 %v1469
        %v1509 = vunpack.c.l.b16 %v1470
        %v1510 = vunpack.c.l.b16 %v1471
        %v1511 = vunpack.c.l.b16 %v1472
        %v1512 = vunpack.c.l.b16 %v1473
        %v1513 = vunpack.c.l.b16 %v1474
        %v1514 = vunpack.c.l.b16 %v1475
        %v1515 = vunpack.c.l.b16 %v1476
        %v1516 = vunpack.c.l.b16 %v1477
        %v1517 = vunpack.c.l.b16 %v1478
        %v1518 = vunpack.c.l.b16 %v1479
        %v1519 = vunpack.c.l.b16 %v1480
        %v1520 = vpack.c.b16 %v1505, %v1504
        %v1521 = vpack.c.b16 %v1507, %v1506
        %v1522 = vpack.c.b16 %v1509, %v1508
        %v1523 = vpack.c.b16 %v1511, %v1510
        %v1524 = vpack.c.b16 %v1513, %v1512
        %v1525 = vpack.c.b16 %v1515, %v1514
        %v1526 = vpack.c.b16 %v1517, %v1516
        %v1527 = vpack.c.b16 %v1519, %v1518
        %1536 = vmatprep.subr.bf16.mxu0 0
        %1537 = vmatpush1.bf16.msra.mxu0 %v1527
        %1538 = vmatprep.subr.bf16.mxu0 0
        %1539 = vmatpush1.bf16.msra.mxu0 %v1526
        %1540 = vmatprep.subr.bf16.mxu0 0
        %1541 = vmatpush1.bf16.msra.mxu0 %v1525
        %1542 = vmatprep.subr.bf16.mxu0 0
        %1543 = vmatpush1.bf16.msra.mxu0 %v1524
        %1544 = vmatprep.subr.bf16.mxu0 0
        %1545 = vmatpush1.bf16.msra.mxu0 %v1523
        %1546 = vmatprep.subr.bf16.mxu0 0
        %1547 = vmatpush1.bf16.msra.mxu0 %v1522
        %1548 = vmatprep.subr.bf16.mxu0 0
        %1549 = vmatpush1.bf16.msra.mxu0 %v1521
        %1550 = vmatprep.subr.bf16.mxu0 0
        %1551 = vmatpush1.bf16.msra.mxu0 %v1520
        %1552 = vmatprep.subr.bf16.mxu0 0
        %1553 = vmatpush2.bf16.msra.mxu0 0
        %1554 = vmatprep.subr.bf16.mxu0 0
        %1555 = vmatpush2.bf16.msra.mxu0 0
        %1556 = vmatprep.subr.bf16.mxu0 0
        %1557 = vmatpush2.bf16.msra.mxu0 0
        %1558 = vmatprep.subr.bf16.mxu0 0
        %1559 = vmatpush2.bf16.msra.mxu0 0
        %1560 = vmatprep.subr.bf16.mxu0 0
        %1561 = vmatpush2.bf16.msra.mxu0 0
        %1562 = vmatprep.subr.bf16.mxu0 0
        %1563 = vmatpush2.bf16.msra.mxu0 0
        %1564 = vmatprep.subr.bf16.mxu0 0
        %1565 = vmatpush2.bf16.msra.mxu0 0
        %1566 = vmatprep.subr.bf16.mxu0 0
        %1567 = vmatpush2.bf16.msra.mxu0 0
        %1568 = vmatprep.mubr.bf16.mxu0 0
        %1569 = vmatmul.mubr.bf16.gmra.mxu0 %v1461
        %v1570 = vpop.f32.mrf.mxu0
        %v1571 = vadd.f32 %v1486, %v1570
        %v1572 = vpop.f32.mrf.mxu0
        %v1573 = vpop.f32.mrf.mxu0
        %v1574 = vadd.f32 %v1486, %v1573
        %v1575 = vpop.f32.mrf.mxu0
        %1576 = vmatprep.mubr.bf16.mxu0 0
        %1577 = vmatmul.mubr.bf16.gmra.mxu0 %v1462
        %v1578 = vpop.f32.mrf.mxu0
        %v1579 = vadd.f32 %v1486, %v1578
        %v1580 = vpop.f32.mrf.mxu0
        %v1581 = vpop.f32.mrf.mxu0
        %v1582 = vadd.f32 %v1486, %v1581
        %v1583 = vpop.f32.mrf.mxu0
        %1584 = vmatprep.mubr.bf16.mxu0 0
        %1585 = vmatmul.mubr.bf16.gmra.mxu0 %v1463
        %v1586 = vpop.f32.mrf.mxu0
        %v1587 = vadd.f32 %v1486, %v1586
        %v1588 = vpop.f32.mrf.mxu0
        %v1589 = vpop.f32.mrf.mxu0
        %v1590 = vadd.f32 %v1486, %v1589
        %v1591 = vpop.f32.mrf.mxu0
        %1592 = vmatprep.mubr.bf16.mxu0 0
        %1593 = vmatmul.mubr.bf16.gmra.mxu0 %v1464
        %v1594 = vpop.f32.mrf.mxu0
        %v1595 = vadd.f32 %v1486, %v1594
        %v1596 = vpop.f32.mrf.mxu0
        %v1597 = vpop.f32.mrf.mxu0
        %v1598 = vadd.f32 %v1486, %v1597
        %v1599 = vpop.f32.mrf.mxu0
        %1600 = vdwg.mxu0
        %v1601 = vmul.f32 %v1571, 0.01
        %v1602 = vmul.f32 %v1574, 0.01
        %v1603 = vmul.f32 %v1579, 0.01
        %v1604 = vmul.f32 %v1582, 0.01
        %v1605 = vmul.f32 %v1587, 0.01
        %v1606 = vmul.f32 %v1590, 0.01
        %v1607 = vmul.f32 %v1595, 0.01
        %v1608 = vmul.f32 %v1598, 0.01
        %v1609 = vxor.u32 %v1601, 2147483648
        %v1610 = vxor.u32 %v1602, 2147483648
        %v1611 = vxor.u32 %v1603, 2147483648
        %v1612 = vxor.u32 %v1604, 2147483648
        %v1613 = vxor.u32 %v1605, 2147483648
        %v1614 = vxor.u32 %v1606, 2147483648
        %v1615 = vxor.u32 %v1607, 2147483648
        %v1616 = vxor.u32 %v1608, 2147483648
        %v1617 = vmul.f32 %v1609, 1.442695
        %v1618 = vpow.pop %v1617
        %v1619 = vmul.f32 %v1610, 1.442695
        %v1620 = vpow.pop %v1619
        %v1621 = vmul.f32 %v1611, 1.442695
        %v1622 = vpow.pop %v1621
        %v1623 = vmul.f32 %v1612, 1.442695
        %v1624 = vpow.pop %v1623
        %v1625 = vmul.f32 %v1613, 1.442695
        %v1626 = vpow.pop %v1625
        %v1627 = vmul.f32 %v1614, 1.442695
        %v1628 = vpow.pop %v1627
        %v1629 = vmul.f32 %v1615, 1.442695
        %v1630 = vpow.pop %v1629
        %v1631 = vmul.f32 %v1616, 1.442695
        %v1632 = vpow.pop %v1631
        %v1633 = vadd.f32 %v1618, 1.0
        %v1634 = vadd.f32 %v1620, 1.0
        %v1635 = vadd.f32 %v1622, 1.0
        %v1636 = vadd.f32 %v1624, 1.0
        %v1637 = vadd.f32 %v1626, 1.0
        %v1638 = vadd.f32 %v1628, 1.0
        %v1639 = vadd.f32 %v1630, 1.0
        %v1640 = vadd.f32 %v1632, 1.0
        %v1641 = vrcp.pop %v1633
        %v1642 = vmul.f32 1.0, %v1641
        %v1643 = vrcp.pop %v1634
        %v1644 = vmul.f32 1.0, %v1643
        %v1645 = vrcp.pop %v1635
        %v1646 = vmul.f32 1.0, %v1645
        %v1647 = vrcp.pop %v1636
        %v1648 = vmul.f32 1.0, %v1647
        %v1649 = vrcp.pop %v1637
        %v1650 = vmul.f32 1.0, %v1649
        %v1651 = vrcp.pop %v1638
        %v1652 = vmul.f32 1.0, %v1651
        %v1653 = vrcp.pop %v1639
        %v1654 = vmul.f32 1.0, %v1653
        %v1655 = vrcp.pop %v1640
        %v1656 = vmul.f32 1.0, %v1655
        %1657 = vst [vmem:[%s356] sm:$0xff] %v1642
        %1658 = vst [vmem:[%s356 + $0x8] sm:$0xff] %v1644
        %1659 = vst [vmem:[%s356 + $0x10] sm:$0xff] %v1646
        %1660 = vst [vmem:[%s356 + $0x18] sm:$0xff] %v1648
        %1661 = vst [vmem:[%s356 + $0x20] sm:$0xff] %v1650
        %1662 = vst [vmem:[%s356 + $0x28] sm:$0xff] %v1652
        %1663 = vst [vmem:[%s356 + $0x30] sm:$0xff] %v1654
        %1664 = vst [vmem:[%s356 + $0x38] sm:$0xff] %v1656
        %s1665 = sand.u32 %s227, 1
        %s1666 = scalar_lea.sflag [#allocation4], %s1665
        %s1667 = sand.u32 %s227, 1
        %s1668 = smul.addr %s1667, 64
        %s1669 = scalar_lea.vmem [#allocation7], %s1668
        // Predicated region
        $region65: #{tpu_custom_call.1} parent=55 // pred_check
          %p1670 = pneg %p237
        $region66: #{tpu_custom_call.1} parent=55 // pred_check_branch
          %1672 = sbr.rel (%p1670) target = $region68
        $region67: #{tpu_custom_call.1} parent=55 // pred_region
          %s1673 = smul.u32 8, %s25
          %s1675 = ssub.s32 1024, 1024
          %1676 = vsyncadd %s1666, %s1675
          %s1677 = smul.addr %s1673, 128
          %s1678 = scalar_lea.hbm %s9, %s1677
          %s1679 = sshll.u32 %s1669, 4
          %s1680 = int_to_ptr.vmem [resolvable:$true] %s1679
          %1685 = dma.vmem_to_hbm [thread:$0]  %s1680, 1024, %s1678, %s1666, 128, 128, 8
        $region68: #{tpu_custom_call.1} parent=55 // pred_fallthru
          _
      $region56: #{tpu_custom_call.1} parent=5 // pred_fallthru
        _
      %p1686 = scmp.le.s32.totalorder 2, %s20
      // Predicated region
      $region69: #{tpu_custom_call.1} parent=5 // pred_check
        %p1687 = pneg %p1686
      $region70: #{tpu_custom_call.1} parent=5 // pred_check_branch
        %1689 = sbr.rel (%p1687) target = $region72
      $region71: #{tpu_custom_call.1} parent=5 // pred_region
        %s1690 = ssub.s32 %s20, 2
        // Predicated region
        $region73: #{tpu_custom_call.1} parent=71 // pred_check
          %p1691 = pneg %p243
        $region74: #{tpu_custom_call.1} parent=71 // pred_check_branch
          %1693 = sbr.rel (%p1691) target = $region76
        $region75: #{tpu_custom_call.1} parent=71 // pred_region
          %s1694 = sand.u32 %s228, 1
          %s1695 = scalar_lea.sflag [#allocation4], %s1694
          %s1696 = sand.u32 %s228, 1
          %s1697 = smul.addr %s1696, 64
          %s1698 = scalar_lea.vmem [#allocation7], %s1697
          %1699 = dma.done %s1695, 1024
        $region76: #{tpu_custom_call.1} parent=71 // pred_fallthru
          _
      $region72: #{tpu_custom_call.1} parent=5 // pred_fallthru
        _
    $region6: #{tpu_custom_call.1} parent=1 // loop_footer
      %s24 = sadd.s32 1, %s20
    $region7: #{tpu_custom_call.1} parent=1 // loop_footer_branch
      %19 = sbr.rel target = $region3
    $region8: #{tpu_custom_call.1} parent=1 // loop_exit
      _
    %1700 = vsyncpa [#allocation3], 1
    %s1701 = scalar_lea.sflag [#allocation3], 1
    %1702 = vsyncpa %s1701, 1
    %1703 = vsyncpa [#allocation6], 1
    %1704 = vsyncpa [#allocation4], 1
    %s1705 = scalar_lea.sflag [#allocation4], 1
    %1706 = vsyncpa %s1705, 1

// kernel: tpu_custom_call.1
$region0: #{tpu_custom_call.1}
  #allocation0 [shape = 'u32[]', space=smem, size = 0x4, offset = 0x4, fixed_abs, tag = 'smem constant byte address 0x4 - core index']
  #allocation1 [shape = 'u32[144,128]{1,0:T(1,128)}', space=vmem, size = 0x12000, scoped, tag = 'internal scratch']
  %s0 = inlined_call_operand.vmem [shape: bf16[128,128], index: 0, kind: input, shape index: {}]
  %s1 = inlined_call_operand.vmem [shape: f32[64,1], index: 1, kind: input, shape index: {}]
  %s2 = inlined_call_operand.vmem [shape: f32[64,1], index: 2, kind: input, shape index: {}]
  %s3 = inlined_call_operand.hbm [shape: bf16[3,128,128], index: 3, kind: input, shape index: {}]
  %s4 = inlined_call_operand.vmem [shape: f32[1,128], index: 4, kind: input, shape index: {}]
  %s5 = inlined_call_operand.hbm [shape: bf16[3,128,128], index: 5, kind: input, shape index: {}]
  %s6 = inlined_call_operand.vmem [shape: f32[1,128], index: 6, kind: input, shape index: {}]
  %s7 = inlined_call_operand.vmem [shape: bf16[128,128], index: 7, kind: input, shape index: {}]
  %s8 = inlined_call_operand.vmem [shape: f32[1,128], index: 8, kind: input, shape index: {}]
  %s9 = inlined_call_operand.hbm [shape: f32[128,128], index: 9, kind: output, shape index: {}]
  %s10 = sld [smem:[#allocation0]]
  $region77: #{tpu_custom_call.1} parent=0
    _
  %s12 = ssub.s32 1, %s10
  %s13 = scalar_select 0, %s12, %s10
  $region1: #{tpu_custom_call.1} parent=0
    #allocation2 [shape = 'u8[98304]{0}', space=vmem, size = 0x18000, scoped, tag = 'input window, operand 3, single buffered']
    #allocation3 [shape = 's32[2]{0}', space=sflag, size = 0x8, scoped, tag = 'scoped memory for tpu_custom_call.1']
    #allocation4 [shape = 's32[2]{0}', space=sflag, size = 0x8, scoped, tag = 'scoped memory for tpu_custom_call.1']
    #allocation5 [shape = 'u8[98304]{0}', space=vmem, size = 0x18000, scoped, tag = 'input window, operand 5, single buffered']
    #allocation6 [shape = 's32[1]{0}', space=sflag, size = 0x4, scoped, tag = 'scoped memory for tpu_custom_call.1']
    #allocation7 [shape = 'u8[65536]{0}', space=vmem, size = 0x10000, scoped, tag = 'output window, operand 0']
    %14 = vsyncpa [#allocation3], 0
    %15 = vsyncpa [#allocation6], 0
    %16 = vsyncpa [#allocation4], 0
    %s17 = scalar_lea.sflag [#allocation4], 1
    %18 = vsyncpa %s17, 0
    loop: start=0, step=1, limit=4
    $region2: #{tpu_custom_call.1} parent=1 // loop_pre_header
      _
    $region3: #{tpu_custom_call.1} parent=1 // loop_header
      %s20 = sphi 0, %s24
      %p21 = scmp.ge.s32.totalorder %s20, 4
      %s30 = sphi 0, %s32
      %s33 = sphi 0, %s30
      %s34 = sphi 0, %s33
      %s50 = sphi 0, %s34
      %s54 = sphi 0, %s54
      %s56 = sphi 0, %s54
      %s57 = sphi 0, %s56
      %s71 = sphi 0, %s57
      %s75 = sphi 0, %s75
      %s77 = sphi 0, %s75
      %s78 = sphi 0, %s77
      %s92 = sphi 0, %s78
      %s96 = sphi 0, %s96
      %s98 = sphi 0, %s96
      %s99 = sphi 0, %s98
      %s113 = sphi 0, %s99
      %s117 = sphi 0, %s117
      %s119 = sphi 0, %s117
      %s120 = sphi 0, %s119
      %s134 = sphi 0, %s120
      %s138 = sphi 0, %s138
      %s140 = sphi 0, %s138
      %s141 = sphi 0, %s140
      %s155 = sphi 0, %s141
      %s159 = sphi 0, %s159
      %s161 = sphi 0, %s159
      %s162 = sphi 0, %s161
      %s176 = sphi 0, %s162
      %s180 = sphi 0, %s180
      %s182 = sphi 0, %s180
      %s183 = sphi 0, %s182
      %s197 = sphi 0, %s183
      %s201 = sphi 0, %s201
      %s203 = sphi 0, %s201
      %s204 = sphi 0, %s203
      %s218 = sphi 0, %s204
      %s224 = sphi 0, %s226
      %s227 = sphi 0, %s224
      %s228 = sphi 0, %s227
      %s244 = sphi 0, %s228
    $region4: #{tpu_custom_call.1} parent=1 // loop_header_branch
      %23 = sbr.rel (%p21) target = $region8
    $region5: #{tpu_custom_call.1} parent=1 // loop_body
      %s25 = ssub.s32 %s20, 1
      %s26 = ssub.s32 %s20, 2
      %s27 = sadd.s32 %s20, 1
      %s28 = ssub.s32 %s20, %s27
      %p29 = scmp.eq.s32.totalorder %s28, 0
      %s31 = sadd.s32 %s30, 1
      %s32 = scalar_select %p29, %s30, %s31
      %p35 = pneg %p29
      %p36 = scmp.eq.s32.totalorder %s20, 1
      %p37 = por %p35, %p36
      %p38 = scmp.ne.s32.totalorder %s30, %s33
      %p39 = scmp.eq.s32.totalorder %s20, 0
      %p40 = por %p38, %p39
      %p41 = scmp.ne.s32.totalorder %s30, %s33
      %p42 = scmp.eq.s32.totalorder %s25, 1
      %p43 = por %p41, %p42
      %p44 = scmp.ne.s32.totalorder %s33, %s34
      %p45 = scmp.eq.s32.totalorder %s25, 0
      %p46 = por %p44, %p45
      %p47 = scmp.ne.s32.totalorder %s33, %s34
      %p48 = scmp.eq.s32.totalorder %s26, 1
      %p49 = por %p47, %p48
      %p51 = scmp.ne.s32.totalorder %s34, %s50
      %p52 = scmp.eq.s32.totalorder %s26, 0
      %p53 = por %p51, %p52
      %s55 = sadd.s32 %s54, 1
      %p58 = scmp.eq.s32.totalorder %s20, 1
      %p59 = scmp.ne.s32.totalorder %s54, %s56
      %p60 = scmp.eq.s32.totalorder %s20, 0
      %p61 = por %p59, %p60
      %p62 = scmp.ne.s32.totalorder %s54, %s56
      %p63 = scmp.eq.s32.totalorder %s25, 1
      %p64 = por %p62, %p63
      %p65 = scmp.ne.s32.totalorder %s56, %s57
      %p66 = scmp.eq.s32.totalorder %s25, 0
      %p67 = por %p65, %p66
      %p68 = scmp.ne.s32.totalorder %s56, %s57
      %p69 = scmp.eq.s32.totalorder %s26, 1
      %p70 = por %p68, %p69
      %p72 = scmp.ne.s32.totalorder %s57, %s71
      %p73 = scmp.eq.s32.totalorder %s26, 0
      %p74 = por %p72, %p73
      %s76 = sadd.s32 %s75, 1
      %p79 = scmp.eq.s32.totalorder %s20, 1
      %p80 = scmp.ne.s32.totalorder %s75, %s77
      %p81 = scmp.eq.s32.totalorder %s20, 0
      %p82 = por %p80, %p81
      %p83 = scmp.ne.s32.totalorder %s75, %s77
      %p84 = scmp.eq.s32.totalorder %s25, 1
      %p85 = por %p83, %p84
      %p86 = scmp.ne.s32.totalorder %s77, %s78
      %p87 = scmp.eq.s32.totalorder %s25, 0
      %p88 = por %p86, %p87
      %p89 = scmp.ne.s32.totalorder %s77, %s78
      %p90 = scmp.eq.s32.totalorder %s26, 1
      %p91 = por %p89, %p90
      %p93 = scmp.ne.s32.totalorder %s78, %s92
      %p94 = scmp.eq.s32.totalorder %s26, 0
      %p95 = por %p93, %p94
      %s97 = sadd.s32 %s96, 1
      %p100 = scmp.eq.s32.totalorder %s20, 1
      %p101 = scmp.ne.s32.totalorder %s96, %s98
      %p102 = scmp.eq.s32.totalorder %s20, 0
      %p103 = por %p101, %p102
      %p104 = scmp.ne.s32.totalorder %s96, %s98
      %p105 = scmp.eq.s32.totalorder %s25, 1
      %p106 = por %p104, %p105
      %p107 = scmp.ne.s32.totalorder %s98, %s99
      %p108 = scmp.eq.s32.totalorder %s25, 0
      %p109 = por %p107, %p108
      %p110 = scmp.ne.s32.totalorder %s98, %s99
      %p111 = scmp.eq.s32.totalorder %s26, 1
      %p112 = por %p110, %p111
      %p114 = scmp.ne.s32.totalorder %s99, %s113
      %p115 = scmp.eq.s32.totalorder %s26, 0
      %p116 = por %p114, %p115
      %s118 = sadd.s32 %s117, 1
      %p121 = scmp.eq.s32.totalorder %s20, 1
      %p122 = scmp.ne.s32.totalorder %s117, %s119
      %p123 = scmp.eq.s32.totalorder %s20, 0
      %p124 = por %p122, %p123
      %p125 = scmp.ne.s32.totalorder %s117, %s119
      %p126 = scmp.eq.s32.totalorder %s25, 1
      %p127 = por %p125, %p126
      %p128 = scmp.ne.s32.totalorder %s119, %s120
      %p129 = scmp.eq.s32.totalorder %s25, 0
      %p130 = por %p128, %p129
      %p131 = scmp.ne.s32.totalorder %s119, %s120
      %p132 = scmp.eq.s32.totalorder %s26, 1
      %p133 = por %p131, %p132
      %p135 = scmp.ne.s32.totalorder %s120, %s134
      %p136 = scmp.eq.s32.totalorder %s26, 0
      %p137 = por %p135, %p136
      %s139 = sadd.s32 %s138, 1
      %p142 = scmp.eq.s32.totalorder %s20, 1
      %p143 = scmp.ne.s32.totalorder %s138, %s140
      %p144 = scmp.eq.s32.totalorder %s20, 0
      %p145 = por %p143, %p144
      %p146 = scmp.ne.s32.totalorder %s138, %s140
      %p147 = scmp.eq.s32.totalorder %s25, 1
      %p148 = por %p146, %p147
      %p149 = scmp.ne.s32.totalorder %s140, %s141
      %p150 = scmp.eq.s32.totalorder %s25, 0
      %p151 = por %p149, %p150
      %p152 = scmp.ne.s32.totalorder %s140, %s141
      %p153 = scmp.eq.s32.totalorder %s26, 1
      %p154 = por %p152, %p153
      %p156 = scmp.ne.s32.totalorder %s141, %s155
      %p157 = scmp.eq.s32.totalorder %s26, 0
      %p158 = por %p156, %p157
      %s160 = sadd.s32 %s159, 1
      %p163 = scmp.eq.s32.totalorder %s20, 1
      %p164 = scmp.ne.s32.totalorder %s159, %s161
      %p165 = scmp.eq.s32.totalorder %s20, 0
      %p166 = por %p164, %p165
      %p167 = scmp.ne.s32.totalorder %s159, %s161
      %p168 = scmp.eq.s32.totalorder %s25, 1
      %p169 = por %p167, %p168
      %p170 = scmp.ne.s32.totalorder %s161, %s162
      %p171 = scmp.eq.s32.totalorder %s25, 0
      %p172 = por %p170, %p171
      %p173 = scmp.ne.s32.totalorder %s161, %s162
      %p174 = scmp.eq.s32.totalorder %s26, 1
      %p175 = por %p173, %p174
      %p177 = scmp.ne.s32.totalorder %s162, %s176
      %p178 = scmp.eq.s32.totalorder %s26, 0
      %p179 = por %p177, %p178
      %s181 = sadd.s32 %s180, 1
      %p184 = scmp.eq.s32.totalorder %s20, 1
      %p185 = scmp.ne.s32.totalorder %s180, %s182
      %p186 = scmp.eq.s32.totalorder %s20, 0
      %p187 = por %p185, %p186
      %p188 = scmp.ne.s32.totalorder %s180, %s182
      %p189 = scmp.eq.s32.totalorder %s25, 1
      %p190 = por %p188, %p189
      %p191 = scmp.ne.s32.totalorder %s182, %s183
      %p192 = scmp.eq.s32.totalorder %s25, 0
      %p193 = por %p191, %p192
      %p194 = scmp.ne.s32.totalorder %s182, %s183
      %p195 = scmp.eq.s32.totalorder %s26, 1
      %p196 = por %p194, %p195
      %p198 = scmp.ne.s32.totalorder %s183, %s197
      %p199 = scmp.eq.s32.totalorder %s26, 0
      %p200 = por %p198, %p199
      %s202 = sadd.s32 %s201, 1
      %p205 = scmp.eq.s32.totalorder %s20, 1
      %p206 = scmp.ne.s32.totalorder %s201, %s203
      %p207 = scmp.eq.s32.totalorder %s20, 0
      %p208 = por %p206, %p207
      %p209 = scmp.ne.s32.totalorder %s201, %s203
      %p210 = scmp.eq.s32.totalorder %s25, 1
      %p211 = por %p209, %p210
      %p212 = scmp.ne.s32.totalorder %s203, %s204
      %p213 = scmp.eq.s32.totalorder %s25, 0
      %p214 = por %p212, %p213
      %p215 = scmp.ne.s32.totalorder %s203, %s204
      %p216 = scmp.eq.s32.totalorder %s26, 1
      %p217 = por %p215, %p216
      %p219 = scmp.ne.s32.totalorder %s204, %s218
      %p220 = scmp.eq.s32.totalorder %s26, 0
      %p221 = por %p219, %p220
      %s222 = ssub.s32 %s20, %s27
      %p223 = scmp.eq.s32.totalorder %s222, 0
      %s225 = sadd.s32 %s224, 1
      %s226 = scalar_select %p223, %s224, %s225
      %p229 = pneg %p223
      %p230 = scmp.eq.s32.totalorder %s20, 1
      %p231 = por %p229, %p230
      %p232 = scmp.ne.s32.totalorder %s224, %s227
      %p233 = scmp.eq.s32.totalorder %s20, 0
      %p234 = por %p232, %p233
      %p235 = scmp.ne.s32.totalorder %s224, %s227
      %p236 = scmp.eq.s32.totalorder %s25, 1
      %p237 = por %p235, %p236
      %p238 = scmp.ne.s32.totalorder %s227, %s228
      %p239 = scmp.eq.s32.totalorder %s25, 0
      %p240 = por %p238, %p239
      %p241 = scmp.ne.s32.totalorder %s227, %s228
      %p242 = scmp.eq.s32.totalorder %s26, 1
      %p243 = por %p241, %p242
      %p245 = scmp.ne.s32.totalorder %s228, %s244
      %p246 = scmp.eq.s32.totalorder %s26, 0
      %p247 = por %p245, %p246
      %p248 = scmp.le.s32.totalorder 1, %s20
      %p249 = scmp.lt.s32.totalorder %s20, 3
      %p250 = pnand %p248, %p249
      %p251 = pneg %p250
      // Predicated region
      $region9: #{tpu_custom_call.1} parent=5 // pred_check
        _
      $region10: #{tpu_custom_call.1} parent=5 // pred_check_branch
        %253 = sbr.rel (%p250) target = $region12
      $region11: #{tpu_custom_call.1} parent=5 // pred_region
        %s254 = ssub.s32 %s20, 1
        // Predicated region
        $region13: #{tpu_custom_call.1} parent=11 // pred_check
          %p255 = pneg %p67
        $region14: #{tpu_custom_call.1} parent=11 // pred_check_branch
          %257 = sbr.rel (%p255) target = $region16
        $region15: #{tpu_custom_call.1} parent=11 // pred_region
          _
        $region16: #{tpu_custom_call.1} parent=11 // pred_fallthru
          _
        // Predicated region
        $region17: #{tpu_custom_call.1} parent=11 // pred_check
          %p258 = pneg %p88
        $region18: #{tpu_custom_call.1} parent=11 // pred_check_branch
          %260 = sbr.rel (%p258) target = $region20
        $region19: #{tpu_custom_call.1} parent=11 // pred_region
          _
        $region20: #{tpu_custom_call.1} parent=11 // pred_fallthru
          _
        // Predicated region
        $region21: #{tpu_custom_call.1} parent=11 // pred_check
          %p261 = pneg %p109
        $region22: #{tpu_custom_call.1} parent=11 // pred_check_branch
          %263 = sbr.rel (%p261) target = $region24
        $region23: #{tpu_custom_call.1} parent=11 // pred_region
          %s265 = ssub.s32 3072, 3072
          %266 = vsyncadd [#allocation3], %s265
          %s267 = sshll.u32 [#allocation2], 4
          %s268 = int_to_ptr.vmem [resolvable:$true] %s267
          %273 = dma.hbm_to_vmem [thread:$0]  %s3, 3072, %s268, [#allocation3], 64, 64, 4
        $region24: #{tpu_custom_call.1} parent=11 // pred_fallthru
          _
        // Predicated region
        $region25: #{tpu_custom_call.1} parent=11 // pred_check
          %p274 = pneg %p130
        $region26: #{tpu_custom_call.1} parent=11 // pred_check_branch
          %276 = sbr.rel (%p274) target = $region28
        $region27: #{tpu_custom_call.1} parent=11 // pred_region
          _
        $region28: #{tpu_custom_call.1} parent=11 // pred_fallthru
          _
        // Predicated region
        $region29: #{tpu_custom_call.1} parent=11 // pred_check
          %p277 = pneg %p151
        $region30: #{tpu_custom_call.1} parent=11 // pred_check_branch
          %279 = sbr.rel (%p277) target = $region32
        $region31: #{tpu_custom_call.1} parent=11 // pred_region
          %s281 = ssub.s32 3072, 3072
          %282 = vsyncadd [#allocation6], %s281
          %s283 = sshll.u32 [#allocation5], 4
          %s284 = int_to_ptr.vmem [resolvable:$true] %s283
          %289 = dma.hbm_to_vmem [thread:$0]  %s5, 3072, %s284, [#allocation6], 64, 64, 4
        $region32: #{tpu_custom_call.1} parent=11 // pred_fallthru
          _
        // Predicated region
        $region33: #{tpu_custom_call.1} parent=11 // pred_check
          %p290 = pneg %p172
        $region34: #{tpu_custom_call.1} parent=11 // pred_check_branch
          %292 = sbr.rel (%p290) target = $region36
        $region35: #{tpu_custom_call.1} parent=11 // pred_region
          _
        $region36: #{tpu_custom_call.1} parent=11 // pred_fallthru
          _
        // Predicated region
        $region37: #{tpu_custom_call.1} parent=11 // pred_check
          %p293 = pneg %p193
        $region38: #{tpu_custom_call.1} parent=11 // pred_check_branch
          %295 = sbr.rel (%p293) target = $region40
        $region39: #{tpu_custom_call.1} parent=11 // pred_region
          _
        $region40: #{tpu_custom_call.1} parent=11 // pred_fallthru
          _
        // Predicated region
        $region41: #{tpu_custom_call.1} parent=11 // pred_check
          %p296 = pneg %p214
        $region42: #{tpu_custom_call.1} parent=11 // pred_check_branch
          %298 = sbr.rel (%p296) target = $region44
        $region43: #{tpu_custom_call.1} parent=11 // pred_region
          _
        $region44: #{tpu_custom_call.1} parent=11 // pred_fallthru
          _
      $region12: #{tpu_custom_call.1} parent=5 // pred_fallthru
        _
      %p299 = scmp.lt.s32.totalorder %s20, 2
      // Predicated region
      $region45: #{tpu_custom_call.1} parent=5 // pred_check
        %p300 = pneg %p299
      $region46: #{tpu_custom_call.1} parent=5 // pred_check_branch
        %302 = sbr.rel (%p300) target = $region48
      $region47: #{tpu_custom_call.1} parent=5 // pred_region
        // Predicated region
        $region49: #{tpu_custom_call.1} parent=47 // pred_check
          %p303 = pneg %p40
        $region50: #{tpu_custom_call.1} parent=47 // pred_check_branch
          %305 = sbr.rel (%p303) target = $region52
        $region51: #{tpu_custom_call.1} parent=47 // pred_region
          %s306 = smul.u32 8, %s20
          %p307 = scmp.lt.s32.totalorder %s306, 15
          %s308 = scalar_select %p307, %s306, 15
          %s309 = smul.addr %s308, 4
          %s310 = scalar_lea.vmem %s0, %s309
          %s311 = smul.u32 8, %s20
        $region52: #{tpu_custom_call.1} parent=47 // pred_fallthru
          _
      $region48: #{tpu_custom_call.1} parent=5 // pred_fallthru
        _
      %p312 = scmp.le.s32.totalorder 1, %s20
      %p313 = scmp.lt.s32.totalorder %s20, 3
      %p314 = pnand %p312, %p313
      %p315 = pneg %p314
      // Predicated region
      $region53: #{tpu_custom_call.1} parent=5 // pred_check
        _
      $region54: #{tpu_custom_call.1} parent=5 // pred_check_branch
        %317 = sbr.rel (%p314) target = $region56
      $region55: #{tpu_custom_call.1} parent=5 // pred_region
        %s318 = ssub.s32 %s20, 1
        // Predicated region
        $region57: #{tpu_custom_call.1} parent=55 // pred_check
          %p319 = pneg %p109
        $region58: #{tpu_custom_call.1} parent=55 // pred_check_branch
          %321 = sbr.rel (%p319) target = $region60
        $region59: #{tpu_custom_call.1} parent=55 // pred_region
          %322 = dma.done [#allocation3], 3072
        $region60: #{tpu_custom_call.1} parent=55 // pred_fallthru
          _
        // Predicated region
        $region61: #{tpu_custom_call.1} parent=55 // pred_check
          %p323 = pneg %p151
        $region62: #{tpu_custom_call.1} parent=55 // pred_check_branch
          %325 = sbr.rel (%p323) target = $region64
        $region63: #{tpu_custom_call.1} parent=55 // pred_region
          %326 = dma.done [#allocation6], 3072
        $region64: #{tpu_custom_call.1} parent=55 // pred_fallthru
          _
        %s327 = smul.u32 8, %s25
        %p328 = scmp.lt.s32.totalorder %s327, 15
        %s329 = scalar_select %p328, %s327, 15
        %s330 = smul.addr %s329, 4
        %s331 = scalar_lea.vmem %s0, %s330
        %p332 = pneg %p46
        %p333 = pneg %p43
        %p334 = pneg %p67
        %p335 = pneg %p64
        %p336 = pneg %p88
        %p337 = pneg %p85
        %p338 = pneg %p109
        %p339 = pneg %p106
        %p340 = pneg %p130
        %p341 = pneg %p127
        %p342 = pneg %p151
        %p343 = pneg %p148
        %p344 = pneg %p172
        %p345 = pneg %p169
        %p346 = pneg %p193
        %p347 = pneg %p190
        %p348 = pneg %p214
        %p349 = pneg %p211
        %p350 = pneg %p240
        %p351 = pneg %p237
        %s352 = sand.u32 %s227, 1
        %s353 = scalar_lea.sflag [#allocation4], %s352
        %s354 = sand.u32 %s227, 1
        %s355 = smul.addr %s354, 64
        %s356 = scalar_lea.vmem [#allocation7], %s355
        %s357 = smul.u32 8, %s25
        %p358 = scmp.lt.s32.totalorder %s357, 15
        %s359 = scalar_select %p358, %s357, 15
        %s360 = smul.addr %s359, 4
        %s361 = scalar_lea.vmem %s0, %s360
        %s362 = smul.u32 8, %s25
        %s363 = smul.u32 8, %s25
        %v365 = vld [vmem:[%s1] sm:$0xff]
        %v366 = vld [vmem:[%s1 + $0x8] sm:$0xff]
        %v367 = vld [vmem:[%s1 + $0x10] sm:$0xff]
        %v368 = vld [vmem:[%s1 + $0x18] sm:$0xff]
        %v369 = vld [vmem:[%s1 + $0x20] sm:$0xff]
        %v370 = vld [vmem:[%s1 + $0x28] sm:$0xff]
        %v371 = vld [vmem:[%s1 + $0x30] sm:$0xff]
        %v372 = vld [vmem:[%s1 + $0x38] sm:$0xff]
        %v373 = vld [vmem:[%s2] sm:$0xff]
        %v374 = vld [vmem:[%s2 + $0x8] sm:$0xff]
        %v375 = vld [vmem:[%s2 + $0x10] sm:$0xff]
        %v376 = vld [vmem:[%s2 + $0x18] sm:$0xff]
        %v377 = vld [vmem:[%s2 + $0x20] sm:$0xff]
        %v378 = vld [vmem:[%s2 + $0x28] sm:$0xff]
        %v379 = vld [vmem:[%s2 + $0x30] sm:$0xff]
        %v380 = vld [vmem:[%s2 + $0x38] sm:$0xff]
        %v381 = vld [vmem:[%s361] sm:$0xf]
        %v382 = vld [vmem:[%s361 + $0x4] sm:$0xf]
        %v383 = vld [vmem:[%s361 + $0x8] sm:$0xf]
        %v384 = vld [vmem:[%s361 + $0xc] sm:$0xf]
        %v385 = vld [vmem:[%s361 + $0x10] sm:$0xf]
        %v386 = vld [vmem:[%s361 + $0x14] sm:$0xf]
        %v387 = vld [vmem:[%s361 + $0x18] sm:$0xf]
        %v388 = vld [vmem:[%s361 + $0x1c] sm:$0xf]
        %v389 = vunpack.c.l.bf16 %v381
        %v390 = vunpack.c.l.bf16 %v382
        %v391 = vunpack.c.l.bf16 %v383
        %v392 = vunpack.c.l.bf16 %v384
        %v393 = vunpack.c.l.bf16 %v385
        %v394 = vunpack.c.l.bf16 %v386
        %v395 = vunpack.c.l.bf16 %v387
        %v396 = vunpack.c.l.bf16 %v388
        %v397 = vrot.slane %v389, 7
        %v398 = vrot.slane %v390, 7
        %v399 = vrot.slane %v391, 7
        %v400 = vrot.slane %v392, 7
        %v401 = vrot.slane %v393, 7
        %v402 = vrot.slane %v394, 7
        %v403 = vrot.slane %v395, 7
        %v404 = vrot.slane %v396, 7
        %v405 = vlaneseq
        %v406 = vshrl.u32 %v405, 7
        %vm407 = vcmp.lt.s32.totalorder %v406, 1
        %v408 = vsel %vm407, %v403, %v404
        %v409 = vsel %vm407, %v402, %v403
        %v410 = vsel %vm407, %v401, %v402
        %v411 = vsel %vm407, %v400, %v401
        %v412 = vsel %vm407, %v399, %v400
        %v413 = vsel %vm407, %v398, %v399
        %v414 = vsel %vm407, %v397, %v398
        %v415 = vsel %vm407, %v404, %v397
        %417 = vset.pattern.permute.xlu0 0
        %418 = vperm.xlu0 %417, %v365
        %v419 = vpop.permute.xlu0 %418
        %422 = vset.pattern.permute.xlu0 0
        %423 = vperm.xlu0 %422, %v366
        %v424 = vpop.permute.xlu0 %423
        %427 = vset.pattern.permute.xlu0 0
        %428 = vperm.xlu0 %427, %v367
        %v429 = vpop.permute.xlu0 %428
        %432 = vset.pattern.permute.xlu0 0
        %433 = vperm.xlu0 %432, %v368
        %v434 = vpop.permute.xlu0 %433
        %437 = vset.pattern.permute.xlu0 0
        %438 = vperm.xlu0 %437, %v369
        %v439 = vpop.permute.xlu0 %438
        %442 = vset.pattern.permute.xlu0 0
        %443 = vperm.xlu0 %442, %v370
        %v444 = vpop.permute.xlu0 %443
        %447 = vset.pattern.permute.xlu0 0
        %448 = vperm.xlu0 %447, %v371
        %v449 = vpop.permute.xlu0 %448
        %452 = vset.pattern.permute.xlu0 0
        %453 = vperm.xlu0 %452, %v372
        %v454 = vpop.permute.xlu0 %453
        %v456 = vmul.f32 %v415, %v419
        %v457 = vmul.f32 %v414, %v424
        %v458 = vmul.f32 %v413, %v429
        %v459 = vmul.f32 %v412, %v434
        %v460 = vmul.f32 %v411, %v439
        %v461 = vmul.f32 %v410, %v444
        %v462 = vmul.f32 %v409, %v449
        %v463 = vmul.f32 %v408, %v454
        %v464 = vpack.c.bf16 %v457, %v456
        %v465 = vpack.c.bf16 %v459, %v458
        %v466 = vpack.c.bf16 %v461, %v460
        %v467 = vpack.c.bf16 %v463, %v462
        %v468 = vrot.slane %v389, 1
        %v469 = vrot.slane %v390, 1
        %v470 = vrot.slane %v391, 1
        %v471 = vrot.slane %v392, 1
        %v472 = vrot.slane %v393, 1
        %v473 = vrot.slane %v394, 1
        %v474 = vrot.slane %v395, 1
        %v475 = vrot.slane %v396, 1
        %vm476 = vcmp.lt.s32.totalorder %v406, 7
        %v477 = vsel %vm476, %v474, %v475
        %v478 = vsel %vm476, %v473, %v474
        %v479 = vsel %vm476, %v472, %v473
        %v480 = vsel %vm476, %v471, %v472
        %v481 = vsel %vm476, %v470, %v471
        %v482 = vsel %vm476, %v469, %v470
        %v483 = vsel %vm476, %v468, %v469
        %v484 = vsel %vm476, %v475, %v468
        %486 = vset.pattern.permute.xlu0 0
        %487 = vperm.xlu0 %486, %v373
        %v488 = vpop.permute.xlu0 %487
        %491 = vset.pattern.permute.xlu0 0
        %492 = vperm.xlu0 %491, %v374
        %v493 = vpop.permute.xlu0 %492
        %496 = vset.pattern.permute.xlu0 0
        %497 = vperm.xlu0 %496, %v375
        %v498 = vpop.permute.xlu0 %497
        %501 = vset.pattern.permute.xlu0 0
        %502 = vperm.xlu0 %501, %v376
        %v503 = vpop.permute.xlu0 %502
        %506 = vset.pattern.permute.xlu0 0
        %507 = vperm.xlu0 %506, %v377
        %v508 = vpop.permute.xlu0 %507
        %511 = vset.pattern.permute.xlu0 0
        %512 = vperm.xlu0 %511, %v378
        %v513 = vpop.permute.xlu0 %512
        %516 = vset.pattern.permute.xlu0 0
        %517 = vperm.xlu0 %516, %v379
        %v518 = vpop.permute.xlu0 %517
        %521 = vset.pattern.permute.xlu0 0
        %522 = vperm.xlu0 %521, %v380
        %v523 = vpop.permute.xlu0 %522
        %v525 = vmul.f32 %v483, %v488
        %v526 = vmul.f32 %v482, %v493
        %v527 = vmul.f32 %v481, %v498
        %v528 = vmul.f32 %v480, %v503
        %v529 = vmul.f32 %v479, %v508
        %v530 = vmul.f32 %v478, %v513
        %v531 = vmul.f32 %v477, %v518
        %v532 = vmul.f32 %v484, %v523
        %v533 = vpack.c.bf16 %v526, %v525
        %v534 = vpack.c.bf16 %v528, %v527
        %v535 = vpack.c.bf16 %v530, %v529
        %v536 = vpack.c.bf16 %v532, %v531
        %v537 = vld [vmem:[#allocation2] sm:$0xf]
        %v538 = vld [vmem:[#allocation2 + $0x4] sm:$0xf]
        %v539 = vld [vmem:[#allocation2 + $0x8] sm:$0xf]
        %v540 = vld [vmem:[#allocation2 + $0xc] sm:$0xf]
        %v541 = vld [vmem:[#allocation2 + $0x10] sm:$0xf]
        %v542 = vld [vmem:[#allocation2 + $0x14] sm:$0xf]
        %v543 = vld [vmem:[#allocation2 + $0x18] sm:$0xf]
        %v544 = vld [vmem:[#allocation2 + $0x1c] sm:$0xf]
        %v545 = vld [vmem:[#allocation2 + $0x20] sm:$0xf]
        %v546 = vld [vmem:[#allocation2 + $0x24] sm:$0xf]
        %v547 = vld [vmem:[#allocation2 + $0x28] sm:$0xf]
        %v548 = vld [vmem:[#allocation2 + $0x2c] sm:$0xf]
        %v549 = vld [vmem:[#allocation2 + $0x30] sm:$0xf]
        %v550 = vld [vmem:[#allocation2 + $0x34] sm:$0xf]
        %v551 = vld [vmem:[#allocation2 + $0x38] sm:$0xf]
        %v552 = vld [vmem:[#allocation2 + $0x3c] sm:$0xf]
        %s553 = scalar_lea.vmem [#allocation2], 64
        %v554 = vld [vmem:[%s553] sm:$0xf]
        %v555 = vld [vmem:[%s553 + $0x4] sm:$0xf]
        %v556 = vld [vmem:[%s553 + $0x8] sm:$0xf]
        %v557 = vld [vmem:[%s553 + $0xc] sm:$0xf]
        %v558 = vld [vmem:[%s553 + $0x10] sm:$0xf]
        %v559 = vld [vmem:[%s553 + $0x14] sm:$0xf]
        %v560 = vld [vmem:[%s553 + $0x18] sm:$0xf]
        %v561 = vld [vmem:[%s553 + $0x1c] sm:$0xf]
        %v562 = vld [vmem:[%s553 + $0x20] sm:$0xf]
        %v563 = vld [vmem:[%s553 + $0x24] sm:$0xf]
        %v564 = vld [vmem:[%s553 + $0x28] sm:$0xf]
        %v565 = vld [vmem:[%s553 + $0x2c] sm:$0xf]
        %v566 = vld [vmem:[%s553 + $0x30] sm:$0xf]
        %v567 = vld [vmem:[%s553 + $0x34] sm:$0xf]
        %v568 = vld [vmem:[%s553 + $0x38] sm:$0xf]
        %v569 = vld [vmem:[%s553 + $0x3c] sm:$0xf]
        %v578 = vunpack.c.l.b16 %v381
        %v579 = vunpack.c.l.b16 %v382
        %v580 = vunpack.c.l.b16 %v383
        %v581 = vunpack.c.l.b16 %v384
        %v582 = vunpack.c.l.b16 %v385
        %v583 = vunpack.c.l.b16 %v386
        %v584 = vunpack.c.l.b16 %v387
        %v585 = vunpack.c.l.b16 %v388
        %v586 = vpack.c.b16 %v579, %v578
        %v587 = vpack.c.b16 %v581, %v580
        %v588 = vpack.c.b16 %v583, %v582
        %v589 = vpack.c.b16 %v585, %v584
        %v610 = vunpack.c.l.b16 %v554
        %v611 = vunpack.c.l.b16 %v555
        %v612 = vunpack.c.l.b16 %v556
        %v613 = vunpack.c.l.b16 %v557
        %v614 = vunpack.c.l.b16 %v558
        %v615 = vunpack.c.l.b16 %v559
        %v616 = vunpack.c.l.b16 %v560
        %v617 = vunpack.c.l.b16 %v561
        %v618 = vunpack.c.l.b16 %v562
        %v619 = vunpack.c.l.b16 %v563
        %v620 = vunpack.c.l.b16 %v564
        %v621 = vunpack.c.l.b16 %v565
        %v622 = vunpack.c.l.b16 %v566
        %v623 = vunpack.c.l.b16 %v567
        %v624 = vunpack.c.l.b16 %v568
        %v625 = vunpack.c.l.b16 %v569
        %v626 = vpack.c.b16 %v611, %v610
        %v627 = vpack.c.b16 %v613, %v612
        %v628 = vpack.c.b16 %v615, %v614
        %v629 = vpack.c.b16 %v617, %v616
        %v630 = vpack.c.b16 %v619, %v618
        %v631 = vpack.c.b16 %v621, %v620
        %v632 = vpack.c.b16 %v623, %v622
        %v633 = vpack.c.b16 %v625, %v624
        %642 = vmatprep.subr.bf16.mxu0 0
        %643 = vmatpush1.bf16.msra.mxu0 %v633
        %644 = vmatprep.subr.bf16.mxu0 0
        %645 = vmatpush1.bf16.msra.mxu0 %v632
        %646 = vmatprep.subr.bf16.mxu0 0
        %647 = vmatpush1.bf16.msra.mxu0 %v631
        %648 = vmatprep.subr.bf16.mxu0 0
        %649 = vmatpush1.bf16.msra.mxu0 %v630
        %650 = vmatprep.subr.bf16.mxu0 0
        %651 = vmatpush1.bf16.msra.mxu0 %v629
        %652 = vmatprep.subr.bf16.mxu0 0
        %653 = vmatpush1.bf16.msra.mxu0 %v628
        %654 = vmatprep.subr.bf16.mxu0 0
        %655 = vmatpush1.bf16.msra.mxu0 %v627
        %656 = vmatprep.subr.bf16.mxu0 0
        %657 = vmatpush1.bf16.msra.mxu0 %v626
        %658 = vmatprep.subr.bf16.mxu0 0
        %659 = vmatpush2.bf16.msra.mxu0 0
        %660 = vmatprep.subr.bf16.mxu0 0
        %661 = vmatpush2.bf16.msra.mxu0 0
        %662 = vmatprep.subr.bf16.mxu0 0
        %663 = vmatpush2.bf16.msra.mxu0 0
        %664 = vmatprep.subr.bf16.mxu0 0
        %665 = vmatpush2.bf16.msra.mxu0 0
        %666 = vmatprep.subr.bf16.mxu0 0
        %667 = vmatpush2.bf16.msra.mxu0 0
        %668 = vmatprep.subr.bf16.mxu0 0
        %669 = vmatpush2.bf16.msra.mxu0 0
        %670 = vmatprep.subr.bf16.mxu0 0
        %671 = vmatpush2.bf16.msra.mxu0 0
        %672 = vmatprep.subr.bf16.mxu0 0
        %673 = vmatpush2.bf16.msra.mxu0 0
        %674 = vmatprep.mubr.bf16.mxu0 0
        %675 = vmatmul.mubr.bf16.gmra.mxu0 %v586
        %v676 = vpop.f32.mrf.mxu0
        %v677 = vadd.f32 0.0, %v676
        %v678 = vpop.f32.mrf.mxu0
        %v679 = vpop.f32.mrf.mxu0
        %v680 = vadd.f32 0.0, %v679
        %v681 = vpop.f32.mrf.mxu0
        %682 = vmatprep.mubr.bf16.mxu0 0
        %683 = vmatmul.mubr.bf16.gmra.mxu0 %v587
        %v684 = vpop.f32.mrf.mxu0
        %v685 = vadd.f32 0.0, %v684
        %v686 = vpop.f32.mrf.mxu0
        %v687 = vpop.f32.mrf.mxu0
        %v688 = vadd.f32 0.0, %v687
        %v689 = vpop.f32.mrf.mxu0
        %690 = vmatprep.mubr.bf16.mxu0 0
        %691 = vmatmul.mubr.bf16.gmra.mxu0 %v588
        %v692 = vpop.f32.mrf.mxu0
        %v693 = vadd.f32 0.0, %v692
        %v694 = vpop.f32.mrf.mxu0
        %v695 = vpop.f32.mrf.mxu0
        %v696 = vadd.f32 0.0, %v695
        %v697 = vpop.f32.mrf.mxu0
        %698 = vmatprep.mubr.bf16.mxu0 0
        %699 = vmatmul.mubr.bf16.gmra.mxu0 %v589
        %v700 = vpop.f32.mrf.mxu0
        %v701 = vadd.f32 0.0, %v700
        %v702 = vpop.f32.mrf.mxu0
        %v703 = vpop.f32.mrf.mxu0
        %v704 = vadd.f32 0.0, %v703
        %v705 = vpop.f32.mrf.mxu0
        %706 = vdwg.mxu0
        %v723 = vunpack.c.l.b16 %v537
        %v724 = vunpack.c.l.b16 %v538
        %v725 = vunpack.c.l.b16 %v539
        %v726 = vunpack.c.l.b16 %v540
        %v727 = vunpack.c.l.b16 %v541
        %v728 = vunpack.c.l.b16 %v542
        %v729 = vunpack.c.l.b16 %v543
        %v730 = vunpack.c.l.b16 %v544
        %v731 = vunpack.c.l.b16 %v545
        %v732 = vunpack.c.l.b16 %v546
        %v733 = vunpack.c.l.b16 %v547
        %v734 = vunpack.c.l.b16 %v548
        %v735 = vunpack.c.l.b16 %v549
        %v736 = vunpack.c.l.b16 %v550
        %v737 = vunpack.c.l.b16 %v551
        %v738 = vunpack.c.l.b16 %v552
        %v739 = vpack.c.b16 %v724, %v723
        %v740 = vpack.c.b16 %v726, %v725
        %v741 = vpack.c.b16 %v728, %v727
        %v742 = vpack.c.b16 %v730, %v729
        %v743 = vpack.c.b16 %v732, %v731
        %v744 = vpack.c.b16 %v734, %v733
        %v745 = vpack.c.b16 %v736, %v735
        %v746 = vpack.c.b16 %v738, %v737
        %755 = vmatprep.subr.bf16.mxu0 0
        %756 = vmatpush1.bf16.msra.mxu0 %v746
        %757 = vmatprep.subr.bf16.mxu0 0
        %758 = vmatpush1.bf16.msra.mxu0 %v745
        %759 = vmatprep.subr.bf16.mxu0 0
        %760 = vmatpush1.bf16.msra.mxu0 %v744
        %761 = vmatprep.subr.bf16.mxu0 0
        %762 = vmatpush1.bf16.msra.mxu0 %v743
        %763 = vmatprep.subr.bf16.mxu0 0
        %764 = vmatpush1.bf16.msra.mxu0 %v742
        %765 = vmatprep.subr.bf16.mxu0 0
        %766 = vmatpush1.bf16.msra.mxu0 %v741
        %767 = vmatprep.subr.bf16.mxu0 0
        %768 = vmatpush1.bf16.msra.mxu0 %v740
        %769 = vmatprep.subr.bf16.mxu0 0
        %770 = vmatpush1.bf16.msra.mxu0 %v739
        %771 = vmatprep.subr.bf16.mxu0 0
        %772 = vmatpush2.bf16.msra.mxu0 0
        %773 = vmatprep.subr.bf16.mxu0 0
        %774 = vmatpush2.bf16.msra.mxu0 0
        %775 = vmatprep.subr.bf16.mxu0 0
        %776 = vmatpush2.bf16.msra.mxu0 0
        %777 = vmatprep.subr.bf16.mxu0 0
        %778 = vmatpush2.bf16.msra.mxu0 0
        %779 = vmatprep.subr.bf16.mxu0 0
        %780 = vmatpush2.bf16.msra.mxu0 0
        %781 = vmatprep.subr.bf16.mxu0 0
        %782 = vmatpush2.bf16.msra.mxu0 0
        %783 = vmatprep.subr.bf16.mxu0 0
        %784 = vmatpush2.bf16.msra.mxu0 0
        %785 = vmatprep.subr.bf16.mxu0 0
        %786 = vmatpush2.bf16.msra.mxu0 0
        %787 = vmatprep.mubr.bf16.mxu0 0
        %788 = vmatmul.mubr.bf16.gmra.mxu0 %v464
        %v789 = vpop.f32.mrf.mxu0
        %v790 = vadd.f32 %v677, %v789
        %v791 = vpop.f32.mrf.mxu0
        %v792 = vpop.f32.mrf.mxu0
        %v793 = vadd.f32 %v680, %v792
        %v794 = vpop.f32.mrf.mxu0
        %795 = vmatprep.mubr.bf16.mxu0 0
        %796 = vmatmul.mubr.bf16.gmra.mxu0 %v465
        %v797 = vpop.f32.mrf.mxu0
        %v798 = vadd.f32 %v685, %v797
        %v799 = vpop.f32.mrf.mxu0
        %v800 = vpop.f32.mrf.mxu0
        %v801 = vadd.f32 %v688, %v800
        %v802 = vpop.f32.mrf.mxu0
        %803 = vmatprep.mubr.bf16.mxu0 0
        %804 = vmatmul.mubr.bf16.gmra.mxu0 %v466
        %v805 = vpop.f32.mrf.mxu0
        %v806 = vadd.f32 %v693, %v805
        %v807 = vpop.f32.mrf.mxu0
        %v808 = vpop.f32.mrf.mxu0
        %v809 = vadd.f32 %v696, %v808
        %v810 = vpop.f32.mrf.mxu0
        %811 = vmatprep.mubr.bf16.mxu0 0
        %812 = vmatmul.mubr.bf16.gmra.mxu0 %v467
        %v813 = vpop.f32.mrf.mxu0
        %v814 = vadd.f32 %v701, %v813
        %v815 = vpop.f32.mrf.mxu0
        %v816 = vpop.f32.mrf.mxu0
        %v817 = vadd.f32 %v704, %v816
        %v818 = vpop.f32.mrf.mxu0
        %819 = vdwg.mxu0
        %s820 = scalar_lea.vmem [#allocation2], 128
        %v821 = vld [vmem:[%s820] sm:$0xf]
        %v822 = vld [vmem:[%s820 + $0x4] sm:$0xf]
        %v823 = vld [vmem:[%s820 + $0x8] sm:$0xf]
        %v824 = vld [vmem:[%s820 + $0xc] sm:$0xf]
        %v825 = vld [vmem:[%s820 + $0x10] sm:$0xf]
        %v826 = vld [vmem:[%s820 + $0x14] sm:$0xf]
        %v827 = vld [vmem:[%s820 + $0x18] sm:$0xf]
        %v828 = vld [vmem:[%s820 + $0x1c] sm:$0xf]
        %v829 = vld [vmem:[%s820 + $0x20] sm:$0xf]
        %v830 = vld [vmem:[%s820 + $0x24] sm:$0xf]
        %v831 = vld [vmem:[%s820 + $0x28] sm:$0xf]
        %v832 = vld [vmem:[%s820 + $0x2c] sm:$0xf]
        %v833 = vld [vmem:[%s820 + $0x30] sm:$0xf]
        %v834 = vld [vmem:[%s820 + $0x34] sm:$0xf]
        %v835 = vld [vmem:[%s820 + $0x38] sm:$0xf]
        %v836 = vld [vmem:[%s820 + $0x3c] sm:$0xf]
        %v853 = vunpack.c.l.b16 %v821
        %v854 = vunpack.c.l.b16 %v822
        %v855 = vunpack.c.l.b16 %v823
        %v856 = vunpack.c.l.b16 %v824
        %v857 = vunpack.c.l.b16 %v825
        %v858 = vunpack.c.l.b16 %v826
        %v859 = vunpack.c.l.b16 %v827
        %v860 = vunpack.c.l.b16 %v828
        %v861 = vunpack.c.l.b16 %v829
        %v862 = vunpack.c.l.b16 %v830
        %v863 = vunpack.c.l.b16 %v831
        %v864 = vunpack.c.l.b16 %v832
        %v865 = vunpack.c.l.b16 %v833
        %v866 = vunpack.c.l.b16 %v834
        %v867 = vunpack.c.l.b16 %v835
        %v868 = vunpack.c.l.b16 %v836
        %v869 = vpack.c.b16 %v854, %v853
        %v870 = vpack.c.b16 %v856, %v855
        %v871 = vpack.c.b16 %v858, %v857
        %v872 = vpack.c.b16 %v860, %v859
        %v873 = vpack.c.b16 %v862, %v861
        %v874 = vpack.c.b16 %v864, %v863
        %v875 = vpack.c.b16 %v866, %v865
        %v876 = vpack.c.b16 %v868, %v867
        %885 = vmatprep.subr.bf16.mxu0 0
        %886 = vmatpush1.bf16.msra.mxu0 %v876
        %887 = vmatprep.subr.bf16.mxu0 0
        %888 = vmatpush1.bf16.msra.mxu0 %v875
        %889 = vmatprep.subr.bf16.mxu0 0
        %890 = vmatpush1.bf16.msra.mxu0 %v874
        %891 = vmatprep.subr.bf16.mxu0 0
        %892 = vmatpush1.bf16.msra.mxu0 %v873
        %893 = vmatprep.subr.bf16.mxu0 0
        %894 = vmatpush1.bf16.msra.mxu0 %v872
        %895 = vmatprep.subr.bf16.mxu0 0
        %896 = vmatpush1.bf16.msra.mxu0 %v871
        %897 = vmatprep.subr.bf16.mxu0 0
        %898 = vmatpush1.bf16.msra.mxu0 %v870
        %899 = vmatprep.subr.bf16.mxu0 0
        %900 = vmatpush1.bf16.msra.mxu0 %v869
        %901 = vmatprep.subr.bf16.mxu0 0
        %902 = vmatpush2.bf16.msra.mxu0 0
        %903 = vmatprep.subr.bf16.mxu0 0
        %904 = vmatpush2.bf16.msra.mxu0 0
        %905 = vmatprep.subr.bf16.mxu0 0
        %906 = vmatpush2.bf16.msra.mxu0 0
        %907 = vmatprep.subr.bf16.mxu0 0
        %908 = vmatpush2.bf16.msra.mxu0 0
        %909 = vmatprep.subr.bf16.mxu0 0
        %910 = vmatpush2.bf16.msra.mxu0 0
        %911 = vmatprep.subr.bf16.mxu0 0
        %912 = vmatpush2.bf16.msra.mxu0 0
        %913 = vmatprep.subr.bf16.mxu0 0
        %914 = vmatpush2.bf16.msra.mxu0 0
        %915 = vmatprep.subr.bf16.mxu0 0
        %916 = vmatpush2.bf16.msra.mxu0 0
        %917 = vmatprep.mubr.bf16.mxu0 0
        %918 = vmatmul.mubr.bf16.gmra.mxu0 %v533
        %v919 = vpop.f32.mrf.mxu0
        %v920 = vadd.f32 0.0, %v919
        %v921 = vpop.f32.mrf.mxu0
        %v922 = vpop.f32.mrf.mxu0
        %v923 = vadd.f32 0.0, %v922
        %v924 = vpop.f32.mrf.mxu0
        %925 = vmatprep.mubr.bf16.mxu0 0
        %926 = vmatmul.mubr.bf16.gmra.mxu0 %v534
        %v927 = vpop.f32.mrf.mxu0
        %v928 = vadd.f32 0.0, %v927
        %v929 = vpop.f32.mrf.mxu0
        %v930 = vpop.f32.mrf.mxu0
        %v931 = vadd.f32 0.0, %v930
        %v932 = vpop.f32.mrf.mxu0
        %933 = vmatprep.mubr.bf16.mxu0 0
        %934 = vmatmul.mubr.bf16.gmra.mxu0 %v535
        %v935 = vpop.f32.mrf.mxu0
        %v936 = vadd.f32 0.0, %v935
        %v937 = vpop.f32.mrf.mxu0
        %v938 = vpop.f32.mrf.mxu0
        %v939 = vadd.f32 0.0, %v938
        %v940 = vpop.f32.mrf.mxu0
        %941 = vmatprep.mubr.bf16.mxu0 0
        %942 = vmatmul.mubr.bf16.gmra.mxu0 %v536
        %v943 = vpop.f32.mrf.mxu0
        %v944 = vadd.f32 0.0, %v943
        %v945 = vpop.f32.mrf.mxu0
        %v946 = vpop.f32.mrf.mxu0
        %v947 = vadd.f32 0.0, %v946
        %v948 = vpop.f32.mrf.mxu0
        %949 = vdwg.mxu0
        %v950 = vadd.f32 %v790, %v920
        %v951 = vadd.f32 %v793, %v923
        %v952 = vadd.f32 %v798, %v928
        %v953 = vadd.f32 %v801, %v931
        %v954 = vadd.f32 %v806, %v936
        %v955 = vadd.f32 %v809, %v939
        %v956 = vadd.f32 %v814, %v944
        %v957 = vadd.f32 %v817, %v947
        %v958 = vld [vmem:[%s4] sm:$0x1]
        %v960 = vlaneseq
        %v961 = vshrl.u32 %v960, 7
        %v962 = vsub.s32 0, %v961
        %v963 = vrot.slane %v958, %v962
        %v965 = vadd.f32 %v950, %v963
        %v966 = vadd.f32 %v951, %v963
        %v967 = vadd.f32 %v952, %v963
        %v968 = vadd.f32 %v953, %v963
        %v969 = vadd.f32 %v954, %v963
        %v970 = vadd.f32 %v955, %v963
        %v971 = vadd.f32 %v956, %v963
        %v972 = vadd.f32 %v957, %v963
        %v973 = vmax.f32 %v965, 0.0
        %v974 = vmax.f32 %v966, 0.0
        %v975 = vmax.f32 %v967, 0.0
        %v976 = vmax.f32 %v968, 0.0
        %v977 = vmax.f32 %v969, 0.0
        %v978 = vmax.f32 %v970, 0.0
        %v979 = vmax.f32 %v971, 0.0
        %v980 = vmax.f32 %v972, 0.0
        %v981 = vrot.slane %v973, 7
        %v982 = vrot.slane %v974, 7
        %v983 = vrot.slane %v975, 7
        %v984 = vrot.slane %v976, 7
        %v985 = vrot.slane %v977, 7
        %v986 = vrot.slane %v978, 7
        %v987 = vrot.slane %v979, 7
        %v988 = vrot.slane %v980, 7
        %v989 = vsel %vm407, %v987, %v988
        %v990 = vsel %vm407, %v986, %v987
        %v991 = vsel %vm407, %v985, %v986
        %v992 = vsel %vm407, %v984, %v985
        %v993 = vsel %vm407, %v983, %v984
        %v994 = vsel %vm407, %v982, %v983
        %v995 = vsel %vm407, %v981, %v982
        %v996 = vsel %vm407, %v988, %v981
        %v997 = vmul.f32 %v996, %v419
        %v998 = vmul.f32 %v995, %v424
        %v999 = vmul.f32 %v994, %v429
        %v1000 = vmul.f32 %v993, %v434
        %v1001 = vmul.f32 %v992, %v439
        %v1002 = vmul.f32 %v991, %v444
        %v1003 = vmul.f32 %v990, %v449
        %v1004 = vmul.f32 %v989, %v454
        %v1005 = vpack.c.bf16 %v998, %v997
        %v1006 = vpack.c.bf16 %v1000, %v999
        %v1007 = vpack.c.bf16 %v1002, %v1001
        %v1008 = vpack.c.bf16 %v1004, %v1003
        %v1009 = vrot.slane %v973, 1
        %v1010 = vrot.slane %v974, 1
        %v1011 = vrot.slane %v975, 1
        %v1012 = vrot.slane %v976, 1
        %v1013 = vrot.slane %v977, 1
        %v1014 = vrot.slane %v978, 1
        %v1015 = vrot.slane %v979, 1
        %v1016 = vrot.slane %v980, 1
        %v1017 = vsel %vm476, %v1015, %v1016
        %v1018 = vsel %vm476, %v1014, %v1015
        %v1019 = vsel %vm476, %v1013, %v1014
        %v1020 = vsel %vm476, %v1012, %v1013
        %v1021 = vsel %vm476, %v1011, %v1012
        %v1022 = vsel %vm476, %v1010, %v1011
        %v1023 = vsel %vm476, %v1009, %v1010
        %v1024 = vsel %vm476, %v1016, %v1009
        %v1025 = vmul.f32 %v1023, %v488
        %v1026 = vmul.f32 %v1022, %v493
        %v1027 = vmul.f32 %v1021, %v498
        %v1028 = vmul.f32 %v1020, %v503
        %v1029 = vmul.f32 %v1019, %v508
        %v1030 = vmul.f32 %v1018, %v513
        %v1031 = vmul.f32 %v1017, %v518
        %v1032 = vmul.f32 %v1024, %v523
        %v1033 = vpack.c.bf16 %v1026, %v1025
        %v1034 = vpack.c.bf16 %v1028, %v1027
        %v1035 = vpack.c.bf16 %v1030, %v1029
        %v1036 = vpack.c.bf16 %v1032, %v1031
        %v1037 = vpack.c.bf16 %v974, %v973
        %v1038 = vpack.c.bf16 %v976, %v975
        %v1039 = vpack.c.bf16 %v978, %v977
        %v1040 = vpack.c.bf16 %v980, %v979
        %v1041 = vld [vmem:[#allocation5] sm:$0xf]
        %v1042 = vld [vmem:[#allocation5 + $0x4] sm:$0xf]
        %v1043 = vld [vmem:[#allocation5 + $0x8] sm:$0xf]
        %v1044 = vld [vmem:[#allocation5 + $0xc] sm:$0xf]
        %v1045 = vld [vmem:[#allocation5 + $0x10] sm:$0xf]
        %v1046 = vld [vmem:[#allocation5 + $0x14] sm:$0xf]
        %v1047 = vld [vmem:[#allocation5 + $0x18] sm:$0xf]
        %v1048 = vld [vmem:[#allocation5 + $0x1c] sm:$0xf]
        %v1049 = vld [vmem:[#allocation5 + $0x20] sm:$0xf]
        %v1050 = vld [vmem:[#allocation5 + $0x24] sm:$0xf]
        %v1051 = vld [vmem:[#allocation5 + $0x28] sm:$0xf]
        %v1052 = vld [vmem:[#allocation5 + $0x2c] sm:$0xf]
        %v1053 = vld [vmem:[#allocation5 + $0x30] sm:$0xf]
        %v1054 = vld [vmem:[#allocation5 + $0x34] sm:$0xf]
        %v1055 = vld [vmem:[#allocation5 + $0x38] sm:$0xf]
        %v1056 = vld [vmem:[#allocation5 + $0x3c] sm:$0xf]
        %s1057 = scalar_lea.vmem [#allocation5], 64
        %v1058 = vld [vmem:[%s1057] sm:$0xf]
        %v1059 = vld [vmem:[%s1057 + $0x4] sm:$0xf]
        %v1060 = vld [vmem:[%s1057 + $0x8] sm:$0xf]
        %v1061 = vld [vmem:[%s1057 + $0xc] sm:$0xf]
        %v1062 = vld [vmem:[%s1057 + $0x10] sm:$0xf]
        %v1063 = vld [vmem:[%s1057 + $0x14] sm:$0xf]
        %v1064 = vld [vmem:[%s1057 + $0x18] sm:$0xf]
        %v1065 = vld [vmem:[%s1057 + $0x1c] sm:$0xf]
        %v1066 = vld [vmem:[%s1057 + $0x20] sm:$0xf]
        %v1067 = vld [vmem:[%s1057 + $0x24] sm:$0xf]
        %v1068 = vld [vmem:[%s1057 + $0x28] sm:$0xf]
        %v1069 = vld [vmem:[%s1057 + $0x2c] sm:$0xf]
        %v1070 = vld [vmem:[%s1057 + $0x30] sm:$0xf]
        %v1071 = vld [vmem:[%s1057 + $0x34] sm:$0xf]
        %v1072 = vld [vmem:[%s1057 + $0x38] sm:$0xf]
        %v1073 = vld [vmem:[%s1057 + $0x3c] sm:$0xf]
        %v1090 = vunpack.c.l.b16 %v1058
        %v1091 = vunpack.c.l.b16 %v1059
        %v1092 = vunpack.c.l.b16 %v1060
        %v1093 = vunpack.c.l.b16 %v1061
        %v1094 = vunpack.c.l.b16 %v1062
        %v1095 = vunpack.c.l.b16 %v1063
        %v1096 = vunpack.c.l.b16 %v1064
        %v1097 = vunpack.c.l.b16 %v1065
        %v1098 = vunpack.c.l.b16 %v1066
        %v1099 = vunpack.c.l.b16 %v1067
        %v1100 = vunpack.c.l.b16 %v1068
        %v1101 = vunpack.c.l.b16 %v1069
        %v1102 = vunpack.c.l.b16 %v1070
        %v1103 = vunpack.c.l.b16 %v1071
        %v1104 = vunpack.c.l.b16 %v1072
        %v1105 = vunpack.c.l.b16 %v1073
        %v1106 = vpack.c.b16 %v1091, %v1090
        %v1107 = vpack.c.b16 %v1093, %v1092
        %v1108 = vpack.c.b16 %v1095, %v1094
        %v1109 = vpack.c.b16 %v1097, %v1096
        %v1110 = vpack.c.b16 %v1099, %v1098
        %v1111 = vpack.c.b16 %v1101, %v1100
        %v1112 = vpack.c.b16 %v1103, %v1102
        %v1113 = vpack.c.b16 %v1105, %v1104
        %1122 = vmatprep.subr.bf16.mxu0 0
        %1123 = vmatpush1.bf16.msra.mxu0 %v1113
        %1124 = vmatprep.subr.bf16.mxu0 0
        %1125 = vmatpush1.bf16.msra.mxu0 %v1112
        %1126 = vmatprep.subr.bf16.mxu0 0
        %1127 = vmatpush1.bf16.msra.mxu0 %v1111
        %1128 = vmatprep.subr.bf16.mxu0 0
        %1129 = vmatpush1.bf16.msra.mxu0 %v1110
        %1130 = vmatprep.subr.bf16.mxu0 0
        %1131 = vmatpush1.bf16.msra.mxu0 %v1109
        %1132 = vmatprep.subr.bf16.mxu0 0
        %1133 = vmatpush1.bf16.msra.mxu0 %v1108
        %1134 = vmatprep.subr.bf16.mxu0 0
        %1135 = vmatpush1.bf16.msra.mxu0 %v1107
        %1136 = vmatprep.subr.bf16.mxu0 0
        %1137 = vmatpush1.bf16.msra.mxu0 %v1106
        %1138 = vmatprep.subr.bf16.mxu0 0
        %1139 = vmatpush2.bf16.msra.mxu0 0
        %1140 = vmatprep.subr.bf16.mxu0 0
        %1141 = vmatpush2.bf16.msra.mxu0 0
        %1142 = vmatprep.subr.bf16.mxu0 0
        %1143 = vmatpush2.bf16.msra.mxu0 0
        %1144 = vmatprep.subr.bf16.mxu0 0
        %1145 = vmatpush2.bf16.msra.mxu0 0
        %1146 = vmatprep.subr.bf16.mxu0 0
        %1147 = vmatpush2.bf16.msra.mxu0 0
        %1148 = vmatprep.subr.bf16.mxu0 0
        %1149 = vmatpush2.bf16.msra.mxu0 0
        %1150 = vmatprep.subr.bf16.mxu0 0
        %1151 = vmatpush2.bf16.msra.mxu0 0
        %1152 = vmatprep.subr.bf16.mxu0 0
        %1153 = vmatpush2.bf16.msra.mxu0 0
        %1154 = vmatprep.mubr.bf16.mxu0 0
        %1155 = vmatmul.mubr.bf16.gmra.mxu0 %v1037
        %v1156 = vpop.f32.mrf.mxu0
        %v1157 = vadd.f32 0.0, %v1156
        %v1158 = vpop.f32.mrf.mxu0
        %v1159 = vpop.f32.mrf.mxu0
        %v1160 = vadd.f32 0.0, %v1159
        %v1161 = vpop.f32.mrf.mxu0
        %1162 = vmatprep.mubr.bf16.mxu0 0
        %1163 = vmatmul.mubr.bf16.gmra.mxu0 %v1038
        %v1164 = vpop.f32.mrf.mxu0
        %v1165 = vadd.f32 0.0, %v1164
        %v1166 = vpop.f32.mrf.mxu0
        %v1167 = vpop.f32.mrf.mxu0
        %v1168 = vadd.f32 0.0, %v1167
        %v1169 = vpop.f32.mrf.mxu0
        %1170 = vmatprep.mubr.bf16.mxu0 0
        %1171 = vmatmul.mubr.bf16.gmra.mxu0 %v1039
        %v1172 = vpop.f32.mrf.mxu0
        %v1173 = vadd.f32 0.0, %v1172
        %v1174 = vpop.f32.mrf.mxu0
        %v1175 = vpop.f32.mrf.mxu0
        %v1176 = vadd.f32 0.0, %v1175
        %v1177 = vpop.f32.mrf.mxu0
        %1178 = vmatprep.mubr.bf16.mxu0 0
        %1179 = vmatmul.mubr.bf16.gmra.mxu0 %v1040
        %v1180 = vpop.f32.mrf.mxu0
        %v1181 = vadd.f32 0.0, %v1180
        %v1182 = vpop.f32.mrf.mxu0
        %v1183 = vpop.f32.mrf.mxu0
        %v1184 = vadd.f32 0.0, %v1183
        %v1185 = vpop.f32.mrf.mxu0
        %1186 = vdwg.mxu0
        %v1203 = vunpack.c.l.b16 %v1041
        %v1204 = vunpack.c.l.b16 %v1042
        %v1205 = vunpack.c.l.b16 %v1043
        %v1206 = vunpack.c.l.b16 %v1044
        %v1207 = vunpack.c.l.b16 %v1045
        %v1208 = vunpack.c.l.b16 %v1046
        %v1209 = vunpack.c.l.b16 %v1047
        %v1210 = vunpack.c.l.b16 %v1048
        %v1211 = vunpack.c.l.b16 %v1049
        %v1212 = vunpack.c.l.b16 %v1050
        %v1213 = vunpack.c.l.b16 %v1051
        %v1214 = vunpack.c.l.b16 %v1052
        %v1215 = vunpack.c.l.b16 %v1053
        %v1216 = vunpack.c.l.b16 %v1054
        %v1217 = vunpack.c.l.b16 %v1055
        %v1218 = vunpack.c.l.b16 %v1056
        %v1219 = vpack.c.b16 %v1204, %v1203
        %v1220 = vpack.c.b16 %v1206, %v1205
        %v1221 = vpack.c.b16 %v1208, %v1207
        %v1222 = vpack.c.b16 %v1210, %v1209
        %v1223 = vpack.c.b16 %v1212, %v1211
        %v1224 = vpack.c.b16 %v1214, %v1213
        %v1225 = vpack.c.b16 %v1216, %v1215
        %v1226 = vpack.c.b16 %v1218, %v1217
        %1235 = vmatprep.subr.bf16.mxu0 0
        %1236 = vmatpush1.bf16.msra.mxu0 %v1226
        %1237 = vmatprep.subr.bf16.mxu0 0
        %1238 = vmatpush1.bf16.msra.mxu0 %v1225
        %1239 = vmatprep.subr.bf16.mxu0 0
        %1240 = vmatpush1.bf16.msra.mxu0 %v1224
        %1241 = vmatprep.subr.bf16.mxu0 0
        %1242 = vmatpush1.bf16.msra.mxu0 %v1223
        %1243 = vmatprep.subr.bf16.mxu0 0
        %1244 = vmatpush1.bf16.msra.mxu0 %v1222
        %1245 = vmatprep.subr.bf16.mxu0 0
        %1246 = vmatpush1.bf16.msra.mxu0 %v1221
        %1247 = vmatprep.subr.bf16.mxu0 0
        %1248 = vmatpush1.bf16.msra.mxu0 %v1220
        %1249 = vmatprep.subr.bf16.mxu0 0
        %1250 = vmatpush1.bf16.msra.mxu0 %v1219
        %1251 = vmatprep.subr.bf16.mxu0 0
        %1252 = vmatpush2.bf16.msra.mxu0 0
        %1253 = vmatprep.subr.bf16.mxu0 0
        %1254 = vmatpush2.bf16.msra.mxu0 0
        %1255 = vmatprep.subr.bf16.mxu0 0
        %1256 = vmatpush2.bf16.msra.mxu0 0
        %1257 = vmatprep.subr.bf16.mxu0 0
        %1258 = vmatpush2.bf16.msra.mxu0 0
        %1259 = vmatprep.subr.bf16.mxu0 0
        %1260 = vmatpush2.bf16.msra.mxu0 0
        %1261 = vmatprep.subr.bf16.mxu0 0
        %1262 = vmatpush2.bf16.msra.mxu0 0
        %1263 = vmatprep.subr.bf16.mxu0 0
        %1264 = vmatpush2.bf16.msra.mxu0 0
        %1265 = vmatprep.subr.bf16.mxu0 0
        %1266 = vmatpush2.bf16.msra.mxu0 0
        %1267 = vmatprep.mubr.bf16.mxu0 0
        %1268 = vmatmul.mubr.bf16.gmra.mxu0 %v1005
        %v1269 = vpop.f32.mrf.mxu0
        %v1270 = vadd.f32 %v1157, %v1269
        %v1271 = vpop.f32.mrf.mxu0
        %v1272 = vpop.f32.mrf.mxu0
        %v1273 = vadd.f32 %v1160, %v1272
        %v1274 = vpop.f32.mrf.mxu0
        %1275 = vmatprep.mubr.bf16.mxu0 0
        %1276 = vmatmul.mubr.bf16.gmra.mxu0 %v1006
        %v1277 = vpop.f32.mrf.mxu0
        %v1278 = vadd.f32 %v1165, %v1277
        %v1279 = vpop.f32.mrf.mxu0
        %v1280 = vpop.f32.mrf.mxu0
        %v1281 = vadd.f32 %v1168, %v1280
        %v1282 = vpop.f32.mrf.mxu0
        %1283 = vmatprep.mubr.bf16.mxu0 0
        %1284 = vmatmul.mubr.bf16.gmra.mxu0 %v1007
        %v1285 = vpop.f32.mrf.mxu0
        %v1286 = vadd.f32 %v1173, %v1285
        %v1287 = vpop.f32.mrf.mxu0
        %v1288 = vpop.f32.mrf.mxu0
        %v1289 = vadd.f32 %v1176, %v1288
        %v1290 = vpop.f32.mrf.mxu0
        %1291 = vmatprep.mubr.bf16.mxu0 0
        %1292 = vmatmul.mubr.bf16.gmra.mxu0 %v1008
        %v1293 = vpop.f32.mrf.mxu0
        %v1294 = vadd.f32 %v1181, %v1293
        %v1295 = vpop.f32.mrf.mxu0
        %v1296 = vpop.f32.mrf.mxu0
        %v1297 = vadd.f32 %v1184, %v1296
        %v1298 = vpop.f32.mrf.mxu0
        %1299 = vdwg.mxu0
        %s1300 = scalar_lea.vmem [#allocation5], 128
        %v1301 = vld [vmem:[%s1300] sm:$0xf]
        %v1302 = vld [vmem:[%s1300 + $0x4] sm:$0xf]
        %v1303 = vld [vmem:[%s1300 + $0x8] sm:$0xf]
        %v1304 = vld [vmem:[%s1300 + $0xc] sm:$0xf]
        %v1305 = vld [vmem:[%s1300 + $0x10] sm:$0xf]
        %v1306 = vld [vmem:[%s1300 + $0x14] sm:$0xf]
        %v1307 = vld [vmem:[%s1300 + $0x18] sm:$0xf]
        %v1308 = vld [vmem:[%s1300 + $0x1c] sm:$0xf]
        %v1309 = vld [vmem:[%s1300 + $0x20] sm:$0xf]
        %v1310 = vld [vmem:[%s1300 + $0x24] sm:$0xf]
        %v1311 = vld [vmem:[%s1300 + $0x28] sm:$0xf]
        %v1312 = vld [vmem:[%s1300 + $0x2c] sm:$0xf]
        %v1313 = vld [vmem:[%s1300 + $0x30] sm:$0xf]
        %v1314 = vld [vmem:[%s1300 + $0x34] sm:$0xf]
        %v1315 = vld [vmem:[%s1300 + $0x38] sm:$0xf]
        %v1316 = vld [vmem:[%s1300 + $0x3c] sm:$0xf]
        %v1333 = vunpack.c.l.b16 %v1301
        %v1334 = vunpack.c.l.b16 %v1302
        %v1335 = vunpack.c.l.b16 %v1303
        %v1336 = vunpack.c.l.b16 %v1304
        %v1337 = vunpack.c.l.b16 %v1305
        %v1338 = vunpack.c.l.b16 %v1306
        %v1339 = vunpack.c.l.b16 %v1307
        %v1340 = vunpack.c.l.b16 %v1308
        %v1341 = vunpack.c.l.b16 %v1309
        %v1342 = vunpack.c.l.b16 %v1310
        %v1343 = vunpack.c.l.b16 %v1311
        %v1344 = vunpack.c.l.b16 %v1312
        %v1345 = vunpack.c.l.b16 %v1313
        %v1346 = vunpack.c.l.b16 %v1314
        %v1347 = vunpack.c.l.b16 %v1315
        %v1348 = vunpack.c.l.b16 %v1316
        %v1349 = vpack.c.b16 %v1334, %v1333
        %v1350 = vpack.c.b16 %v1336, %v1335
        %v1351 = vpack.c.b16 %v1338, %v1337
        %v1352 = vpack.c.b16 %v1340, %v1339
        %v1353 = vpack.c.b16 %v1342, %v1341
        %v1354 = vpack.c.b16 %v1344, %v1343
        %v1355 = vpack.c.b16 %v1346, %v1345
        %v1356 = vpack.c.b16 %v1348, %v1347
        %1365 = vmatprep.subr.bf16.mxu0 0
        %1366 = vmatpush1.bf16.msra.mxu0 %v1356
        %1367 = vmatprep.subr.bf16.mxu0 0
        %1368 = vmatpush1.bf16.msra.mxu0 %v1355
        %1369 = vmatprep.subr.bf16.mxu0 0
        %1370 = vmatpush1.bf16.msra.mxu0 %v1354
        %1371 = vmatprep.subr.bf16.mxu0 0
        %1372 = vmatpush1.bf16.msra.mxu0 %v1353
        %1373 = vmatprep.subr.bf16.mxu0 0
        %1374 = vmatpush1.bf16.msra.mxu0 %v1352
        %1375 = vmatprep.subr.bf16.mxu0 0
        %1376 = vmatpush1.bf16.msra.mxu0 %v1351
        %1377 = vmatprep.subr.bf16.mxu0 0
        %1378 = vmatpush1.bf16.msra.mxu0 %v1350
        %1379 = vmatprep.subr.bf16.mxu0 0
        %1380 = vmatpush1.bf16.msra.mxu0 %v1349
        %1381 = vmatprep.subr.bf16.mxu0 0
        %1382 = vmatpush2.bf16.msra.mxu0 0
        %1383 = vmatprep.subr.bf16.mxu0 0
        %1384 = vmatpush2.bf16.msra.mxu0 0
        %1385 = vmatprep.subr.bf16.mxu0 0
        %1386 = vmatpush2.bf16.msra.mxu0 0
        %1387 = vmatprep.subr.bf16.mxu0 0
        %1388 = vmatpush2.bf16.msra.mxu0 0
        %1389 = vmatprep.subr.bf16.mxu0 0
        %1390 = vmatpush2.bf16.msra.mxu0 0
        %1391 = vmatprep.subr.bf16.mxu0 0
        %1392 = vmatpush2.bf16.msra.mxu0 0
        %1393 = vmatprep.subr.bf16.mxu0 0
        %1394 = vmatpush2.bf16.msra.mxu0 0
        %1395 = vmatprep.subr.bf16.mxu0 0
        %1396 = vmatpush2.bf16.msra.mxu0 0
        %1397 = vmatprep.mubr.bf16.mxu0 0
        %1398 = vmatmul.mubr.bf16.gmra.mxu0 %v1033
        %v1399 = vpop.f32.mrf.mxu0
        %v1400 = vadd.f32 0.0, %v1399
        %v1401 = vpop.f32.mrf.mxu0
        %v1402 = vpop.f32.mrf.mxu0
        %v1403 = vadd.f32 0.0, %v1402
        %v1404 = vpop.f32.mrf.mxu0
        %1405 = vmatprep.mubr.bf16.mxu0 0
        %1406 = vmatmul.mubr.bf16.gmra.mxu0 %v1034
        %v1407 = vpop.f32.mrf.mxu0
        %v1408 = vadd.f32 0.0, %v1407
        %v1409 = vpop.f32.mrf.mxu0
        %v1410 = vpop.f32.mrf.mxu0
        %v1411 = vadd.f32 0.0, %v1410
        %v1412 = vpop.f32.mrf.mxu0
        %1413 = vmatprep.mubr.bf16.mxu0 0
        %1414 = vmatmul.mubr.bf16.gmra.mxu0 %v1035
        %v1415 = vpop.f32.mrf.mxu0
        %v1416 = vadd.f32 0.0, %v1415
        %v1417 = vpop.f32.mrf.mxu0
        %v1418 = vpop.f32.mrf.mxu0
        %v1419 = vadd.f32 0.0, %v1418
        %v1420 = vpop.f32.mrf.mxu0
        %1421 = vmatprep.mubr.bf16.mxu0 0
        %1422 = vmatmul.mubr.bf16.gmra.mxu0 %v1036
        %v1423 = vpop.f32.mrf.mxu0
        %v1424 = vadd.f32 0.0, %v1423
        %v1425 = vpop.f32.mrf.mxu0
        %v1426 = vpop.f32.mrf.mxu0
        %v1427 = vadd.f32 0.0, %v1426
        %v1428 = vpop.f32.mrf.mxu0
        %1429 = vdwg.mxu0
        %v1430 = vadd.f32 %v1270, %v1400
        %v1431 = vadd.f32 %v1273, %v1403
        %v1432 = vadd.f32 %v1278, %v1408
        %v1433 = vadd.f32 %v1281, %v1411
        %v1434 = vadd.f32 %v1286, %v1416
        %v1435 = vadd.f32 %v1289, %v1419
        %v1436 = vadd.f32 %v1294, %v1424
        %v1437 = vadd.f32 %v1297, %v1427
        %v1438 = vld [vmem:[%s6] sm:$0x1]
        %v1440 = vlaneseq
        %v1441 = vshrl.u32 %v1440, 7
        %v1442 = vsub.s32 0, %v1441
        %v1443 = vrot.slane %v1438, %v1442
        %v1445 = vadd.f32 %v1430, %v1443
        %v1446 = vadd.f32 %v1431, %v1443
        %v1447 = vadd.f32 %v1432, %v1443
        %v1448 = vadd.f32 %v1433, %v1443
        %v1449 = vadd.f32 %v1434, %v1443
        %v1450 = vadd.f32 %v1435, %v1443
        %v1451 = vadd.f32 %v1436, %v1443
        %v1452 = vadd.f32 %v1437, %v1443
        %v1453 = vmax.f32 %v1445, 0.0
        %v1454 = vmax.f32 %v1446, 0.0
        %v1455 = vmax.f32 %v1447, 0.0
        %v1456 = vmax.f32 %v1448, 0.0
        %v1457 = vmax.f32 %v1449, 0.0
        %v1458 = vmax.f32 %v1450, 0.0
        %v1459 = vmax.f32 %v1451, 0.0
        %v1460 = vmax.f32 %v1452, 0.0
        %v1461 = vpack.c.bf16 %v1454, %v1453
        %v1462 = vpack.c.bf16 %v1456, %v1455
        %v1463 = vpack.c.bf16 %v1458, %v1457
        %v1464 = vpack.c.bf16 %v1460, %v1459
        %v1465 = vld [vmem:[%s7] sm:$0xf]
        %v1466 = vld [vmem:[%s7 + $0x4] sm:$0xf]
        %v1467 = vld [vmem:[%s7 + $0x8] sm:$0xf]
        %v1468 = vld [vmem:[%s7 + $0xc] sm:$0xf]
        %v1469 = vld [vmem:[%s7 + $0x10] sm:$0xf]
        %v1470 = vld [vmem:[%s7 + $0x14] sm:$0xf]
        %v1471 = vld [vmem:[%s7 + $0x18] sm:$0xf]
        %v1472 = vld [vmem:[%s7 + $0x1c] sm:$0xf]
        %v1473 = vld [vmem:[%s7 + $0x20] sm:$0xf]
        %v1474 = vld [vmem:[%s7 + $0x24] sm:$0xf]
        %v1475 = vld [vmem:[%s7 + $0x28] sm:$0xf]
        %v1476 = vld [vmem:[%s7 + $0x2c] sm:$0xf]
        %v1477 = vld [vmem:[%s7 + $0x30] sm:$0xf]
        %v1478 = vld [vmem:[%s7 + $0x34] sm:$0xf]
        %v1479 = vld [vmem:[%s7 + $0x38] sm:$0xf]
        %v1480 = vld [vmem:[%s7 + $0x3c] sm:$0xf]
        %v1481 = vld [vmem:[%s8] sm:$0x1]
        %v1483 = vlaneseq
        %v1484 = vshrl.u32 %v1483, 7
        %v1485 = vsub.s32 0, %v1484
        %v1486 = vrot.slane %v1481, %v1485
        %v1504 = vunpack.c.l.b16 %v1465
        %v1505 = vunpack.c.l.b16 %v1466
        %v1506 = vunpack.c.l.b16 %v1467
        %v1507 = vunpack.c.l.b16 %v1468
        %v1508 = vunpack.c.l.b16 %v1469
        %v1509 = vunpack.c.l.b16 %v1470
        %v1510 = vunpack.c.l.b16 %v1471
        %v1511 = vunpack.c.l.b16 %v1472
        %v1512 = vunpack.c.l.b16 %v1473
        %v1513 = vunpack.c.l.b16 %v1474
        %v1514 = vunpack.c.l.b16 %v1475
        %v1515 = vunpack.c.l.b16 %v1476
        %v1516 = vunpack.c.l.b16 %v1477
        %v1517 = vunpack.c.l.b16 %v1478
        %v1518 = vunpack.c.l.b16 %v1479
        %v1519 = vunpack.c.l.b16 %v1480
        %v1520 = vpack.c.b16 %v1505, %v1504
        %v1521 = vpack.c.b16 %v1507, %v1506
        %v1522 = vpack.c.b16 %v1509, %v1508
        %v1523 = vpack.c.b16 %v1511, %v1510
        %v1524 = vpack.c.b16 %v1513, %v1512
        %v1525 = vpack.c.b16 %v1515, %v1514
        %v1526 = vpack.c.b16 %v1517, %v1516
        %v1527 = vpack.c.b16 %v1519, %v1518
        %1536 = vmatprep.subr.bf16.mxu0 0
        %1537 = vmatpush1.bf16.msra.mxu0 %v1527
        %1538 = vmatprep.subr.bf16.mxu0 0
        %1539 = vmatpush1.bf16.msra.mxu0 %v1526
        %1540 = vmatprep.subr.bf16.mxu0 0
        %1541 = vmatpush1.bf16.msra.mxu0 %v1525
        %1542 = vmatprep.subr.bf16.mxu0 0
        %1543 = vmatpush1.bf16.msra.mxu0 %v1524
        %1544 = vmatprep.subr.bf16.mxu0 0
        %1545 = vmatpush1.bf16.msra.mxu0 %v1523
        %1546 = vmatprep.subr.bf16.mxu0 0
        %1547 = vmatpush1.bf16.msra.mxu0 %v1522
        %1548 = vmatprep.subr.bf16.mxu0 0
        %1549 = vmatpush1.bf16.msra.mxu0 %v1521
        %1550 = vmatprep.subr.bf16.mxu0 0
        %1551 = vmatpush1.bf16.msra.mxu0 %v1520
        %1552 = vmatprep.subr.bf16.mxu0 0
        %1553 = vmatpush2.bf16.msra.mxu0 0
        %1554 = vmatprep.subr.bf16.mxu0 0
        %1555 = vmatpush2.bf16.msra.mxu0 0
        %1556 = vmatprep.subr.bf16.mxu0 0
        %1557 = vmatpush2.bf16.msra.mxu0 0
        %1558 = vmatprep.subr.bf16.mxu0 0
        %1559 = vmatpush2.bf16.msra.mxu0 0
        %1560 = vmatprep.subr.bf16.mxu0 0
        %1561 = vmatpush2.bf16.msra.mxu0 0
        %1562 = vmatprep.subr.bf16.mxu0 0
        %1563 = vmatpush2.bf16.msra.mxu0 0
        %1564 = vmatprep.subr.bf16.mxu0 0
        %1565 = vmatpush2.bf16.msra.mxu0 0
        %1566 = vmatprep.subr.bf16.mxu0 0
        %1567 = vmatpush2.bf16.msra.mxu0 0
        %1568 = vmatprep.mubr.bf16.mxu0 0
        %1569 = vmatmul.mubr.bf16.gmra.mxu0 %v1461
        %v1570 = vpop.f32.mrf.mxu0
        %v1571 = vadd.f32 %v1486, %v1570
        %v1572 = vpop.f32.mrf.mxu0
        %v1573 = vpop.f32.mrf.mxu0
        %v1574 = vadd.f32 %v1486, %v1573
        %v1575 = vpop.f32.mrf.mxu0
        %1576 = vmatprep.mubr.bf16.mxu0 0
        %1577 = vmatmul.mubr.bf16.gmra.mxu0 %v1462
        %v1578 = vpop.f32.mrf.mxu0
        %v1579 = vadd.f32 %v1486, %v1578
        %v1580 = vpop.f32.mrf.mxu0
        %v1581 = vpop.f32.mrf.mxu0
        %v1582 = vadd.f32 %v1486, %v1581
        %v1583 = vpop.f32.mrf.mxu0
        %1584 = vmatprep.mubr.bf16.mxu0 0
        %1585 = vmatmul.mubr.bf16.gmra.mxu0 %v1463
        %v1586 = vpop.f32.mrf.mxu0
        %v1587 = vadd.f32 %v1486, %v1586
        %v1588 = vpop.f32.mrf.mxu0
        %v1589 = vpop.f32.mrf.mxu0
        %v1590 = vadd.f32 %v1486, %v1589
        %v1591 = vpop.f32.mrf.mxu0
        %1592 = vmatprep.mubr.bf16.mxu0 0
        %1593 = vmatmul.mubr.bf16.gmra.mxu0 %v1464
        %v1594 = vpop.f32.mrf.mxu0
        %v1595 = vadd.f32 %v1486, %v1594
        %v1596 = vpop.f32.mrf.mxu0
        %v1597 = vpop.f32.mrf.mxu0
        %v1598 = vadd.f32 %v1486, %v1597
        %v1599 = vpop.f32.mrf.mxu0
        %1600 = vdwg.mxu0
        %v1601 = vmul.f32 %v1571, 0.01
        %v1602 = vmul.f32 %v1574, 0.01
        %v1603 = vmul.f32 %v1579, 0.01
        %v1604 = vmul.f32 %v1582, 0.01
        %v1605 = vmul.f32 %v1587, 0.01
        %v1606 = vmul.f32 %v1590, 0.01
        %v1607 = vmul.f32 %v1595, 0.01
        %v1608 = vmul.f32 %v1598, 0.01
        %v1609 = vxor.u32 %v1601, 2147483648
        %v1610 = vxor.u32 %v1602, 2147483648
        %v1611 = vxor.u32 %v1603, 2147483648
        %v1612 = vxor.u32 %v1604, 2147483648
        %v1613 = vxor.u32 %v1605, 2147483648
        %v1614 = vxor.u32 %v1606, 2147483648
        %v1615 = vxor.u32 %v1607, 2147483648
        %v1616 = vxor.u32 %v1608, 2147483648
        %v1617 = vmul.f32 %v1609, 1.442695
        %v1618 = vpow.pop %v1617
        %v1619 = vmul.f32 %v1610, 1.442695
        %v1620 = vpow.pop %v1619
        %v1621 = vmul.f32 %v1611, 1.442695
        %v1622 = vpow.pop %v1621
        %v1623 = vmul.f32 %v1612, 1.442695
        %v1624 = vpow.pop %v1623
        %v1625 = vmul.f32 %v1613, 1.442695
        %v1626 = vpow.pop %v1625
        %v1627 = vmul.f32 %v1614, 1.442695
        %v1628 = vpow.pop %v1627
        %v1629 = vmul.f32 %v1615, 1.442695
        %v1630 = vpow.pop %v1629
        %v1631 = vmul.f32 %v1616, 1.442695
        %v1632 = vpow.pop %v1631
        %v1633 = vadd.f32 %v1618, 1.0
        %v1634 = vadd.f32 %v1620, 1.0
        %v1635 = vadd.f32 %v1622, 1.0
        %v1636 = vadd.f32 %v1624, 1.0
        %v1637 = vadd.f32 %v1626, 1.0
        %v1638 = vadd.f32 %v1628, 1.0
        %v1639 = vadd.f32 %v1630, 1.0
        %v1640 = vadd.f32 %v1632, 1.0
        %v1641 = vrcp.pop %v1633
        %v1642 = vmul.f32 1.0, %v1641
        %v1643 = vrcp.pop %v1634
        %v1644 = vmul.f32 1.0, %v1643
        %v1645 = vrcp.pop %v1635
        %v1646 = vmul.f32 1.0, %v1645
        %v1647 = vrcp.pop %v1636
        %v1648 = vmul.f32 1.0, %v1647
        %v1649 = vrcp.pop %v1637
        %v1650 = vmul.f32 1.0, %v1649
        %v1651 = vrcp.pop %v1638
        %v1652 = vmul.f32 1.0, %v1651
        %v1653 = vrcp.pop %v1639
        %v1654 = vmul.f32 1.0, %v1653
        %v1655 = vrcp.pop %v1640
        %v1656 = vmul.f32 1.0, %v1655
        %1657 = vst [vmem:[%s356] sm:$0xff] %v1642
        %1658 = vst [vmem:[%s356 + $0x8] sm:$0xff] %v1644
        %1659 = vst [vmem:[%s356 + $0x10] sm:$0xff] %v1646
        %1660 = vst [vmem:[%s356 + $0x18] sm:$0xff] %v1648
        %1661 = vst [vmem:[%s356 + $0x20] sm:$0xff] %v1650
        %1662 = vst [vmem:[%s356 + $0x28] sm:$0xff] %v1652
        %1663 = vst [vmem:[%s356 + $0x30] sm:$0xff] %v1654
        %1664 = vst [vmem:[%s356 + $0x38] sm:$0xff] %v1656
        %s1665 = sand.u32 %s227, 1
        %s1666 = scalar_lea.sflag [#allocation4], %s1665
        %s1667 = sand.u32 %s227, 1
        %s1668 = smul.addr %s1667, 64
        %s1669 = scalar_lea.vmem [#allocation7], %s1668
        // Predicated region
        $region65: #{tpu_custom_call.1} parent=55 // pred_check
          %p1670 = pneg %p237
        $region66: #{tpu_custom_call.1} parent=55 // pred_check_branch
          %1672 = sbr.rel (%p1670) target = $region68
        $region67: #{tpu_custom_call.1} parent=55 // pred_region
          %s1673 = smul.u32 8, %s25
          %s1675 = ssub.s32 1024, 1024
          %1676 = vsyncadd %s1666, %s1675
          %s1677 = smul.addr %s1673, 128
          %s1678 = scalar_lea.hbm %s9, %s1677
          %s1679 = sshll.u32 %s1669, 4
          %s1680 = int_to_ptr.vmem [resolvable:$true] %s1679
          %1685 = dma.vmem_to_hbm [thread:$0]  %s1680, 1024, %s1678, %s1666, 128, 128, 8
        $region68: #{tpu_custom_call.1} parent=55 // pred_fallthru
          _
      $region56: #{tpu_custom_call.1} parent=5 // pred_fallthru
        _
      %p1686 = scmp.le.s32.totalorder 2, %s20
      // Predicated region
      $region69: #{tpu_custom_call.1} parent=5 // pred_check
        %p1687 = pneg %p1686
      $region70: #{tpu_custom_call.1} parent=5 // pred_check_branch
        %1689 = sbr.rel (%p1687) target = $region72
      $region71: #{tpu_custom_call.1} parent=5 // pred_region
        %s1690 = ssub.s32 %s20, 2
        // Predicated region
        $region73: #{tpu_custom_call.1} parent=71 // pred_check
          %p1691 = pneg %p243
        $region74: #{tpu_custom_call.1} parent=71 // pred_check_branch
          %1693 = sbr.rel (%p1691) target = $region76
        $region75: #{tpu_custom_call.1} parent=71 // pred_region
          %s1694 = sand.u32 %s228, 1
          %s1695 = scalar_lea.sflag [#allocation4], %s1694
          %s1696 = sand.u32 %s228, 1
          %s1697 = smul.addr %s1696, 64
          %s1698 = scalar_lea.vmem [#allocation7], %s1697
          %1699 = dma.done %s1695, 1024
        $region76: #{tpu_custom_call.1} parent=71 // pred_fallthru
          _
      $region72: #{tpu_custom_call.1} parent=5 // pred_fallthru
        _
    $region6: #{tpu_custom_call.1} parent=1 // loop_footer
      %s24 = sadd.s32 1, %s20
    $region7: #{tpu_custom_call.1} parent=1 // loop_footer_branch
      %19 = sbr.rel target = $region3
    $region8: #{tpu_custom_call.1} parent=1 // loop_exit
      _
    %1700 = vsyncpa [#allocation3], 1
    %s1701 = scalar_lea.sflag [#allocation3], 1
    %1702 = vsyncpa %s1701, 1
    %1703 = vsyncpa [#allocation6], 1
    %1704 = vsyncpa [#allocation4], 1
    %s1705 = scalar_lea.sflag [#allocation4], 1
    %1706 = vsyncpa %s1705, 1

</llo_original>
